<compile_context>
chip_gen: v5e
topology: v5e:2x2
jax: 0.10.0
libtpu: 0.0.40
codegen_flags: <defaults>
</compile_context>

<pallas_src>
import functools

import jax
import jax.numpy as jnp
import numpy as np
from jax import lax
from jax.experimental import pallas as pl
from jax.experimental.pallas import tpu as pltpu

BN_EPS = 1e-5

_FACTORS = [
    [[2, 6, 8], [1, 6, 9]],
    [[2, 4, 8], [2, 3, 6]],
    [[2, 4, 6], [1, 3, 9]],
    [[2, 4, 4], [1, 3, 6]],
    [[2, 2, 4], [1, 3, 3]],
]


def _stage_config(index_factor=4, in_dim=1, out_dim=16):
    sf, tf = _FACTORS[index_factor]
    chans = [in_dim, out_dim // 8, out_dim // 4, out_dim // 2, out_dim, out_dim]
    strides = [(1, 1), (sf[0], tf[0]), (1, 1), (sf[1], tf[1]), (sf[2], tf[2])]
    relus = (True, True, True, True, False)
    return chans, strides, relus


def _out_size(size, stride):
    # Conv2d(kernel=3, padding=1, stride=s): floor((size - 1) / s) + 1
    return (size - 1) // stride + 1


# ---------------------------------------------------------------------------
# Fused Pallas kernel: the entire Stem in one call, VMEM resident.
# ---------------------------------------------------------------------------
def _stem_kernel(x_ref, *refs, relu_flags):
    o_ref = refs[-1]
    stage_refs = refs[:-1]

    x = x_ref[...]                                    # (N*H, Cin*W)
    for s, relu in enumerate(relu_flags):
        r_ref = stage_refs[3 * s]                     # (3, N*Ho, N*H)
        t_ref = stage_refs[3 * s + 1]                 # (3, Cin*W, Cout*Wo)
        b_ref = stage_refs[3 * s + 2]                 # (1, Cout*Wo)
        y = None
        for ky in range(3):
            g = jnp.dot(r_ref[ky], x, preferred_element_type=jnp.float32)
            c = jnp.dot(g, t_ref[ky], preferred_element_type=jnp.float32)
            y = c if y is None else y + c
        y = y + b_ref[...]
        if relu:
            y = jnp.maximum(y, 0.0)
        x = y
    o_ref[...] = x.astype(o_ref.dtype)


# ---------------------------------------------------------------------------
# Wrapper: builds the per-stage gather / folded-weight matrices and calls the
# single fused kernel.  All data movement here is one transpose in, one out.
# ---------------------------------------------------------------------------
def _row_gather(n, h, ho, sh):
    """(3, N*Ho, N*H) 0/1 matrices selecting h = ho*sh + ky - 1 (0 if padded)."""
    r = np.zeros((3, n * ho, n * h), np.float32)
    for ky in range(3):
        for b in range(n):
            for o in range(ho):
                src = o * sh + ky - 1
                if 0 <= src < h:
                    r[ky, b * ho + o, b * h + src] = 1.0
    return r


def _col_select(w, wo, sw):
    """(3, W, Wo) 0/1 matrices selecting w = wo*sw + kx - 1 (0 if padded)."""
    sel = np.zeros((3, w, wo), np.float32)
    for kx in range(3):
        for o in range(wo):
            src = o * sw + kx - 1
            if 0 <= src < w:
                sel[kx, src, o] = 1.0
    return sel


def stem_forward(params, x_nchw, *, index_factor=4, in_dim=1, out_dim=16):
    """JAX/Pallas equivalent of Stem.forward (inference-mode BatchNorm)."""
    chans, strides, relus = _stage_config(index_factor, in_dim, out_dim)
    n, cin, h, w = x_nchw.shape
    assert cin == chans[0]

    # NCHW -> (N*H, Cin*W), row=(n,h), col=(ci,w)
    inputs = [jnp.transpose(x_nchw, (0, 2, 1, 3)).reshape(n * h, cin * w)]

    h_cur, w_cur = h, w
    for s, ((sh, sw), p) in enumerate(zip(strides, params)):
        cin_s, cout_s = chans[s], chans[s + 1]
        ho, wo = _out_size(h_cur, sh), _out_size(w_cur, sw)

        r = _row_gather(n, h_cur, ho, sh)                        # (3, N*Ho, N*H)
        sel = jnp.asarray(_col_select(w_cur, wo, sw))            # (3, W, Wo)

        # Fold conv bias + inference BatchNorm into the matmuls.
        scale = p["gamma"] * lax.rsqrt(p["var"] + BN_EPS)        # (Cout,)
        w_fold = p["w"] * scale                                  # (3,3,Cin,Cout)
        # T_ky[(ci,w),(co,wo)] = sum_kx w_fold[ky,kx,ci,co] * sel[kx,w,wo]
        t = jnp.einsum("yxio,xwv->yiwov", w_fold, sel)
        t = t.reshape(3, cin_s * w_cur, cout_s * wo)             # (3, Cin*W, Cout*Wo)
        b_fold = scale * (p["b"] - p["mean"]) + p["beta"]        # (Cout,)
        b_row = jnp.repeat(b_fold, wo)[None, :]                  # (1, Cout*Wo)

        inputs += [jnp.asarray(r), t, b_row]
        h_cur, w_cur = ho, wo

    cout = chans[-1]
    out2d = pl.pallas_call(
        functools.partial(_stem_kernel, relu_flags=relus),
        out_shape=jax.ShapeDtypeStruct((n * h_cur, cout * w_cur), x_nchw.dtype),
        in_specs=[pl.BlockSpec(memory_space=pltpu.MemorySpace.VMEM)] * len(inputs),
        out_specs=pl.BlockSpec(memory_space=pltpu.MemorySpace.VMEM),
    )(*inputs)

    # (N*Ho, Cout*Wo) -> NCHW
    out = out2d.reshape(n, h_cur, cout, w_cur)
    return jnp.transpose(out, (0, 2, 1, 3))


# ---------------------------------------------------------------------------
# Pure-JAX reference (high precision) and parameter initialization
# ---------------------------------------------------------------------------
def stem_reference(params, x_nchw, *, index_factor=4, in_dim=1, out_dim=16):
    _, strides, relus = _stage_config(index_factor, in_dim, out_dim)
    x = jnp.transpose(x_nchw, (0, 2, 3, 1))
    for p, stride, relu in zip(params, strides, relus):
        y = lax.conv_general_dilated(
            x, p["w"], window_strides=stride, padding=((1, 1), (1, 1)),
            dimension_numbers=("NHWC", "HWIO", "NHWC"),
            precision=lax.Precision.HIGHEST)
        y = y + p["b"]
        y = p["gamma"] * (y - p["mean"]) * lax.rsqrt(p["var"] + BN_EPS) + p["beta"]
        x = jnp.maximum(y, 0.0) if relu else y
    return jnp.transpose(x, (0, 3, 1, 2))


def init_stem_params(key, *, index_factor=4, in_dim=1, out_dim=16):
    chans, _, _ = _stage_config(index_factor, in_dim, out_dim)
    params = []
    for i in range(5):
        cin, cout = chans[i], chans[i + 1]
        key, kw, kb, kg, kbt, km, kv = jax.random.split(key, 7)
        fan_in = 9 * cin
        params.append(dict(
            w=jax.random.normal(kw, (3, 3, cin, cout), jnp.float32) / np.sqrt(fan_in),
            b=0.1 * jax.random.normal(kb, (cout,), jnp.float32),
            gamma=1.0 + 0.1 * jax.random.normal(kg, (cout,), jnp.float32),
            beta=0.1 * jax.random.normal(kbt, (cout,), jnp.float32),
            mean=0.1 * jax.random.normal(km, (cout,), jnp.float32),
            var=1.0 + 0.1 * jnp.abs(jax.random.normal(kv, (cout,), jnp.float32)),
        ))
    return params


if __name__ == "__main__":
    key = jax.random.PRNGKey(0)
    pkey, xkey = jax.random.split(key)
    params = init_stem_params(pkey)

    # Small input consistent with the module: NCHW = (batch, 1, freq, time).
    B, C, H, W = 2, 1, 32, 36
    x = jax.random.normal(xkey, (B, C, H, W), dtype=jnp.float32)

    fwd = jax.jit(stem_forward)
    y = fwd(params, x)
    jax.block_until_ready(y)

    ref = stem_reference(params, x)
    assert y.shape == (B, 16, 2, 4), y.shape
    # Kernel runs at default MXU precision (bf16 passes) per the perf review;
    # reference is f32 HIGHEST, so allow for rounding compounded over 5 stages.
    np.testing.assert_allclose(np.asarray(y), np.asarray(ref), rtol=2e-2, atol=5e-2)

    print("KERNEL_OK")
</pallas_src>

<mosaic_0001>
module attributes {stable_mosaic.version = 11 : i64} {
  func.func @_stem_kernel(%arg0: memref<64x36xf32, #tpu.memory_space<vmem>>, %arg1: memref<3x64x64xf32, #tpu.memory_space<vmem>>, %arg2: memref<3x36x72xf32, #tpu.memory_space<vmem>>, %arg3: memref<1x72xf32, #tpu.memory_space<vmem>>, %arg4: memref<3x32x64xf32, #tpu.memory_space<vmem>>, %arg5: memref<3x72x144xf32, #tpu.memory_space<vmem>>, %arg6: memref<1x144xf32, #tpu.memory_space<vmem>>, %arg7: memref<3x32x32xf32, #tpu.memory_space<vmem>>, %arg8: memref<3x144x288xf32, #tpu.memory_space<vmem>>, %arg9: memref<1x288xf32, #tpu.memory_space<vmem>>, %arg10: memref<3x16x32xf32, #tpu.memory_space<vmem>>, %arg11: memref<3x288x192xf32, #tpu.memory_space<vmem>>, %arg12: memref<1x192xf32, #tpu.memory_space<vmem>>, %arg13: memref<3x4x16xf32, #tpu.memory_space<vmem>>, %arg14: memref<3x192x64xf32, #tpu.memory_space<vmem>>, %arg15: memref<1x64xf32, #tpu.memory_space<vmem>>, %arg16: memref<4x64xf32, #tpu.memory_space<vmem>>) attributes {dimension_semantics = [], scalar_prefetch = 0 : i64, scratch_operands = 0 : i64, tpu.core_type = #tpu.core_type<tc>} {
    %c0 = arith.constant 0 : index
    %c0_0 = arith.constant 0 : index
    %0 = vector.load %arg0[%c0, %c0_0] : memref<64x36xf32, #tpu.memory_space<vmem>>, vector<64x36xf32>
    %c0_1 = arith.constant 0 : index
    %c0_2 = arith.constant 0 : index
    %c0_3 = arith.constant 0 : index
    %1 = vector.load %arg1[%c0_1, %c0_2, %c0_3] : memref<3x64x64xf32, #tpu.memory_space<vmem>>, vector<1x64x64xf32>
    %2 = vector.shape_cast %1 : vector<1x64x64xf32> to vector<64x64xf32>
    %cst = arith.constant dense<0.000000e+00> : vector<64x36xf32>
    %3 = tpu.matmul %2, %0, %cst {dimension_numbers = #tpu.dot_dimension_numbers<[1], [0], [0], [1], [0, 0, 1, 1], [], []>} : vector<64x64xf32>, vector<64x36xf32>, vector<64x36xf32> -> vector<64x36xf32>
    %c0_4 = arith.constant 0 : index
    %c0_5 = arith.constant 0 : index
    %c0_6 = arith.constant 0 : index
    %4 = vector.load %arg2[%c0_4, %c0_5, %c0_6] : memref<3x36x72xf32, #tpu.memory_space<vmem>>, vector<1x36x72xf32>
    %5 = vector.shape_cast %4 : vector<1x36x72xf32> to vector<36x72xf32>
    %cst_7 = arith.constant dense<0.000000e+00> : vector<64x72xf32>
    %6 = tpu.matmul %3, %5, %cst_7 {dimension_numbers = #tpu.dot_dimension_numbers<[1], [0], [0], [1], [0, 0, 1, 1], [], []>} : vector<64x36xf32>, vector<36x72xf32>, vector<64x72xf32> -> vector<64x72xf32>
    %c1 = arith.constant 1 : index
    %c0_8 = arith.constant 0 : index
    %c0_9 = arith.constant 0 : index
    %7 = vector.load %arg1[%c1, %c0_8, %c0_9] : memref<3x64x64xf32, #tpu.memory_space<vmem>>, vector<1x64x64xf32>
    %8 = vector.shape_cast %7 : vector<1x64x64xf32> to vector<64x64xf32>
    %cst_10 = arith.constant dense<0.000000e+00> : vector<64x36xf32>
    %9 = tpu.matmul %8, %0, %cst_10 {dimension_numbers = #tpu.dot_dimension_numbers<[1], [0], [0], [1], [0, 0, 1, 1], [], []>} : vector<64x64xf32>, vector<64x36xf32>, vector<64x36xf32> -> vector<64x36xf32>
    %c1_11 = arith.constant 1 : index
    %c0_12 = arith.constant 0 : index
    %c0_13 = arith.constant 0 : index
    %10 = vector.load %arg2[%c1_11, %c0_12, %c0_13] : memref<3x36x72xf32, #tpu.memory_space<vmem>>, vector<1x36x72xf32>
    %11 = vector.shape_cast %10 : vector<1x36x72xf32> to vector<36x72xf32>
    %cst_14 = arith.constant dense<0.000000e+00> : vector<64x72xf32>
    %12 = tpu.matmul %9, %11, %cst_14 {dimension_numbers = #tpu.dot_dimension_numbers<[1], [0], [0], [1], [0, 0, 1, 1], [], []>} : vector<64x36xf32>, vector<36x72xf32>, vector<64x72xf32> -> vector<64x72xf32>
    %13 = arith.addf %6, %12 : vector<64x72xf32>
    %c2 = arith.constant 2 : index
    %c0_15 = arith.constant 0 : index
    %c0_16 = arith.constant 0 : index
    %14 = vector.load %arg1[%c2, %c0_15, %c0_16] : memref<3x64x64xf32, #tpu.memory_space<vmem>>, vector<1x64x64xf32>
    %15 = vector.shape_cast %14 : vector<1x64x64xf32> to vector<64x64xf32>
    %cst_17 = arith.constant dense<0.000000e+00> : vector<64x36xf32>
    %16 = tpu.matmul %15, %0, %cst_17 {dimension_numbers = #tpu.dot_dimension_numbers<[1], [0], [0], [1], [0, 0, 1, 1], [], []>} : vector<64x64xf32>, vector<64x36xf32>, vector<64x36xf32> -> vector<64x36xf32>
    %c2_18 = arith.constant 2 : index
    %c0_19 = arith.constant 0 : index
    %c0_20 = arith.constant 0 : index
    %17 = vector.load %arg2[%c2_18, %c0_19, %c0_20] : memref<3x36x72xf32, #tpu.memory_space<vmem>>, vector<1x36x72xf32>
    %18 = vector.shape_cast %17 : vector<1x36x72xf32> to vector<36x72xf32>
    %cst_21 = arith.constant dense<0.000000e+00> : vector<64x72xf32>
    %19 = tpu.matmul %16, %18, %cst_21 {dimension_numbers = #tpu.dot_dimension_numbers<[1], [0], [0], [1], [0, 0, 1, 1], [], []>} : vector<64x36xf32>, vector<36x72xf32>, vector<64x72xf32> -> vector<64x72xf32>
    %20 = arith.addf %13, %19 : vector<64x72xf32>
    %c0_22 = arith.constant 0 : index
    %c0_23 = arith.constant 0 : index
    %21 = vector.load %arg3[%c0_22, %c0_23] : memref<1x72xf32, #tpu.memory_space<vmem>>, vector<1x72xf32>
    %22 = vector.broadcast %21 : vector<1x72xf32> to vector<64x72xf32>
    %23 = arith.addf %20, %22 : vector<64x72xf32>
    %cst_24 = arith.constant 0.000000e+00 : f32
    %24 = vector.broadcast %cst_24 : f32 to vector<64x72xf32>
    %25 = arith.maximumf %23, %24 : vector<64x72xf32>
    %c0_25 = arith.constant 0 : index
    %c0_26 = arith.constant 0 : index
    %c0_27 = arith.constant 0 : index
    %26 = vector.load %arg4[%c0_25, %c0_26, %c0_27] : memref<3x32x64xf32, #tpu.memory_space<vmem>>, vector<1x32x64xf32>
    %27 = vector.shape_cast %26 : vector<1x32x64xf32> to vector<32x64xf32>
    %cst_28 = arith.constant dense<0.000000e+00> : vector<32x72xf32>
    %28 = tpu.matmul %27, %25, %cst_28 {dimension_numbers = #tpu.dot_dimension_numbers<[1], [0], [0], [1], [0, 0, 1, 1], [], []>} : vector<32x64xf32>, vector<64x72xf32>, vector<32x72xf32> -> vector<32x72xf32>
    %c0_29 = arith.constant 0 : index
    %c0_30 = arith.constant 0 : index
    %c0_31 = arith.constant 0 : index
    %29 = vector.load %arg5[%c0_29, %c0_30, %c0_31] : memref<3x72x144xf32, #tpu.memory_space<vmem>>, vector<1x72x144xf32>
    %30 = vector.shape_cast %29 : vector<1x72x144xf32> to vector<72x144xf32>
    %cst_32 = arith.constant dense<0.000000e+00> : vector<32x144xf32>
    %31 = tpu.matmul %28, %30, %cst_32 {dimension_numbers = #tpu.dot_dimension_numbers<[1], [0], [0], [1], [0, 0, 1, 1], [], []>} : vector<32x72xf32>, vector<72x144xf32>, vector<32x144xf32> -> vector<32x144xf32>
    %c1_33 = arith.constant 1 : index
    %c0_34 = arith.constant 0 : index
    %c0_35 = arith.constant 0 : index
    %32 = vector.load %arg4[%c1_33, %c0_34, %c0_35] : memref<3x32x64xf32, #tpu.memory_space<vmem>>, vector<1x32x64xf32>
    %33 = vector.shape_cast %32 : vector<1x32x64xf32> to vector<32x64xf32>
    %cst_36 = arith.constant dense<0.000000e+00> : vector<32x72xf32>
    %34 = tpu.matmul %33, %25, %cst_36 {dimension_numbers = #tpu.dot_dimension_numbers<[1], [0], [0], [1], [0, 0, 1, 1], [], []>} : vector<32x64xf32>, vector<64x72xf32>, vector<32x72xf32> -> vector<32x72xf32>
    %c1_37 = arith.constant 1 : index
    %c0_38 = arith.constant 0 : index
    %c0_39 = arith.constant 0 : index
    %35 = vector.load %arg5[%c1_37, %c0_38, %c0_39] : memref<3x72x144xf32, #tpu.memory_space<vmem>>, vector<1x72x144xf32>
    %36 = vector.shape_cast %35 : vector<1x72x144xf32> to vector<72x144xf32>
    %cst_40 = arith.constant dense<0.000000e+00> : vector<32x144xf32>
    %37 = tpu.matmul %34, %36, %cst_40 {dimension_numbers = #tpu.dot_dimension_numbers<[1], [0], [0], [1], [0, 0, 1, 1], [], []>} : vector<32x72xf32>, vector<72x144xf32>, vector<32x144xf32> -> vector<32x144xf32>
    %38 = arith.addf %31, %37 : vector<32x144xf32>
    %c2_41 = arith.constant 2 : index
    %c0_42 = arith.constant 0 : index
    %c0_43 = arith.constant 0 : index
    %39 = vector.load %arg4[%c2_41, %c0_42, %c0_43] : memref<3x32x64xf32, #tpu.memory_space<vmem>>, vector<1x32x64xf32>
    %40 = vector.shape_cast %39 : vector<1x32x64xf32> to vector<32x64xf32>
    %cst_44 = arith.constant dense<0.000000e+00> : vector<32x72xf32>
    %41 = tpu.matmul %40, %25, %cst_44 {dimension_numbers = #tpu.dot_dimension_numbers<[1], [0], [0], [1], [0, 0, 1, 1], [], []>} : vector<32x64xf32>, vector<64x72xf32>, vector<32x72xf32> -> vector<32x72xf32>
    %c2_45 = arith.constant 2 : index
    %c0_46 = arith.constant 0 : index
    %c0_47 = arith.constant 0 : index
    %42 = vector.load %arg5[%c2_45, %c0_46, %c0_47] : memref<3x72x144xf32, #tpu.memory_space<vmem>>, vector<1x72x144xf32>
    %43 = vector.shape_cast %42 : vector<1x72x144xf32> to vector<72x144xf32>
    %cst_48 = arith.constant dense<0.000000e+00> : vector<32x144xf32>
    %44 = tpu.matmul %41, %43, %cst_48 {dimension_numbers = #tpu.dot_dimension_numbers<[1], [0], [0], [1], [0, 0, 1, 1], [], []>} : vector<32x72xf32>, vector<72x144xf32>, vector<32x144xf32> -> vector<32x144xf32>
    %45 = arith.addf %38, %44 : vector<32x144xf32>
    %c0_49 = arith.constant 0 : index
    %c0_50 = arith.constant 0 : index
    %46 = vector.load %arg6[%c0_49, %c0_50] : memref<1x144xf32, #tpu.memory_space<vmem>>, vector<1x144xf32>
    %47 = vector.broadcast %46 : vector<1x144xf32> to vector<32x144xf32>
    %48 = arith.addf %45, %47 : vector<32x144xf32>
    %cst_51 = arith.constant 0.000000e+00 : f32
    %49 = vector.broadcast %cst_51 : f32 to vector<32x144xf32>
    %50 = arith.maximumf %48, %49 : vector<32x144xf32>
    %c0_52 = arith.constant 0 : index
    %c0_53 = arith.constant 0 : index
    %c0_54 = arith.constant 0 : index
    %51 = vector.load %arg7[%c0_52, %c0_53, %c0_54] : memref<3x32x32xf32, #tpu.memory_space<vmem>>, vector<1x32x32xf32>
    %52 = vector.shape_cast %51 : vector<1x32x32xf32> to vector<32x32xf32>
    %cst_55 = arith.constant dense<0.000000e+00> : vector<32x144xf32>
    %53 = tpu.matmul %52, %50, %cst_55 {dimension_numbers = #tpu.dot_dimension_numbers<[1], [0], [0], [1], [0, 0, 1, 1], [], []>} : vector<32x32xf32>, vector<32x144xf32>, vector<32x144xf32> -> vector<32x144xf32>
    %c0_56 = arith.constant 0 : index
    %c0_57 = arith.constant 0 : index
    %c0_58 = arith.constant 0 : index
    %54 = vector.load %arg8[%c0_56, %c0_57, %c0_58] : memref<3x144x288xf32, #tpu.memory_space<vmem>>, vector<1x144x288xf32>
    %55 = vector.shape_cast %54 : vector<1x144x288xf32> to vector<144x288xf32>
    %cst_59 = arith.constant dense<0.000000e+00> : vector<32x288xf32>
    %56 = tpu.matmul %53, %55, %cst_59 {dimension_numbers = #tpu.dot_dimension_numbers<[1], [0], [0], [1], [0, 0, 1, 1], [], []>} : vector<32x144xf32>, vector<144x288xf32>, vector<32x288xf32> -> vector<32x288xf32>
    %c1_60 = arith.constant 1 : index
    %c0_61 = arith.constant 0 : index
    %c0_62 = arith.constant 0 : index
    %57 = vector.load %arg7[%c1_60, %c0_61, %c0_62] : memref<3x32x32xf32, #tpu.memory_space<vmem>>, vector<1x32x32xf32>
    %58 = vector.shape_cast %57 : vector<1x32x32xf32> to vector<32x32xf32>
    %cst_63 = arith.constant dense<0.000000e+00> : vector<32x144xf32>
    %59 = tpu.matmul %58, %50, %cst_63 {dimension_numbers = #tpu.dot_dimension_numbers<[1], [0], [0], [1], [0, 0, 1, 1], [], []>} : vector<32x32xf32>, vector<32x144xf32>, vector<32x144xf32> -> vector<32x144xf32>
    %c1_64 = arith.constant 1 : index
    %c0_65 = arith.constant 0 : index
    %c0_66 = arith.constant 0 : index
    %60 = vector.load %arg8[%c1_64, %c0_65, %c0_66] : memref<3x144x288xf32, #tpu.memory_space<vmem>>, vector<1x144x288xf32>
    %61 = vector.shape_cast %60 : vector<1x144x288xf32> to vector<144x288xf32>
    %cst_67 = arith.constant dense<0.000000e+00> : vector<32x288xf32>
    %62 = tpu.matmul %59, %61, %cst_67 {dimension_numbers = #tpu.dot_dimension_numbers<[1], [0], [0], [1], [0, 0, 1, 1], [], []>} : vector<32x144xf32>, vector<144x288xf32>, vector<32x288xf32> -> vector<32x288xf32>
    %63 = arith.addf %56, %62 : vector<32x288xf32>
    %c2_68 = arith.constant 2 : index
    %c0_69 = arith.constant 0 : index
    %c0_70 = arith.constant 0 : index
    %64 = vector.load %arg7[%c2_68, %c0_69, %c0_70] : memref<3x32x32xf32, #tpu.memory_space<vmem>>, vector<1x32x32xf32>
    %65 = vector.shape_cast %64 : vector<1x32x32xf32> to vector<32x32xf32>
    %cst_71 = arith.constant dense<0.000000e+00> : vector<32x144xf32>
    %66 = tpu.matmul %65, %50, %cst_71 {dimension_numbers = #tpu.dot_dimension_numbers<[1], [0], [0], [1], [0, 0, 1, 1], [], []>} : vector<32x32xf32>, vector<32x144xf32>, vector<32x144xf32> -> vector<32x144xf32>
    %c2_72 = arith.constant 2 : index
    %c0_73 = arith.constant 0 : index
    %c0_74 = arith.constant 0 : index
    %67 = vector.load %arg8[%c2_72, %c0_73, %c0_74] : memref<3x144x288xf32, #tpu.memory_space<vmem>>, vector<1x144x288xf32>
    %68 = vector.shape_cast %67 : vector<1x144x288xf32> to vector<144x288xf32>
    %cst_75 = arith.constant dense<0.000000e+00> : vector<32x288xf32>
    %69 = tpu.matmul %66, %68, %cst_75 {dimension_numbers = #tpu.dot_dimension_numbers<[1], [0], [0], [1], [0, 0, 1, 1], [], []>} : vector<32x144xf32>, vector<144x288xf32>, vector<32x288xf32> -> vector<32x288xf32>
    %70 = arith.addf %63, %69 : vector<32x288xf32>
    %c0_76 = arith.constant 0 : index
    %c0_77 = arith.constant 0 : index
    %71 = vector.load %arg9[%c0_76, %c0_77] : memref<1x288xf32, #tpu.memory_space<vmem>>, vector<1x288xf32>
    %72 = vector.broadcast %71 : vector<1x288xf32> to vector<32x288xf32>
    %73 = arith.addf %70, %72 : vector<32x288xf32>
    %cst_78 = arith.constant 0.000000e+00 : f32
    %74 = vector.broadcast %cst_78 : f32 to vector<32x288xf32>
    %75 = arith.maximumf %73, %74 : vector<32x288xf32>
    %c0_79 = arith.constant 0 : index
    %c0_80 = arith.constant 0 : index
    %c0_81 = arith.constant 0 : index
    %76 = vector.load %arg10[%c0_79, %c0_80, %c0_81] : memref<3x16x32xf32, #tpu.memory_space<vmem>>, vector<1x16x32xf32>
    %77 = vector.shape_cast %76 : vector<1x16x32xf32> to vector<16x32xf32>
    %cst_82 = arith.constant dense<0.000000e+00> : vector<16x288xf32>
    %78 = tpu.matmul %77, %75, %cst_82 {dimension_numbers = #tpu.dot_dimension_numbers<[1], [0], [0], [1], [0, 0, 1, 1], [], []>} : vector<16x32xf32>, vector<32x288xf32>, vector<16x288xf32> -> vector<16x288xf32>
    %c0_83 = arith.constant 0 : index
    %c0_84 = arith.constant 0 : index
    %c0_85 = arith.constant 0 : index
    %79 = vector.load %arg11[%c0_83, %c0_84, %c0_85] : memref<3x288x192xf32, #tpu.memory_space<vmem>>, vector<1x288x192xf32>
    %80 = vector.shape_cast %79 : vector<1x288x192xf32> to vector<288x192xf32>
    %cst_86 = arith.constant dense<0.000000e+00> : vector<16x192xf32>
    %81 = tpu.matmul %78, %80, %cst_86 {dimension_numbers = #tpu.dot_dimension_numbers<[1], [0], [0], [1], [0, 0, 1, 1], [], []>} : vector<16x288xf32>, vector<288x192xf32>, vector<16x192xf32> -> vector<16x192xf32>
    %c1_87 = arith.constant 1 : index
    %c0_88 = arith.constant 0 : index
    %c0_89 = arith.constant 0 : index
    %82 = vector.load %arg10[%c1_87, %c0_88, %c0_89] : memref<3x16x32xf32, #tpu.memory_space<vmem>>, vector<1x16x32xf32>
    %83 = vector.shape_cast %82 : vector<1x16x32xf32> to vector<16x32xf32>
    %cst_90 = arith.constant dense<0.000000e+00> : vector<16x288xf32>
    %84 = tpu.matmul %83, %75, %cst_90 {dimension_numbers = #tpu.dot_dimension_numbers<[1], [0], [0], [1], [0, 0, 1, 1], [], []>} : vector<16x32xf32>, vector<32x288xf32>, vector<16x288xf32> -> vector<16x288xf32>
    %c1_91 = arith.constant 1 : index
    %c0_92 = arith.constant 0 : index
    %c0_93 = arith.constant 0 : index
    %85 = vector.load %arg11[%c1_91, %c0_92, %c0_93] : memref<3x288x192xf32, #tpu.memory_space<vmem>>, vector<1x288x192xf32>
    %86 = vector.shape_cast %85 : vector<1x288x192xf32> to vector<288x192xf32>
    %cst_94 = arith.constant dense<0.000000e+00> : vector<16x192xf32>
    %87 = tpu.matmul %84, %86, %cst_94 {dimension_numbers = #tpu.dot_dimension_numbers<[1], [0], [0], [1], [0, 0, 1, 1], [], []>} : vector<16x288xf32>, vector<288x192xf32>, vector<16x192xf32> -> vector<16x192xf32>
    %88 = arith.addf %81, %87 : vector<16x192xf32>
    %c2_95 = arith.constant 2 : index
    %c0_96 = arith.constant 0 : index
    %c0_97 = arith.constant 0 : index
    %89 = vector.load %arg10[%c2_95, %c0_96, %c0_97] : memref<3x16x32xf32, #tpu.memory_space<vmem>>, vector<1x16x32xf32>
    %90 = vector.shape_cast %89 : vector<1x16x32xf32> to vector<16x32xf32>
    %cst_98 = arith.constant dense<0.000000e+00> : vector<16x288xf32>
    %91 = tpu.matmul %90, %75, %cst_98 {dimension_numbers = #tpu.dot_dimension_numbers<[1], [0], [0], [1], [0, 0, 1, 1], [], []>} : vector<16x32xf32>, vector<32x288xf32>, vector<16x288xf32> -> vector<16x288xf32>
    %c2_99 = arith.constant 2 : index
    %c0_100 = arith.constant 0 : index
    %c0_101 = arith.constant 0 : index
    %92 = vector.load %arg11[%c2_99, %c0_100, %c0_101] : memref<3x288x192xf32, #tpu.memory_space<vmem>>, vector<1x288x192xf32>
    %93 = vector.shape_cast %92 : vector<1x288x192xf32> to vector<288x192xf32>
    %cst_102 = arith.constant dense<0.000000e+00> : vector<16x192xf32>
    %94 = tpu.matmul %91, %93, %cst_102 {dimension_numbers = #tpu.dot_dimension_numbers<[1], [0], [0], [1], [0, 0, 1, 1], [], []>} : vector<16x288xf32>, vector<288x192xf32>, vector<16x192xf32> -> vector<16x192xf32>
    %95 = arith.addf %88, %94 : vector<16x192xf32>
    %c0_103 = arith.constant 0 : index
    %c0_104 = arith.constant 0 : index
    %96 = vector.load %arg12[%c0_103, %c0_104] : memref<1x192xf32, #tpu.memory_space<vmem>>, vector<1x192xf32>
    %97 = vector.broadcast %96 : vector<1x192xf32> to vector<16x192xf32>
    %98 = arith.addf %95, %97 : vector<16x192xf32>
    %cst_105 = arith.constant 0.000000e+00 : f32
    %99 = vector.broadcast %cst_105 : f32 to vector<16x192xf32>
    %100 = arith.maximumf %98, %99 : vector<16x192xf32>
    %c0_106 = arith.constant 0 : index
    %c0_107 = arith.constant 0 : index
    %c0_108 = arith.constant 0 : index
    %101 = vector.load %arg13[%c0_106, %c0_107, %c0_108] : memref<3x4x16xf32, #tpu.memory_space<vmem>>, vector<1x4x16xf32>
    %102 = vector.shape_cast %101 : vector<1x4x16xf32> to vector<4x16xf32>
    %cst_109 = arith.constant dense<0.000000e+00> : vector<4x192xf32>
    %103 = tpu.matmul %102, %100, %cst_109 {dimension_numbers = #tpu.dot_dimension_numbers<[1], [0], [0], [1], [0, 0, 1, 1], [], []>} : vector<4x16xf32>, vector<16x192xf32>, vector<4x192xf32> -> vector<4x192xf32>
    %c0_110 = arith.constant 0 : index
    %c0_111 = arith.constant 0 : index
    %c0_112 = arith.constant 0 : index
    %104 = vector.load %arg14[%c0_110, %c0_111, %c0_112] : memref<3x192x64xf32, #tpu.memory_space<vmem>>, vector<1x192x64xf32>
    %105 = vector.shape_cast %104 : vector<1x192x64xf32> to vector<192x64xf32>
    %cst_113 = arith.constant dense<0.000000e+00> : vector<4x64xf32>
    %106 = tpu.matmul %103, %105, %cst_113 {dimension_numbers = #tpu.dot_dimension_numbers<[1], [0], [0], [1], [0, 0, 1, 1], [], []>} : vector<4x192xf32>, vector<192x64xf32>, vector<4x64xf32> -> vector<4x64xf32>
    %c1_114 = arith.constant 1 : index
    %c0_115 = arith.constant 0 : index
    %c0_116 = arith.constant 0 : index
    %107 = vector.load %arg13[%c1_114, %c0_115, %c0_116] : memref<3x4x16xf32, #tpu.memory_space<vmem>>, vector<1x4x16xf32>
    %108 = vector.shape_cast %107 : vector<1x4x16xf32> to vector<4x16xf32>
    %cst_117 = arith.constant dense<0.000000e+00> : vector<4x192xf32>
    %109 = tpu.matmul %108, %100, %cst_117 {dimension_numbers = #tpu.dot_dimension_numbers<[1], [0], [0], [1], [0, 0, 1, 1], [], []>} : vector<4x16xf32>, vector<16x192xf32>, vector<4x192xf32> -> vector<4x192xf32>
    %c1_118 = arith.constant 1 : index
    %c0_119 = arith.constant 0 : index
    %c0_120 = arith.constant 0 : index
    %110 = vector.load %arg14[%c1_118, %c0_119, %c0_120] : memref<3x192x64xf32, #tpu.memory_space<vmem>>, vector<1x192x64xf32>
    %111 = vector.shape_cast %110 : vector<1x192x64xf32> to vector<192x64xf32>
    %cst_121 = arith.constant dense<0.000000e+00> : vector<4x64xf32>
    %112 = tpu.matmul %109, %111, %cst_121 {dimension_numbers = #tpu.dot_dimension_numbers<[1], [0], [0], [1], [0, 0, 1, 1], [], []>} : vector<4x192xf32>, vector<192x64xf32>, vector<4x64xf32> -> vector<4x64xf32>
    %113 = arith.addf %106, %112 : vector<4x64xf32>
    %c2_122 = arith.constant 2 : index
    %c0_123 = arith.constant 0 : index
    %c0_124 = arith.constant 0 : index
    %114 = vector.load %arg13[%c2_122, %c0_123, %c0_124] : memref<3x4x16xf32, #tpu.memory_space<vmem>>, vector<1x4x16xf32>
    %115 = vector.shape_cast %114 : vector<1x4x16xf32> to vector<4x16xf32>
    %cst_125 = arith.constant dense<0.000000e+00> : vector<4x192xf32>
    %116 = tpu.matmul %115, %100, %cst_125 {dimension_numbers = #tpu.dot_dimension_numbers<[1], [0], [0], [1], [0, 0, 1, 1], [], []>} : vector<4x16xf32>, vector<16x192xf32>, vector<4x192xf32> -> vector<4x192xf32>
    %c2_126 = arith.constant 2 : index
    %c0_127 = arith.constant 0 : index
    %c0_128 = arith.constant 0 : index
    %117 = vector.load %arg14[%c2_126, %c0_127, %c0_128] : memref<3x192x64xf32, #tpu.memory_space<vmem>>, vector<1x192x64xf32>
    %118 = vector.shape_cast %117 : vector<1x192x64xf32> to vector<192x64xf32>
    %cst_129 = arith.constant dense<0.000000e+00> : vector<4x64xf32>
    %119 = tpu.matmul %116, %118, %cst_129 {dimension_numbers = #tpu.dot_dimension_numbers<[1], [0], [0], [1], [0, 0, 1, 1], [], []>} : vector<4x192xf32>, vector<192x64xf32>, vector<4x64xf32> -> vector<4x64xf32>
    %120 = arith.addf %113, %119 : vector<4x64xf32>
    %c0_130 = arith.constant 0 : index
    %c0_131 = arith.constant 0 : index
    %121 = vector.load %arg15[%c0_130, %c0_131] : memref<1x64xf32, #tpu.memory_space<vmem>>, vector<1x64xf32>
    %122 = vector.broadcast %121 : vector<1x64xf32> to vector<4x64xf32>
    %123 = arith.addf %120, %122 : vector<4x64xf32>
    %c0_132 = arith.constant 0 : index
    %c0_133 = arith.constant 0 : index
    %124 = vector.load %arg16[%c0_132, %c0_133] : memref<4x64xf32, #tpu.memory_space<vmem>>, vector<4x64xf32>
    tpu.vector_store %arg16[%c0_132, %c0_133], %123 {strides = array<i32>} : memref<4x64xf32, #tpu.memory_space<vmem>>, vector<4x64xf32>,
    return
  }
}

</mosaic_0001>

<llo_original>
// kernel: stem_forward.1
$region0: #{stem_forward.1}
  #allocation0 [shape = 'u32[]', space=smem, size = 0x4, offset = 0x4, fixed_abs, tag = 'smem constant byte address 0x4 - core index']
  #allocation1 [shape = 'u32[72,128]{1,0:T(1,128)}', space=vmem, size = 0x9000, scoped, tag = 'internal scratch']
  %s0 = inlined_call_operand.vmem [shape: f32[64,36], index: 0, kind: input, shape index: {}]
  %s1 = inlined_call_operand.vmem [shape: f32[3,64,64], index: 1, kind: input, shape index: {}]
  %s2 = inlined_call_operand.vmem [shape: f32[3,36,72], index: 2, kind: input, shape index: {}]
  %s3 = inlined_call_operand.vmem [shape: f32[1,72], index: 3, kind: input, shape index: {}]
  %s4 = inlined_call_operand.vmem [shape: f32[3,32,64], index: 4, kind: input, shape index: {}]
  %s5 = inlined_call_operand.vmem [shape: f32[3,72,144], index: 5, kind: input, shape index: {}]
  %s6 = inlined_call_operand.vmem [shape: f32[1,144], index: 6, kind: input, shape index: {}]
  %s7 = inlined_call_operand.vmem [shape: f32[3,32,32], index: 7, kind: input, shape index: {}]
  %s8 = inlined_call_operand.vmem [shape: f32[3,144,288], index: 8, kind: input, shape index: {}]
  %s9 = inlined_call_operand.vmem [shape: f32[1,288], index: 9, kind: input, shape index: {}]
  %s10 = inlined_call_operand.vmem [shape: f32[3,16,32], index: 10, kind: input, shape index: {}]
  %s11 = inlined_call_operand.vmem [shape: f32[3,288,192], index: 11, kind: input, shape index: {}]
  %s12 = inlined_call_operand.vmem [shape: f32[1,192], index: 12, kind: input, shape index: {}]
  %s13 = inlined_call_operand.vmem [shape: f32[3,4,16], index: 13, kind: input, shape index: {}]
  %s14 = inlined_call_operand.vmem [shape: f32[3,192,64], index: 14, kind: input, shape index: {}]
  %s15 = inlined_call_operand.vmem [shape: f32[1,64], index: 15, kind: input, shape index: {}]
  %s16 = inlined_call_operand.vmem [shape: f32[4,64], index: 16, kind: output, shape index: {}]
  %s17 = sld [smem:[#allocation0]]
  $region74: #{stem_forward.1} parent=0
    _
  %s19 = ssub.s32 1, %s17
  %s20 = scalar_select 0, %s19, %s17
  // Predicated region
  $region2: #{stem_forward.1} parent=0 // pred_check
    _
  $region3: #{stem_forward.1} parent=0 // pred_check_branch
    %22 = sbr.rel (0) target = $region5
  $region4: #{stem_forward.1} parent=0 // pred_region
    _
  $region5: #{stem_forward.1} parent=0 // pred_fallthru
    _
  // Predicated region
  $region6: #{stem_forward.1} parent=0 // pred_check
    _
  $region7: #{stem_forward.1} parent=0 // pred_check_branch
    %24 = sbr.rel (0) target = $region9
  $region8: #{stem_forward.1} parent=0 // pred_region
    _
  $region9: #{stem_forward.1} parent=0 // pred_fallthru
    _
  // Predicated region
  $region10: #{stem_forward.1} parent=0 // pred_check
    _
  $region11: #{stem_forward.1} parent=0 // pred_check_branch
    %26 = sbr.rel (0) target = $region13
  $region12: #{stem_forward.1} parent=0 // pred_region
    _
  $region13: #{stem_forward.1} parent=0 // pred_fallthru
    _
  // Predicated region
  $region14: #{stem_forward.1} parent=0 // pred_check
    _
  $region15: #{stem_forward.1} parent=0 // pred_check_branch
    %28 = sbr.rel (0) target = $region17
  $region16: #{stem_forward.1} parent=0 // pred_region
    _
  $region17: #{stem_forward.1} parent=0 // pred_fallthru
    _
  // Predicated region
  $region18: #{stem_forward.1} parent=0 // pred_check
    _
  $region19: #{stem_forward.1} parent=0 // pred_check_branch
    %30 = sbr.rel (0) target = $region21
  $region20: #{stem_forward.1} parent=0 // pred_region
    _
  $region21: #{stem_forward.1} parent=0 // pred_fallthru
    _
  // Predicated region
  $region22: #{stem_forward.1} parent=0 // pred_check
    _
  $region23: #{stem_forward.1} parent=0 // pred_check_branch
    %32 = sbr.rel (0) target = $region25
  $region24: #{stem_forward.1} parent=0 // pred_region
    _
  $region25: #{stem_forward.1} parent=0 // pred_fallthru
    _
  // Predicated region
  $region26: #{stem_forward.1} parent=0 // pred_check
    _
  $region27: #{stem_forward.1} parent=0 // pred_check_branch
    %34 = sbr.rel (0) target = $region29
  $region28: #{stem_forward.1} parent=0 // pred_region
    _
  $region29: #{stem_forward.1} parent=0 // pred_fallthru
    _
  // Predicated region
  $region30: #{stem_forward.1} parent=0 // pred_check
    _
  $region31: #{stem_forward.1} parent=0 // pred_check_branch
    %36 = sbr.rel (0) target = $region33
  $region32: #{stem_forward.1} parent=0 // pred_region
    _
  $region33: #{stem_forward.1} parent=0 // pred_fallthru
    _
  // Predicated region
  $region34: #{stem_forward.1} parent=0 // pred_check
    _
  $region35: #{stem_forward.1} parent=0 // pred_check_branch
    %38 = sbr.rel (0) target = $region37
  $region36: #{stem_forward.1} parent=0 // pred_region
    _
  $region37: #{stem_forward.1} parent=0 // pred_fallthru
    _
  // Predicated region
  $region38: #{stem_forward.1} parent=0 // pred_check
    _
  $region39: #{stem_forward.1} parent=0 // pred_check_branch
    %40 = sbr.rel (0) target = $region41
  $region40: #{stem_forward.1} parent=0 // pred_region
    _
  $region41: #{stem_forward.1} parent=0 // pred_fallthru
    _
  // Predicated region
  $region42: #{stem_forward.1} parent=0 // pred_check
    _
  $region43: #{stem_forward.1} parent=0 // pred_check_branch
    %42 = sbr.rel (0) target = $region45
  $region44: #{stem_forward.1} parent=0 // pred_region
    _
  $region45: #{stem_forward.1} parent=0 // pred_fallthru
    _
  // Predicated region
  $region46: #{stem_forward.1} parent=0 // pred_check
    _
  $region47: #{stem_forward.1} parent=0 // pred_check_branch
    %44 = sbr.rel (0) target = $region49
  $region48: #{stem_forward.1} parent=0 // pred_region
    _
  $region49: #{stem_forward.1} parent=0 // pred_fallthru
    _
  // Predicated region
  $region50: #{stem_forward.1} parent=0 // pred_check
    _
  $region51: #{stem_forward.1} parent=0 // pred_check_branch
    %46 = sbr.rel (0) target = $region53
  $region52: #{stem_forward.1} parent=0 // pred_region
    _
  $region53: #{stem_forward.1} parent=0 // pred_fallthru
    _
  // Predicated region
  $region54: #{stem_forward.1} parent=0 // pred_check
    _
  $region55: #{stem_forward.1} parent=0 // pred_check_branch
    %48 = sbr.rel (0) target = $region57
  $region56: #{stem_forward.1} parent=0 // pred_region
    _
  $region57: #{stem_forward.1} parent=0 // pred_fallthru
    _
  // Predicated region
  $region58: #{stem_forward.1} parent=0 // pred_check
    _
  $region59: #{stem_forward.1} parent=0 // pred_check_branch
    %50 = sbr.rel (0) target = $region61
  $region60: #{stem_forward.1} parent=0 // pred_region
    _
  $region61: #{stem_forward.1} parent=0 // pred_fallthru
    _
  // Predicated region
  $region62: #{stem_forward.1} parent=0 // pred_check
    _
  $region63: #{stem_forward.1} parent=0 // pred_check_branch
    %52 = sbr.rel (0) target = $region65
  $region64: #{stem_forward.1} parent=0 // pred_region
    _
  $region65: #{stem_forward.1} parent=0 // pred_fallthru
    _
  %v53 = vld [vmem:[%s0] sm:$0xff]
  %v54 = vld [vmem:[%s0 + $0x8] sm:$0xff]
  %v55 = vld [vmem:[%s0 + $0x10] sm:$0xff]
  %v56 = vld [vmem:[%s0 + $0x18] sm:$0xff]
  %v57 = vld [vmem:[%s0 + $0x20] sm:$0xff]
  %v58 = vld [vmem:[%s0 + $0x28] sm:$0xff]
  %v59 = vld [vmem:[%s0 + $0x30] sm:$0xff]
  %v60 = vld [vmem:[%s0 + $0x38] sm:$0xff]
  %v61 = vld [vmem:[%s1] sm:$0xff]
  %v62 = vld [vmem:[%s1 + $0x8] sm:$0xff]
  %v63 = vld [vmem:[%s1 + $0x10] sm:$0xff]
  %v64 = vld [vmem:[%s1 + $0x18] sm:$0xff]
  %v65 = vld [vmem:[%s1 + $0x20] sm:$0xff]
  %v66 = vld [vmem:[%s1 + $0x28] sm:$0xff]
  %v67 = vld [vmem:[%s1 + $0x30] sm:$0xff]
  %v68 = vld [vmem:[%s1 + $0x38] sm:$0xff]
  %vm69 = vcmask 523264
  %v71 = vsel %vm69, %v61, 0
  %v74 = vsel %vm69, %v62, 0
  %v77 = vsel %vm69, %v63, 0
  %v80 = vsel %vm69, %v64, 0
  %v83 = vsel %vm69, %v65, 0
  %v86 = vsel %vm69, %v66, 0
  %v89 = vsel %vm69, %v67, 0
  %v92 = vsel %vm69, %v68, 0
  %94 = vmatpush.msra.mxu0 0.0
  %95 = vmatpush.msra.mxu0 0.0
  %96 = vmatpush.msra.mxu0 0.0
  %97 = vmatpush.msra.mxu0 0.0
  %98 = vmatpush.msra.mxu0 0.0
  %99 = vmatpush.msra.mxu0 0.0
  %100 = vmatpush.msra.mxu0 0.0
  %101 = vmatpush.msra.mxu0 0.0
  %102 = vmatpush.msra.mxu0 %v60
  %103 = vmatpush.msra.mxu0 %v59
  %104 = vmatpush.msra.mxu0 %v58
  %105 = vmatpush.msra.mxu0 %v57
  %106 = vmatpush.msra.mxu0 %v56
  %107 = vmatpush.msra.mxu0 %v55
  %108 = vmatpush.msra.mxu0 %v54
  %109 = vmatpush.msra.mxu0 %v53
  %110 = vmatmul.f32.gmra.mxu0 %v71
  %v111 = vpop.f32.mrf.mxu0
  %v112 = vadd.f32 0.0, %v111
  %113 = vmatmul.f32.gmra.mxu0 %v74
  %v114 = vpop.f32.mrf.mxu0
  %v115 = vadd.f32 0.0, %v114
  %116 = vmatmul.f32.gmra.mxu0 %v77
  %v117 = vpop.f32.mrf.mxu0
  %v118 = vadd.f32 0.0, %v117
  %119 = vmatmul.f32.gmra.mxu0 %v80
  %v120 = vpop.f32.mrf.mxu0
  %v121 = vadd.f32 0.0, %v120
  %122 = vmatmul.f32.gmra.mxu0 %v83
  %v123 = vpop.f32.mrf.mxu0
  %v124 = vadd.f32 0.0, %v123
  %125 = vmatmul.f32.gmra.mxu0 %v86
  %v126 = vpop.f32.mrf.mxu0
  %v127 = vadd.f32 0.0, %v126
  %128 = vmatmul.f32.gmra.mxu0 %v89
  %v129 = vpop.f32.mrf.mxu0
  %v130 = vadd.f32 0.0, %v129
  %131 = vmatmul.f32.gmra.mxu0 %v92
  %v132 = vpop.f32.mrf.mxu0
  %v133 = vadd.f32 0.0, %v132
  %134 = vdwg.mxu0
  %v135 = vld [vmem:[%s2] sm:$0xff]
  %v136 = vld [vmem:[%s2 + $0x8] sm:$0xff]
  %v137 = vld [vmem:[%s2 + $0x10] sm:$0xff]
  %v138 = vld [vmem:[%s2 + $0x18] sm:$0xff]
  %v139 = vld [vmem:[%s2 + $0x20] sm:$0xf]
  %s140 = scalar_lea.vmem %s1, 64
  %v141 = vld [vmem:[%s140] sm:$0xff]
  %v142 = vld [vmem:[%s140 + $0x8] sm:$0xff]
  %v143 = vld [vmem:[%s140 + $0x10] sm:$0xff]
  %v144 = vld [vmem:[%s140 + $0x18] sm:$0xff]
  %v145 = vld [vmem:[%s140 + $0x20] sm:$0xff]
  %v146 = vld [vmem:[%s140 + $0x28] sm:$0xff]
  %v147 = vld [vmem:[%s140 + $0x30] sm:$0xff]
  %v148 = vld [vmem:[%s140 + $0x38] sm:$0xff]
  %v150 = vsel %vm69, %v141, 0
  %v153 = vsel %vm69, %v142, 0
  %v156 = vsel %vm69, %v143, 0
  %v159 = vsel %vm69, %v144, 0
  %v162 = vsel %vm69, %v145, 0
  %v165 = vsel %vm69, %v146, 0
  %v168 = vsel %vm69, %v147, 0
  %v171 = vsel %vm69, %v148, 0
  %173 = vmatpush.msra.mxu0 0.0
  %174 = vmatpush.msra.mxu0 0.0
  %175 = vmatpush.msra.mxu0 0.0
  %176 = vmatpush.msra.mxu0 0.0
  %177 = vmatpush.msra.mxu0 0.0
  %178 = vmatpush.msra.mxu0 0.0
  %179 = vmatpush.msra.mxu0 0.0
  %180 = vmatpush.msra.mxu0 0.0
  %181 = vmatpush.msra.mxu0 %v60
  %182 = vmatpush.msra.mxu0 %v59
  %183 = vmatpush.msra.mxu0 %v58
  %184 = vmatpush.msra.mxu0 %v57
  %185 = vmatpush.msra.mxu0 %v56
  %186 = vmatpush.msra.mxu0 %v55
  %187 = vmatpush.msra.mxu0 %v54
  %188 = vmatpush.msra.mxu0 %v53
  %189 = vmatmul.f32.gmra.mxu0 %v150
  %v190 = vpop.f32.mrf.mxu0
  %v191 = vadd.f32 0.0, %v190
  %192 = vmatmul.f32.gmra.mxu0 %v153
  %v193 = vpop.f32.mrf.mxu0
  %v194 = vadd.f32 0.0, %v193
  %195 = vmatmul.f32.gmra.mxu0 %v156
  %v196 = vpop.f32.mrf.mxu0
  %v197 = vadd.f32 0.0, %v196
  %198 = vmatmul.f32.gmra.mxu0 %v159
  %v199 = vpop.f32.mrf.mxu0
  %v200 = vadd.f32 0.0, %v199
  %201 = vmatmul.f32.gmra.mxu0 %v162
  %v202 = vpop.f32.mrf.mxu0
  %v203 = vadd.f32 0.0, %v202
  %204 = vmatmul.f32.gmra.mxu0 %v165
  %v205 = vpop.f32.mrf.mxu0
  %v206 = vadd.f32 0.0, %v205
  %207 = vmatmul.f32.gmra.mxu0 %v168
  %v208 = vpop.f32.mrf.mxu0
  %v209 = vadd.f32 0.0, %v208
  %210 = vmatmul.f32.gmra.mxu0 %v171
  %v211 = vpop.f32.mrf.mxu0
  %v212 = vadd.f32 0.0, %v211
  %213 = vdwg.mxu0
  %s214 = scalar_lea.vmem %s2, 40
  %v215 = vld [vmem:[%s214] sm:$0xff]
  %v216 = vld [vmem:[%s214 + $0x8] sm:$0xff]
  %v217 = vld [vmem:[%s214 + $0x10] sm:$0xff]
  %v218 = vld [vmem:[%s214 + $0x18] sm:$0xff]
  %v219 = vld [vmem:[%s214 + $0x20] sm:$0xf]
  %vm220 = vcmask 293888
  %v222 = vsel %vm220, %v191, 0
  %v225 = vsel %vm220, %v194, 0
  %v228 = vsel %vm220, %v197, 0
  %v231 = vsel %vm220, %v200, 0
  %v234 = vsel %vm220, %v203, 0
  %v237 = vsel %vm220, %v206, 0
  %v240 = vsel %vm220, %v209, 0
  %v243 = vsel %vm220, %v212, 0
  %vm245 = vcmask 1043456
  %v247 = vsel %vm245, %v219, 0
  %249 = vmatpush.msra.mxu0 0.0
  %250 = vmatpush.msra.mxu0 0.0
  %251 = vmatpush.msra.mxu0 0.0
  %252 = vmatpush.msra.mxu0 0.0
  %253 = vmatpush.msra.mxu0 0.0
  %254 = vmatpush.msra.mxu0 0.0
  %255 = vmatpush.msra.mxu0 0.0
  %256 = vmatpush.msra.mxu0 0.0
  %257 = vmatpush.msra.mxu0 0.0
  %258 = vmatpush.msra.mxu0 0.0
  %259 = vmatpush.msra.mxu0 0.0
  %260 = vmatpush.msra.mxu0 %v247
  %261 = vmatpush.msra.mxu0 %v218
  %262 = vmatpush.msra.mxu0 %v217
  %263 = vmatpush.msra.mxu0 %v216
  %264 = vmatpush.msra.mxu0 %v215
  %265 = vmatmul.f32.gmra.mxu0 %v222
  %v266 = vpop.f32.mrf.mxu0
  %v267 = vadd.f32 0.0, %v266
  %268 = vmatmul.f32.gmra.mxu0 %v225
  %v269 = vpop.f32.mrf.mxu0
  %v270 = vadd.f32 0.0, %v269
  %271 = vmatmul.f32.gmra.mxu0 %v228
  %v272 = vpop.f32.mrf.mxu0
  %v273 = vadd.f32 0.0, %v272
  %274 = vmatmul.f32.gmra.mxu0 %v231
  %v275 = vpop.f32.mrf.mxu0
  %v276 = vadd.f32 0.0, %v275
  %277 = vmatmul.f32.gmra.mxu0 %v234
  %v278 = vpop.f32.mrf.mxu0
  %v279 = vadd.f32 0.0, %v278
  %280 = vmatmul.f32.gmra.mxu0 %v237
  %v281 = vpop.f32.mrf.mxu0
  %v282 = vadd.f32 0.0, %v281
  %283 = vmatmul.f32.gmra.mxu0 %v240
  %v284 = vpop.f32.mrf.mxu0
  %v285 = vadd.f32 0.0, %v284
  %286 = vmatmul.f32.gmra.mxu0 %v243
  %v287 = vpop.f32.mrf.mxu0
  %v288 = vadd.f32 0.0, %v287
  %289 = vdwg.mxu0
  %v291 = vsel %vm220, %v112, 0
  %v294 = vsel %vm220, %v115, 0
  %v297 = vsel %vm220, %v118, 0
  %v300 = vsel %vm220, %v121, 0
  %v303 = vsel %vm220, %v124, 0
  %v306 = vsel %vm220, %v127, 0
  %v309 = vsel %vm220, %v130, 0
  %v312 = vsel %vm220, %v133, 0
  %v315 = vsel %vm245, %v139, 0
  %317 = vmatpush.msra.mxu0 0.0
  %318 = vmatpush.msra.mxu0 0.0
  %319 = vmatpush.msra.mxu0 0.0
  %320 = vmatpush.msra.mxu0 0.0
  %321 = vmatpush.msra.mxu0 0.0
  %322 = vmatpush.msra.mxu0 0.0
  %323 = vmatpush.msra.mxu0 0.0
  %324 = vmatpush.msra.mxu0 0.0
  %325 = vmatpush.msra.mxu0 0.0
  %326 = vmatpush.msra.mxu0 0.0
  %327 = vmatpush.msra.mxu0 0.0
  %328 = vmatpush.msra.mxu0 %v315
  %329 = vmatpush.msra.mxu0 %v138
  %330 = vmatpush.msra.mxu0 %v137
  %331 = vmatpush.msra.mxu0 %v136
  %332 = vmatpush.msra.mxu0 %v135
  %333 = vmatmul.f32.gmra.mxu0 %v291
  %v334 = vpop.f32.mrf.mxu0
  %v335 = vadd.f32 %v267, %v334
  %336 = vmatmul.f32.gmra.mxu0 %v294
  %v337 = vpop.f32.mrf.mxu0
  %v338 = vadd.f32 %v270, %v337
  %339 = vmatmul.f32.gmra.mxu0 %v297
  %v340 = vpop.f32.mrf.mxu0
  %v341 = vadd.f32 %v273, %v340
  %342 = vmatmul.f32.gmra.mxu0 %v300
  %v343 = vpop.f32.mrf.mxu0
  %v344 = vadd.f32 %v276, %v343
  %345 = vmatmul.f32.gmra.mxu0 %v303
  %v346 = vpop.f32.mrf.mxu0
  %v347 = vadd.f32 %v279, %v346
  %348 = vmatmul.f32.gmra.mxu0 %v306
  %v349 = vpop.f32.mrf.mxu0
  %v350 = vadd.f32 %v282, %v349
  %351 = vmatmul.f32.gmra.mxu0 %v309
  %v352 = vpop.f32.mrf.mxu0
  %v353 = vadd.f32 %v285, %v352
  %354 = vmatmul.f32.gmra.mxu0 %v312
  %v355 = vpop.f32.mrf.mxu0
  %v356 = vadd.f32 %v288, %v355
  %357 = vdwg.mxu0
  %s358 = scalar_lea.vmem %s1, 128
  %v359 = vld [vmem:[%s358] sm:$0xff]
  %v360 = vld [vmem:[%s358 + $0x8] sm:$0xff]
  %v361 = vld [vmem:[%s358 + $0x10] sm:$0xff]
  %v362 = vld [vmem:[%s358 + $0x18] sm:$0xff]
  %v363 = vld [vmem:[%s358 + $0x20] sm:$0xff]
  %v364 = vld [vmem:[%s358 + $0x28] sm:$0xff]
  %v365 = vld [vmem:[%s358 + $0x30] sm:$0xff]
  %v366 = vld [vmem:[%s358 + $0x38] sm:$0xff]
  %v368 = vsel %vm69, %v359, 0
  %v371 = vsel %vm69, %v360, 0
  %v374 = vsel %vm69, %v361, 0
  %v377 = vsel %vm69, %v362, 0
  %v380 = vsel %vm69, %v363, 0
  %v383 = vsel %vm69, %v364, 0
  %v386 = vsel %vm69, %v365, 0
  %v389 = vsel %vm69, %v366, 0
  %391 = vmatpush.msra.mxu0 0.0
  %392 = vmatpush.msra.mxu0 0.0
  %393 = vmatpush.msra.mxu0 0.0
  %394 = vmatpush.msra.mxu0 0.0
  %395 = vmatpush.msra.mxu0 0.0
  %396 = vmatpush.msra.mxu0 0.0
  %397 = vmatpush.msra.mxu0 0.0
  %398 = vmatpush.msra.mxu0 0.0
  %399 = vmatpush.msra.mxu0 %v60
  %400 = vmatpush.msra.mxu0 %v59
  %401 = vmatpush.msra.mxu0 %v58
  %402 = vmatpush.msra.mxu0 %v57
  %403 = vmatpush.msra.mxu0 %v56
  %404 = vmatpush.msra.mxu0 %v55
  %405 = vmatpush.msra.mxu0 %v54
  %406 = vmatpush.msra.mxu0 %v53
  %407 = vmatmul.f32.gmra.mxu0 %v368
  %v408 = vpop.f32.mrf.mxu0
  %v409 = vadd.f32 0.0, %v408
  %410 = vmatmul.f32.gmra.mxu0 %v371
  %v411 = vpop.f32.mrf.mxu0
  %v412 = vadd.f32 0.0, %v411
  %413 = vmatmul.f32.gmra.mxu0 %v374
  %v414 = vpop.f32.mrf.mxu0
  %v415 = vadd.f32 0.0, %v414
  %416 = vmatmul.f32.gmra.mxu0 %v377
  %v417 = vpop.f32.mrf.mxu0
  %v418 = vadd.f32 0.0, %v417
  %419 = vmatmul.f32.gmra.mxu0 %v380
  %v420 = vpop.f32.mrf.mxu0
  %v421 = vadd.f32 0.0, %v420
  %422 = vmatmul.f32.gmra.mxu0 %v383
  %v423 = vpop.f32.mrf.mxu0
  %v424 = vadd.f32 0.0, %v423
  %425 = vmatmul.f32.gmra.mxu0 %v386
  %v426 = vpop.f32.mrf.mxu0
  %v427 = vadd.f32 0.0, %v426
  %428 = vmatmul.f32.gmra.mxu0 %v389
  %v429 = vpop.f32.mrf.mxu0
  %v430 = vadd.f32 0.0, %v429
  %431 = vdwg.mxu0
  %s432 = scalar_lea.vmem %s2, 80
  %v433 = vld [vmem:[%s432] sm:$0xff]
  %v434 = vld [vmem:[%s432 + $0x8] sm:$0xff]
  %v435 = vld [vmem:[%s432 + $0x10] sm:$0xff]
  %v436 = vld [vmem:[%s432 + $0x18] sm:$0xff]
  %v437 = vld [vmem:[%s432 + $0x20] sm:$0xf]
  %v439 = vsel %vm220, %v409, 0
  %v442 = vsel %vm220, %v412, 0
  %v445 = vsel %vm220, %v415, 0
  %v448 = vsel %vm220, %v418, 0
  %v451 = vsel %vm220, %v421, 0
  %v454 = vsel %vm220, %v424, 0
  %v457 = vsel %vm220, %v427, 0
  %v460 = vsel %vm220, %v430, 0
  %v463 = vsel %vm245, %v437, 0
  %465 = vmatpush.msra.mxu0 0.0
  %466 = vmatpush.msra.mxu0 0.0
  %467 = vmatpush.msra.mxu0 0.0
  %468 = vmatpush.msra.mxu0 0.0
  %469 = vmatpush.msra.mxu0 0.0
  %470 = vmatpush.msra.mxu0 0.0
  %471 = vmatpush.msra.mxu0 0.0
  %472 = vmatpush.msra.mxu0 0.0
  %473 = vmatpush.msra.mxu0 0.0
  %474 = vmatpush.msra.mxu0 0.0
  %475 = vmatpush.msra.mxu0 0.0
  %476 = vmatpush.msra.mxu0 %v463
  %477 = vmatpush.msra.mxu0 %v436
  %478 = vmatpush.msra.mxu0 %v435
  %479 = vmatpush.msra.mxu0 %v434
  %480 = vmatpush.msra.mxu0 %v433
  %481 = vmatmul.f32.gmra.mxu0 %v439
  %v482 = vpop.f32.mrf.mxu0
  %v483 = vadd.f32 0.0, %v482
  %484 = vmatmul.f32.gmra.mxu0 %v442
  %v485 = vpop.f32.mrf.mxu0
  %v486 = vadd.f32 0.0, %v485
  %487 = vmatmul.f32.gmra.mxu0 %v445
  %v488 = vpop.f32.mrf.mxu0
  %v489 = vadd.f32 0.0, %v488
  %490 = vmatmul.f32.gmra.mxu0 %v448
  %v491 = vpop.f32.mrf.mxu0
  %v492 = vadd.f32 0.0, %v491
  %493 = vmatmul.f32.gmra.mxu0 %v451
  %v494 = vpop.f32.mrf.mxu0
  %v495 = vadd.f32 0.0, %v494
  %496 = vmatmul.f32.gmra.mxu0 %v454
  %v497 = vpop.f32.mrf.mxu0
  %v498 = vadd.f32 0.0, %v497
  %499 = vmatmul.f32.gmra.mxu0 %v457
  %v500 = vpop.f32.mrf.mxu0
  %v501 = vadd.f32 0.0, %v500
  %502 = vmatmul.f32.gmra.mxu0 %v460
  %v503 = vpop.f32.mrf.mxu0
  %v504 = vadd.f32 0.0, %v503
  %505 = vdwg.mxu0
  %v506 = vadd.f32 %v335, %v483
  %v507 = vadd.f32 %v338, %v486
  %v508 = vadd.f32 %v341, %v489
  %v509 = vadd.f32 %v344, %v492
  %v510 = vadd.f32 %v347, %v495
  %v511 = vadd.f32 %v350, %v498
  %v512 = vadd.f32 %v353, %v501
  %v513 = vadd.f32 %v356, %v504
  %v514 = vld [vmem:[%s3] sm:$0x1]
  %v516 = vperm.slane %v514, 0
  %v518 = vadd.f32 %v506, %v516
  %v519 = vadd.f32 %v507, %v516
  %v520 = vadd.f32 %v508, %v516
  %v521 = vadd.f32 %v509, %v516
  %v522 = vadd.f32 %v510, %v516
  %v523 = vadd.f32 %v511, %v516
  %v524 = vadd.f32 %v512, %v516
  %v525 = vadd.f32 %v513, %v516
  %v526 = vmax.f32 %v518, 0.0
  %v527 = vmax.f32 %v519, 0.0
  %v528 = vmax.f32 %v520, 0.0
  %v529 = vmax.f32 %v521, 0.0
  %v530 = vmax.f32 %v522, 0.0
  %v531 = vmax.f32 %v523, 0.0
  %v532 = vmax.f32 %v524, 0.0
  %v533 = vmax.f32 %v525, 0.0
  %v534 = vld [vmem:[%s4] sm:$0xff]
  %v535 = vld [vmem:[%s4 + $0x8] sm:$0xff]
  %v536 = vld [vmem:[%s4 + $0x10] sm:$0xff]
  %v537 = vld [vmem:[%s4 + $0x18] sm:$0xff]
  %v539 = vsel %vm69, %v534, 0
  %v542 = vsel %vm69, %v535, 0
  %v545 = vsel %vm69, %v536, 0
  %v548 = vsel %vm69, %v537, 0
  %550 = vmatpush.msra.mxu0 0.0
  %551 = vmatpush.msra.mxu0 0.0
  %552 = vmatpush.msra.mxu0 0.0
  %553 = vmatpush.msra.mxu0 0.0
  %554 = vmatpush.msra.mxu0 0.0
  %555 = vmatpush.msra.mxu0 0.0
  %556 = vmatpush.msra.mxu0 0.0
  %557 = vmatpush.msra.mxu0 0.0
  %558 = vmatpush.msra.mxu0 %v533
  %559 = vmatpush.msra.mxu0 %v532
  %560 = vmatpush.msra.mxu0 %v531
  %561 = vmatpush.msra.mxu0 %v530
  %562 = vmatpush.msra.mxu0 %v529
  %563 = vmatpush.msra.mxu0 %v528
  %564 = vmatpush.msra.mxu0 %v527
  %565 = vmatpush.msra.mxu0 %v526
  %566 = vmatmul.f32.gmra.mxu0 %v539
  %v567 = vpop.f32.mrf.mxu0
  %v568 = vadd.f32 0.0, %v567
  %569 = vmatmul.f32.gmra.mxu0 %v542
  %v570 = vpop.f32.mrf.mxu0
  %v571 = vadd.f32 0.0, %v570
  %572 = vmatmul.f32.gmra.mxu0 %v545
  %v573 = vpop.f32.mrf.mxu0
  %v574 = vadd.f32 0.0, %v573
  %575 = vmatmul.f32.gmra.mxu0 %v548
  %v576 = vpop.f32.mrf.mxu0
  %v577 = vadd.f32 0.0, %v576
  %578 = vdwg.mxu0
  %v579 = vld [vmem:[%s5] sm:$0xff]
  %v580 = vld [vmem:[%s5 + $0x8] sm:$0xff]
  %v581 = vld [vmem:[%s5 + $0x10] sm:$0xff]
  %v582 = vld [vmem:[%s5 + $0x18] sm:$0xff]
  %v583 = vld [vmem:[%s5 + $0x20] sm:$0xff]
  %v584 = vld [vmem:[%s5 + $0x28] sm:$0xff]
  %v585 = vld [vmem:[%s5 + $0x30] sm:$0xff]
  %v586 = vld [vmem:[%s5 + $0x38] sm:$0xff]
  %v587 = vld [vmem:[%s5 + $0x40] sm:$0xff]
  %v588 = vld [vmem:[%s5 + $0x48] sm:$0xff]
  %v589 = vld [vmem:[%s5 + $0x50] sm:$0xff]
  %v590 = vld [vmem:[%s5 + $0x58] sm:$0xff]
  %v591 = vld [vmem:[%s5 + $0x60] sm:$0xff]
  %v592 = vld [vmem:[%s5 + $0x68] sm:$0xff]
  %v593 = vld [vmem:[%s5 + $0x70] sm:$0xff]
  %v594 = vld [vmem:[%s5 + $0x78] sm:$0xff]
  %v595 = vld [vmem:[%s5 + $0x80] sm:$0xff]
  %v596 = vld [vmem:[%s5 + $0x88] sm:$0xff]
  %s597 = scalar_lea.vmem %s4, 32
  %v598 = vld [vmem:[%s597] sm:$0xff]
  %v599 = vld [vmem:[%s597 + $0x8] sm:$0xff]
  %v600 = vld [vmem:[%s597 + $0x10] sm:$0xff]
  %v601 = vld [vmem:[%s597 + $0x18] sm:$0xff]
  %v603 = vsel %vm69, %v598, 0
  %v606 = vsel %vm69, %v599, 0
  %v609 = vsel %vm69, %v600, 0
  %v612 = vsel %vm69, %v601, 0
  %614 = vmatpush.msra.mxu0 0.0
  %615 = vmatpush.msra.mxu0 0.0
  %616 = vmatpush.msra.mxu0 0.0
  %617 = vmatpush.msra.mxu0 0.0
  %618 = vmatpush.msra.mxu0 0.0
  %619 = vmatpush.msra.mxu0 0.0
  %620 = vmatpush.msra.mxu0 0.0
  %621 = vmatpush.msra.mxu0 0.0
  %622 = vmatpush.msra.mxu0 %v533
  %623 = vmatpush.msra.mxu0 %v532
  %624 = vmatpush.msra.mxu0 %v531
  %625 = vmatpush.msra.mxu0 %v530
  %626 = vmatpush.msra.mxu0 %v529
  %627 = vmatpush.msra.mxu0 %v528
  %628 = vmatpush.msra.mxu0 %v527
  %629 = vmatpush.msra.mxu0 %v526
  %630 = vmatmul.f32.gmra.mxu0 %v603
  %v631 = vpop.f32.mrf.mxu0
  %v632 = vadd.f32 0.0, %v631
  %633 = vmatmul.f32.gmra.mxu0 %v606
  %v634 = vpop.f32.mrf.mxu0
  %v635 = vadd.f32 0.0, %v634
  %636 = vmatmul.f32.gmra.mxu0 %v609
  %v637 = vpop.f32.mrf.mxu0
  %v638 = vadd.f32 0.0, %v637
  %639 = vmatmul.f32.gmra.mxu0 %v612
  %v640 = vpop.f32.mrf.mxu0
  %v641 = vadd.f32 0.0, %v640
  %642 = vdwg.mxu0
  %s643 = scalar_lea.vmem %s5, 144
  %v644 = vld [vmem:[%s643] sm:$0xff]
  %v645 = vld [vmem:[%s643 + $0x8] sm:$0xff]
  %v646 = vld [vmem:[%s643 + $0x10] sm:$0xff]
  %v647 = vld [vmem:[%s643 + $0x18] sm:$0xff]
  %v648 = vld [vmem:[%s643 + $0x20] sm:$0xff]
  %v649 = vld [vmem:[%s643 + $0x28] sm:$0xff]
  %v650 = vld [vmem:[%s643 + $0x30] sm:$0xff]
  %v651 = vld [vmem:[%s643 + $0x38] sm:$0xff]
  %v652 = vld [vmem:[%s643 + $0x40] sm:$0xff]
  %v653 = vld [vmem:[%s643 + $0x48] sm:$0xff]
  %v654 = vld [vmem:[%s643 + $0x50] sm:$0xff]
  %v655 = vld [vmem:[%s643 + $0x58] sm:$0xff]
  %v656 = vld [vmem:[%s643 + $0x60] sm:$0xff]
  %v657 = vld [vmem:[%s643 + $0x68] sm:$0xff]
  %v658 = vld [vmem:[%s643 + $0x70] sm:$0xff]
  %v659 = vld [vmem:[%s643 + $0x78] sm:$0xff]
  %v660 = vld [vmem:[%s643 + $0x80] sm:$0xff]
  %v661 = vld [vmem:[%s643 + $0x88] sm:$0xff]
  %vm662 = vcmask 588800
  %v664 = vsel %vm662, %v632, 0
  %v667 = vsel %vm662, %v635, 0
  %v670 = vsel %vm662, %v638, 0
  %v673 = vsel %vm662, %v641, 0
  %675 = vmatpush.msra.mxu0 0.0
  %676 = vmatpush.msra.mxu0 0.0
  %677 = vmatpush.msra.mxu0 0.0
  %678 = vmatpush.msra.mxu0 0.0
  %679 = vmatpush.msra.mxu0 0.0
  %680 = vmatpush.msra.mxu0 0.0
  %681 = vmatpush.msra.mxu0 0.0
  %682 = vmatpush.msra.mxu0 %v660
  %683 = vmatpush.msra.mxu0 %v658
  %684 = vmatpush.msra.mxu0 %v656
  %685 = vmatpush.msra.mxu0 %v654
  %686 = vmatpush.msra.mxu0 %v652
  %687 = vmatpush.msra.mxu0 %v650
  %688 = vmatpush.msra.mxu0 %v648
  %689 = vmatpush.msra.mxu0 %v646
  %690 = vmatpush.msra.mxu0 %v644
  %691 = vmatmul.f32.gmra.mxu0 %v664
  %v692 = vpop.f32.mrf.mxu0
  %v693 = vadd.f32 0.0, %v692
  %694 = vmatmul.f32.gmra.mxu0 %v667
  %v695 = vpop.f32.mrf.mxu0
  %v696 = vadd.f32 0.0, %v695
  %697 = vmatmul.f32.gmra.mxu0 %v670
  %v698 = vpop.f32.mrf.mxu0
  %v699 = vadd.f32 0.0, %v698
  %700 = vmatmul.f32.gmra.mxu0 %v673
  %v701 = vpop.f32.mrf.mxu0
  %v702 = vadd.f32 0.0, %v701
  %703 = vdwg.mxu0
  %704 = vmatpush.msra.mxu0 0.0
  %705 = vmatpush.msra.mxu0 0.0
  %706 = vmatpush.msra.mxu0 0.0
  %707 = vmatpush.msra.mxu0 0.0
  %708 = vmatpush.msra.mxu0 0.0
  %709 = vmatpush.msra.mxu0 0.0
  %710 = vmatpush.msra.mxu0 0.0
  %711 = vmatpush.msra.mxu0 %v661
  %712 = vmatpush.msra.mxu0 %v659
  %713 = vmatpush.msra.mxu0 %v657
  %714 = vmatpush.msra.mxu0 %v655
  %715 = vmatpush.msra.mxu0 %v653
  %716 = vmatpush.msra.mxu0 %v651
  %717 = vmatpush.msra.mxu0 %v649
  %718 = vmatpush.msra.mxu0 %v647
  %719 = vmatpush.msra.mxu0 %v645
  %720 = vmatmul.f32.gmra.mxu0 %v664
  %v721 = vpop.f32.mrf.mxu0
  %v722 = vadd.f32 0.0, %v721
  %723 = vmatmul.f32.gmra.mxu0 %v667
  %v724 = vpop.f32.mrf.mxu0
  %v725 = vadd.f32 0.0, %v724
  %726 = vmatmul.f32.gmra.mxu0 %v670
  %v727 = vpop.f32.mrf.mxu0
  %v728 = vadd.f32 0.0, %v727
  %729 = vmatmul.f32.gmra.mxu0 %v673
  %v730 = vpop.f32.mrf.mxu0
  %v731 = vadd.f32 0.0, %v730
  %732 = vdwg.mxu0
  %v734 = vsel %vm662, %v568, 0
  %v737 = vsel %vm662, %v571, 0
  %v740 = vsel %vm662, %v574, 0
  %v743 = vsel %vm662, %v577, 0
  %745 = vmatpush.msra.mxu0 0.0
  %746 = vmatpush.msra.mxu0 0.0
  %747 = vmatpush.msra.mxu0 0.0
  %748 = vmatpush.msra.mxu0 0.0
  %749 = vmatpush.msra.mxu0 0.0
  %750 = vmatpush.msra.mxu0 0.0
  %751 = vmatpush.msra.mxu0 0.0
  %752 = vmatpush.msra.mxu0 %v595
  %753 = vmatpush.msra.mxu0 %v593
  %754 = vmatpush.msra.mxu0 %v591
  %755 = vmatpush.msra.mxu0 %v589
  %756 = vmatpush.msra.mxu0 %v587
  %757 = vmatpush.msra.mxu0 %v585
  %758 = vmatpush.msra.mxu0 %v583
  %759 = vmatpush.msra.mxu0 %v581
  %760 = vmatpush.msra.mxu0 %v579
  %761 = vmatmul.f32.gmra.mxu0 %v734
  %v762 = vpop.f32.mrf.mxu0
  %v763 = vadd.f32 %v693, %v762
  %764 = vmatmul.f32.gmra.mxu0 %v737
  %v765 = vpop.f32.mrf.mxu0
  %v766 = vadd.f32 %v696, %v765
  %767 = vmatmul.f32.gmra.mxu0 %v740
  %v768 = vpop.f32.mrf.mxu0
  %v769 = vadd.f32 %v699, %v768
  %770 = vmatmul.f32.gmra.mxu0 %v743
  %v771 = vpop.f32.mrf.mxu0
  %v772 = vadd.f32 %v702, %v771
  %773 = vdwg.mxu0
  %774 = vmatpush.msra.mxu0 0.0
  %775 = vmatpush.msra.mxu0 0.0
  %776 = vmatpush.msra.mxu0 0.0
  %777 = vmatpush.msra.mxu0 0.0
  %778 = vmatpush.msra.mxu0 0.0
  %779 = vmatpush.msra.mxu0 0.0
  %780 = vmatpush.msra.mxu0 0.0
  %781 = vmatpush.msra.mxu0 %v596
  %782 = vmatpush.msra.mxu0 %v594
  %783 = vmatpush.msra.mxu0 %v592
  %784 = vmatpush.msra.mxu0 %v590
  %785 = vmatpush.msra.mxu0 %v588
  %786 = vmatpush.msra.mxu0 %v586
  %787 = vmatpush.msra.mxu0 %v584
  %788 = vmatpush.msra.mxu0 %v582
  %789 = vmatpush.msra.mxu0 %v580
  %790 = vmatmul.f32.gmra.mxu0 %v734
  %v791 = vpop.f32.mrf.mxu0
  %v792 = vadd.f32 %v722, %v791
  %793 = vmatmul.f32.gmra.mxu0 %v737
  %v794 = vpop.f32.mrf.mxu0
  %v795 = vadd.f32 %v725, %v794
  %796 = vmatmul.f32.gmra.mxu0 %v740
  %v797 = vpop.f32.mrf.mxu0
  %v798 = vadd.f32 %v728, %v797
  %799 = vmatmul.f32.gmra.mxu0 %v743
  %v800 = vpop.f32.mrf.mxu0
  %v801 = vadd.f32 %v731, %v800
  %802 = vdwg.mxu0
  %s803 = scalar_lea.vmem %s4, 64
  %v804 = vld [vmem:[%s803] sm:$0xff]
  %v805 = vld [vmem:[%s803 + $0x8] sm:$0xff]
  %v806 = vld [vmem:[%s803 + $0x10] sm:$0xff]
  %v807 = vld [vmem:[%s803 + $0x18] sm:$0xff]
  %v809 = vsel %vm69, %v804, 0
  %v812 = vsel %vm69, %v805, 0
  %v815 = vsel %vm69, %v806, 0
  %v818 = vsel %vm69, %v807, 0
  %820 = vmatpush.msra.mxu0 0.0
  %821 = vmatpush.msra.mxu0 0.0
  %822 = vmatpush.msra.mxu0 0.0
  %823 = vmatpush.msra.mxu0 0.0
  %824 = vmatpush.msra.mxu0 0.0
  %825 = vmatpush.msra.mxu0 0.0
  %826 = vmatpush.msra.mxu0 0.0
  %827 = vmatpush.msra.mxu0 0.0
  %828 = vmatpush.msra.mxu0 %v533
  %829 = vmatpush.msra.mxu0 %v532
  %830 = vmatpush.msra.mxu0 %v531
  %831 = vmatpush.msra.mxu0 %v530
  %832 = vmatpush.msra.mxu0 %v529
  %833 = vmatpush.msra.mxu0 %v528
  %834 = vmatpush.msra.mxu0 %v527
  %835 = vmatpush.msra.mxu0 %v526
  %836 = vmatmul.f32.gmra.mxu0 %v809
  %v837 = vpop.f32.mrf.mxu0
  %v838 = vadd.f32 0.0, %v837
  %839 = vmatmul.f32.gmra.mxu0 %v812
  %v840 = vpop.f32.mrf.mxu0
  %v841 = vadd.f32 0.0, %v840
  %842 = vmatmul.f32.gmra.mxu0 %v815
  %v843 = vpop.f32.mrf.mxu0
  %v844 = vadd.f32 0.0, %v843
  %845 = vmatmul.f32.gmra.mxu0 %v818
  %v846 = vpop.f32.mrf.mxu0
  %v847 = vadd.f32 0.0, %v846
  %848 = vdwg.mxu0
  %s849 = scalar_lea.vmem %s5, 288
  %v850 = vld [vmem:[%s849] sm:$0xff]
  %v851 = vld [vmem:[%s849 + $0x8] sm:$0xff]
  %v852 = vld [vmem:[%s849 + $0x10] sm:$0xff]
  %v853 = vld [vmem:[%s849 + $0x18] sm:$0xff]
  %v854 = vld [vmem:[%s849 + $0x20] sm:$0xff]
  %v855 = vld [vmem:[%s849 + $0x28] sm:$0xff]
  %v856 = vld [vmem:[%s849 + $0x30] sm:$0xff]
  %v857 = vld [vmem:[%s849 + $0x38] sm:$0xff]
  %v858 = vld [vmem:[%s849 + $0x40] sm:$0xff]
  %v859 = vld [vmem:[%s849 + $0x48] sm:$0xff]
  %v860 = vld [vmem:[%s849 + $0x50] sm:$0xff]
  %v861 = vld [vmem:[%s849 + $0x58] sm:$0xff]
  %v862 = vld [vmem:[%s849 + $0x60] sm:$0xff]
  %v863 = vld [vmem:[%s849 + $0x68] sm:$0xff]
  %v864 = vld [vmem:[%s849 + $0x70] sm:$0xff]
  %v865 = vld [vmem:[%s849 + $0x78] sm:$0xff]
  %v866 = vld [vmem:[%s849 + $0x80] sm:$0xff]
  %v867 = vld [vmem:[%s849 + $0x88] sm:$0xff]
  %v869 = vsel %vm662, %v838, 0
  %v872 = vsel %vm662, %v841, 0
  %v875 = vsel %vm662, %v844, 0
  %v878 = vsel %vm662, %v847, 0
  %880 = vmatpush.msra.mxu0 0.0
  %881 = vmatpush.msra.mxu0 0.0
  %882 = vmatpush.msra.mxu0 0.0
  %883 = vmatpush.msra.mxu0 0.0
  %884 = vmatpush.msra.mxu0 0.0
  %885 = vmatpush.msra.mxu0 0.0
  %886 = vmatpush.msra.mxu0 0.0
  %887 = vmatpush.msra.mxu0 %v866
  %888 = vmatpush.msra.mxu0 %v864
  %889 = vmatpush.msra.mxu0 %v862
  %890 = vmatpush.msra.mxu0 %v860
  %891 = vmatpush.msra.mxu0 %v858
  %892 = vmatpush.msra.mxu0 %v856
  %893 = vmatpush.msra.mxu0 %v854
  %894 = vmatpush.msra.mxu0 %v852
  %895 = vmatpush.msra.mxu0 %v850
  %896 = vmatmul.f32.gmra.mxu0 %v869
  %v897 = vpop.f32.mrf.mxu0
  %v898 = vadd.f32 0.0, %v897
  %899 = vmatmul.f32.gmra.mxu0 %v872
  %v900 = vpop.f32.mrf.mxu0
  %v901 = vadd.f32 0.0, %v900
  %902 = vmatmul.f32.gmra.mxu0 %v875
  %v903 = vpop.f32.mrf.mxu0
  %v904 = vadd.f32 0.0, %v903
  %905 = vmatmul.f32.gmra.mxu0 %v878
  %v906 = vpop.f32.mrf.mxu0
  %v907 = vadd.f32 0.0, %v906
  %908 = vdwg.mxu0
  %909 = vmatpush.msra.mxu0 0.0
  %910 = vmatpush.msra.mxu0 0.0
  %911 = vmatpush.msra.mxu0 0.0
  %912 = vmatpush.msra.mxu0 0.0
  %913 = vmatpush.msra.mxu0 0.0
  %914 = vmatpush.msra.mxu0 0.0
  %915 = vmatpush.msra.mxu0 0.0
  %916 = vmatpush.msra.mxu0 %v867
  %917 = vmatpush.msra.mxu0 %v865
  %918 = vmatpush.msra.mxu0 %v863
  %919 = vmatpush.msra.mxu0 %v861
  %920 = vmatpush.msra.mxu0 %v859
  %921 = vmatpush.msra.mxu0 %v857
  %922 = vmatpush.msra.mxu0 %v855
  %923 = vmatpush.msra.mxu0 %v853
  %924 = vmatpush.msra.mxu0 %v851
  %925 = vmatmul.f32.gmra.mxu0 %v869
  %v926 = vpop.f32.mrf.mxu0
  %v927 = vadd.f32 0.0, %v926
  %928 = vmatmul.f32.gmra.mxu0 %v872
  %v929 = vpop.f32.mrf.mxu0
  %v930 = vadd.f32 0.0, %v929
  %931 = vmatmul.f32.gmra.mxu0 %v875
  %v932 = vpop.f32.mrf.mxu0
  %v933 = vadd.f32 0.0, %v932
  %934 = vmatmul.f32.gmra.mxu0 %v878
  %v935 = vpop.f32.mrf.mxu0
  %v936 = vadd.f32 0.0, %v935
  %937 = vdwg.mxu0
  %v938 = vadd.f32 %v763, %v898
  %v939 = vadd.f32 %v792, %v927
  %v940 = vadd.f32 %v766, %v901
  %v941 = vadd.f32 %v795, %v930
  %v942 = vadd.f32 %v769, %v904
  %v943 = vadd.f32 %v798, %v933
  %v944 = vadd.f32 %v772, %v907
  %v945 = vadd.f32 %v801, %v936
  %v946 = vld [vmem:[%s6] sm:$0x3]
  %v948 = vperm.slane %v946, 0
  %v949 = vperm.slane %v946, 1
  %v952 = vadd.f32 %v938, %v948
  %v953 = vadd.f32 %v939, %v949
  %v954 = vadd.f32 %v940, %v948
  %v955 = vadd.f32 %v941, %v949
  %v956 = vadd.f32 %v942, %v948
  %v957 = vadd.f32 %v943, %v949
  %v958 = vadd.f32 %v944, %v948
  %v959 = vadd.f32 %v945, %v949
  %v960 = vmax.f32 %v952, 0.0
  %v961 = vmax.f32 %v953, 0.0
  %v962 = vmax.f32 %v954, 0.0
  %v963 = vmax.f32 %v955, 0.0
  %v964 = vmax.f32 %v956, 0.0
  %v965 = vmax.f32 %v957, 0.0
  %v966 = vmax.f32 %v958, 0.0
  %v967 = vmax.f32 %v959, 0.0
  %v968 = vld [vmem:[%s7] sm:$0xff]
  %v969 = vld [vmem:[%s7 + $0x8] sm:$0xff]
  %v970 = vld [vmem:[%s7 + $0x10] sm:$0xff]
  %v971 = vld [vmem:[%s7 + $0x18] sm:$0xff]
  %vm972 = vcmask 261120
  %v974 = vsel %vm972, %v968, 0
  %v977 = vsel %vm972, %v969, 0
  %v980 = vsel %vm972, %v970, 0
  %v983 = vsel %vm972, %v971, 0
  %985 = vmatpush.msra.mxu0 0.0
  %986 = vmatpush.msra.mxu0 0.0
  %987 = vmatpush.msra.mxu0 0.0
  %988 = vmatpush.msra.mxu0 0.0
  %989 = vmatpush.msra.mxu0 0.0
  %990 = vmatpush.msra.mxu0 0.0
  %991 = vmatpush.msra.mxu0 0.0
  %992 = vmatpush.msra.mxu0 0.0
  %993 = vmatpush.msra.mxu0 0.0
  %994 = vmatpush.msra.mxu0 0.0
  %995 = vmatpush.msra.mxu0 0.0
  %996 = vmatpush.msra.mxu0 0.0
  %997 = vmatpush.msra.mxu0 %v966
  %998 = vmatpush.msra.mxu0 %v964
  %999 = vmatpush.msra.mxu0 %v962
  %1000 = vmatpush.msra.mxu0 %v960
  %1001 = vmatmul.f32.gmra.mxu0 %v974
  %v1002 = vpop.f32.mrf.mxu0
  %v1003 = vadd.f32 0.0, %v1002
  %1004 = vmatmul.f32.gmra.mxu0 %v977
  %v1005 = vpop.f32.mrf.mxu0
  %v1006 = vadd.f32 0.0, %v1005
  %1007 = vmatmul.f32.gmra.mxu0 %v980
  %v1008 = vpop.f32.mrf.mxu0
  %v1009 = vadd.f32 0.0, %v1008
  %1010 = vmatmul.f32.gmra.mxu0 %v983
  %v1011 = vpop.f32.mrf.mxu0
  %v1012 = vadd.f32 0.0, %v1011
  %1013 = vdwg.mxu0
  %1014 = vmatpush.msra.mxu0 0.0
  %1015 = vmatpush.msra.mxu0 0.0
  %1016 = vmatpush.msra.mxu0 0.0
  %1017 = vmatpush.msra.mxu0 0.0
  %1018 = vmatpush.msra.mxu0 0.0
  %1019 = vmatpush.msra.mxu0 0.0
  %1020 = vmatpush.msra.mxu0 0.0
  %1021 = vmatpush.msra.mxu0 0.0
  %1022 = vmatpush.msra.mxu0 0.0
  %1023 = vmatpush.msra.mxu0 0.0
  %1024 = vmatpush.msra.mxu0 0.0
  %1025 = vmatpush.msra.mxu0 0.0
  %1026 = vmatpush.msra.mxu0 %v967
  %1027 = vmatpush.msra.mxu0 %v965
  %1028 = vmatpush.msra.mxu0 %v963
  %1029 = vmatpush.msra.mxu0 %v961
  %1030 = vmatmul.f32.gmra.mxu0 %v974
  %v1031 = vpop.f32.mrf.mxu0
  %v1032 = vadd.f32 0.0, %v1031
  %1033 = vmatmul.f32.gmra.mxu0 %v977
  %v1034 = vpop.f32.mrf.mxu0
  %v1035 = vadd.f32 0.0, %v1034
  %1036 = vmatmul.f32.gmra.mxu0 %v980
  %v1037 = vpop.f32.mrf.mxu0
  %v1038 = vadd.f32 0.0, %v1037
  %1039 = vmatmul.f32.gmra.mxu0 %v983
  %v1040 = vpop.f32.mrf.mxu0
  %v1041 = vadd.f32 0.0, %v1040
  %1042 = vdwg.mxu0
  %v1043 = vld [vmem:[%s8] sm:$0xff]
  %v1044 = vld [vmem:[%s8 + $0x8] sm:$0xff]
  %v1045 = vld [vmem:[%s8 + $0x10] sm:$0xff]
  %v1046 = vld [vmem:[%s8 + $0x18] sm:$0xff]
  %v1047 = vld [vmem:[%s8 + $0x20] sm:$0xff]
  %v1048 = vld [vmem:[%s8 + $0x28] sm:$0xff]
  %v1049 = vld [vmem:[%s8 + $0x30] sm:$0xff]
  %v1050 = vld [vmem:[%s8 + $0x38] sm:$0xff]
  %v1051 = vld [vmem:[%s8 + $0x40] sm:$0xff]
  %v1052 = vld [vmem:[%s8 + $0x48] sm:$0xff]
  %v1053 = vld [vmem:[%s8 + $0x50] sm:$0xff]
  %v1054 = vld [vmem:[%s8 + $0x58] sm:$0xff]
  %v1055 = vld [vmem:[%s8 + $0x60] sm:$0xff]
  %v1056 = vld [vmem:[%s8 + $0x68] sm:$0xff]
  %v1057 = vld [vmem:[%s8 + $0x70] sm:$0xff]
  %v1058 = vld [vmem:[%s8 + $0x78] sm:$0xff]
  %v1059 = vld [vmem:[%s8 + $0x80] sm:$0xff]
  %v1060 = vld [vmem:[%s8 + $0x88] sm:$0xff]
  %v1061 = vld [vmem:[%s8 + $0x90] sm:$0xff]
  %v1062 = vld [vmem:[%s8 + $0x98] sm:$0xff]
  %v1063 = vld [vmem:[%s8 + $0xa0] sm:$0xff]
  %v1064 = vld [vmem:[%s8 + $0xa8] sm:$0xff]
  %v1065 = vld [vmem:[%s8 + $0xb0] sm:$0xff]
  %v1066 = vld [vmem:[%s8 + $0xb8] sm:$0xff]
  %v1067 = vld [vmem:[%s8 + $0xc0] sm:$0xff]
  %v1068 = vld [vmem:[%s8 + $0xc8] sm:$0xff]
  %v1069 = vld [vmem:[%s8 + $0xd0] sm:$0xff]
  %v1070 = vld [vmem:[%s8 + $0xd8] sm:$0xff]
  %v1071 = vld [vmem:[%s8 + $0xe0] sm:$0xff]
  %v1072 = vld [vmem:[%s8 + $0xe8] sm:$0xff]
  %v1073 = vld [vmem:[%s8 + $0xf0] sm:$0xff]
  %v1074 = vld [vmem:[%s8 + $0xf8] sm:$0xff]
  %v1075 = vld [vmem:[%s8 + $0x100] sm:$0xff]
  %v1076 = vld [vmem:[%s8 + $0x108] sm:$0xff]
  %v1077 = vld [vmem:[%s8 + $0x110] sm:$0xff]
  %v1078 = vld [vmem:[%s8 + $0x118] sm:$0xff]
  %v1079 = vld [vmem:[%s8 + $0x120] sm:$0xff]
  %v1080 = vld [vmem:[%s8 + $0x128] sm:$0xff]
  %v1081 = vld [vmem:[%s8 + $0x130] sm:$0xff]
  %v1082 = vld [vmem:[%s8 + $0x138] sm:$0xff]
  %v1083 = vld [vmem:[%s8 + $0x140] sm:$0xff]
  %v1084 = vld [vmem:[%s8 + $0x148] sm:$0xff]
  %v1085 = vld [vmem:[%s8 + $0x150] sm:$0xff]
  %v1086 = vld [vmem:[%s8 + $0x158] sm:$0xff]
  %v1087 = vld [vmem:[%s8 + $0x160] sm:$0xff]
  %v1088 = vld [vmem:[%s8 + $0x168] sm:$0xff]
  %v1089 = vld [vmem:[%s8 + $0x170] sm:$0xff]
  %v1090 = vld [vmem:[%s8 + $0x178] sm:$0xff]
  %v1091 = vld [vmem:[%s8 + $0x180] sm:$0xff]
  %v1092 = vld [vmem:[%s8 + $0x188] sm:$0xff]
  %v1093 = vld [vmem:[%s8 + $0x190] sm:$0xff]
  %v1094 = vld [vmem:[%s8 + $0x198] sm:$0xff]
  %v1095 = vld [vmem:[%s8 + $0x1a0] sm:$0xff]
  %v1096 = vld [vmem:[%s8 + $0x1a8] sm:$0xff]
  %s1097 = scalar_lea.vmem %s7, 32
  %v1098 = vld [vmem:[%s1097] sm:$0xff]
  %v1099 = vld [vmem:[%s1097 + $0x8] sm:$0xff]
  %v1100 = vld [vmem:[%s1097 + $0x10] sm:$0xff]
  %v1101 = vld [vmem:[%s1097 + $0x18] sm:$0xff]
  %v1103 = vsel %vm972, %v1098, 0
  %v1106 = vsel %vm972, %v1099, 0
  %v1109 = vsel %vm972, %v1100, 0
  %v1112 = vsel %vm972, %v1101, 0
  %1114 = vmatpush.msra.mxu0 0.0
  %1115 = vmatpush.msra.mxu0 0.0
  %1116 = vmatpush.msra.mxu0 0.0
  %1117 = vmatpush.msra.mxu0 0.0
  %1118 = vmatpush.msra.mxu0 0.0
  %1119 = vmatpush.msra.mxu0 0.0
  %1120 = vmatpush.msra.mxu0 0.0
  %1121 = vmatpush.msra.mxu0 0.0
  %1122 = vmatpush.msra.mxu0 0.0
  %1123 = vmatpush.msra.mxu0 0.0
  %1124 = vmatpush.msra.mxu0 0.0
  %1125 = vmatpush.msra.mxu0 0.0
  %1126 = vmatpush.msra.mxu0 %v966
  %1127 = vmatpush.msra.mxu0 %v964
  %1128 = vmatpush.msra.mxu0 %v962
  %1129 = vmatpush.msra.mxu0 %v960
  %1130 = vmatmul.f32.gmra.mxu0 %v1103
  %v1131 = vpop.f32.mrf.mxu0
  %v1132 = vadd.f32 0.0, %v1131
  %1133 = vmatmul.f32.gmra.mxu0 %v1106
  %v1134 = vpop.f32.mrf.mxu0
  %v1135 = vadd.f32 0.0, %v1134
  %1136 = vmatmul.f32.gmra.mxu0 %v1109
  %v1137 = vpop.f32.mrf.mxu0
  %v1138 = vadd.f32 0.0, %v1137
  %1139 = vmatmul.f32.gmra.mxu0 %v1112
  %v1140 = vpop.f32.mrf.mxu0
  %v1141 = vadd.f32 0.0, %v1140
  %1142 = vdwg.mxu0
  %1143 = vmatpush.msra.mxu0 0.0
  %1144 = vmatpush.msra.mxu0 0.0
  %1145 = vmatpush.msra.mxu0 0.0
  %1146 = vmatpush.msra.mxu0 0.0
  %1147 = vmatpush.msra.mxu0 0.0
  %1148 = vmatpush.msra.mxu0 0.0
  %1149 = vmatpush.msra.mxu0 0.0
  %1150 = vmatpush.msra.mxu0 0.0
  %1151 = vmatpush.msra.mxu0 0.0
  %1152 = vmatpush.msra.mxu0 0.0
  %1153 = vmatpush.msra.mxu0 0.0
  %1154 = vmatpush.msra.mxu0 0.0
  %1155 = vmatpush.msra.mxu0 %v967
  %1156 = vmatpush.msra.mxu0 %v965
  %1157 = vmatpush.msra.mxu0 %v963
  %1158 = vmatpush.msra.mxu0 %v961
  %1159 = vmatmul.f32.gmra.mxu0 %v1103
  %v1160 = vpop.f32.mrf.mxu0
  %v1161 = vadd.f32 0.0, %v1160
  %1162 = vmatmul.f32.gmra.mxu0 %v1106
  %v1163 = vpop.f32.mrf.mxu0
  %v1164 = vadd.f32 0.0, %v1163
  %1165 = vmatmul.f32.gmra.mxu0 %v1109
  %v1166 = vpop.f32.mrf.mxu0
  %v1167 = vadd.f32 0.0, %v1166
  %1168 = vmatmul.f32.gmra.mxu0 %v1112
  %v1169 = vpop.f32.mrf.mxu0
  %v1170 = vadd.f32 0.0, %v1169
  %1171 = vdwg.mxu0
  %s1172 = scalar_lea.vmem %s8, 432
  %v1173 = vld [vmem:[%s1172] sm:$0xff]
  %v1174 = vld [vmem:[%s1172 + $0x8] sm:$0xff]
  %v1175 = vld [vmem:[%s1172 + $0x10] sm:$0xff]
  %v1176 = vld [vmem:[%s1172 + $0x18] sm:$0xff]
  %v1177 = vld [vmem:[%s1172 + $0x20] sm:$0xff]
  %v1178 = vld [vmem:[%s1172 + $0x28] sm:$0xff]
  %v1179 = vld [vmem:[%s1172 + $0x30] sm:$0xff]
  %v1180 = vld [vmem:[%s1172 + $0x38] sm:$0xff]
  %v1181 = vld [vmem:[%s1172 + $0x40] sm:$0xff]
  %v1182 = vld [vmem:[%s1172 + $0x48] sm:$0xff]
  %v1183 = vld [vmem:[%s1172 + $0x50] sm:$0xff]
  %v1184 = vld [vmem:[%s1172 + $0x58] sm:$0xff]
  %v1185 = vld [vmem:[%s1172 + $0x60] sm:$0xff]
  %v1186 = vld [vmem:[%s1172 + $0x68] sm:$0xff]
  %v1187 = vld [vmem:[%s1172 + $0x70] sm:$0xff]
  %v1188 = vld [vmem:[%s1172 + $0x78] sm:$0xff]
  %v1189 = vld [vmem:[%s1172 + $0x80] sm:$0xff]
  %v1190 = vld [vmem:[%s1172 + $0x88] sm:$0xff]
  %v1191 = vld [vmem:[%s1172 + $0x90] sm:$0xff]
  %v1192 = vld [vmem:[%s1172 + $0x98] sm:$0xff]
  %v1193 = vld [vmem:[%s1172 + $0xa0] sm:$0xff]
  %v1194 = vld [vmem:[%s1172 + $0xa8] sm:$0xff]
  %v1195 = vld [vmem:[%s1172 + $0xb0] sm:$0xff]
  %v1196 = vld [vmem:[%s1172 + $0xb8] sm:$0xff]
  %v1197 = vld [vmem:[%s1172 + $0xc0] sm:$0xff]
  %v1198 = vld [vmem:[%s1172 + $0xc8] sm:$0xff]
  %v1199 = vld [vmem:[%s1172 + $0xd0] sm:$0xff]
  %v1200 = vld [vmem:[%s1172 + $0xd8] sm:$0xff]
  %v1201 = vld [vmem:[%s1172 + $0xe0] sm:$0xff]
  %v1202 = vld [vmem:[%s1172 + $0xe8] sm:$0xff]
  %v1203 = vld [vmem:[%s1172 + $0xf0] sm:$0xff]
  %v1204 = vld [vmem:[%s1172 + $0xf8] sm:$0xff]
  %v1205 = vld [vmem:[%s1172 + $0x100] sm:$0xff]
  %v1206 = vld [vmem:[%s1172 + $0x108] sm:$0xff]
  %v1207 = vld [vmem:[%s1172 + $0x110] sm:$0xff]
  %v1208 = vld [vmem:[%s1172 + $0x118] sm:$0xff]
  %v1209 = vld [vmem:[%s1172 + $0x120] sm:$0xff]
  %v1210 = vld [vmem:[%s1172 + $0x128] sm:$0xff]
  %v1211 = vld [vmem:[%s1172 + $0x130] sm:$0xff]
  %v1212 = vld [vmem:[%s1172 + $0x138] sm:$0xff]
  %v1213 = vld [vmem:[%s1172 + $0x140] sm:$0xff]
  %v1214 = vld [vmem:[%s1172 + $0x148] sm:$0xff]
  %v1215 = vld [vmem:[%s1172 + $0x150] sm:$0xff]
  %v1216 = vld [vmem:[%s1172 + $0x158] sm:$0xff]
  %v1217 = vld [vmem:[%s1172 + $0x160] sm:$0xff]
  %v1218 = vld [vmem:[%s1172 + $0x168] sm:$0xff]
  %v1219 = vld [vmem:[%s1172 + $0x170] sm:$0xff]
  %v1220 = vld [vmem:[%s1172 + $0x178] sm:$0xff]
  %v1221 = vld [vmem:[%s1172 + $0x180] sm:$0xff]
  %v1222 = vld [vmem:[%s1172 + $0x188] sm:$0xff]
  %v1223 = vld [vmem:[%s1172 + $0x190] sm:$0xff]
  %v1224 = vld [vmem:[%s1172 + $0x198] sm:$0xff]
  %v1225 = vld [vmem:[%s1172 + $0x1a0] sm:$0xff]
  %v1226 = vld [vmem:[%s1172 + $0x1a8] sm:$0xff]
  %vm1227 = vcmask 130048
  %v1229 = vsel %vm1227, %v1161, 0
  %v1232 = vsel %vm1227, %v1164, 0
  %v1235 = vsel %vm1227, %v1167, 0
  %v1238 = vsel %vm1227, %v1170, 0
  %1240 = vmatpush.msra.mxu0 %v1218
  %1241 = vmatpush.msra.mxu0 %v1215
  %1242 = vmatpush.msra.mxu0 %v1212
  %1243 = vmatpush.msra.mxu0 %v1209
  %1244 = vmatpush.msra.mxu0 %v1206
  %1245 = vmatpush.msra.mxu0 %v1203
  %1246 = vmatpush.msra.mxu0 %v1200
  %1247 = vmatpush.msra.mxu0 %v1197
  %1248 = vmatpush.msra.mxu0 %v1194
  %1249 = vmatpush.msra.mxu0 %v1191
  %1250 = vmatpush.msra.mxu0 %v1188
  %1251 = vmatpush.msra.mxu0 %v1185
  %1252 = vmatpush.msra.mxu0 %v1182
  %1253 = vmatpush.msra.mxu0 %v1179
  %1254 = vmatpush.msra.mxu0 %v1176
  %1255 = vmatpush.msra.mxu0 %v1173
  %1256 = vmatmul.f32.gmra.mxu0 %v1132
  %v1257 = vpop.f32.mrf.mxu0
  %v1258 = vadd.f32 0.0, %v1257
  %1259 = vmatmul.f32.gmra.mxu0 %v1135
  %v1260 = vpop.f32.mrf.mxu0
  %v1261 = vadd.f32 0.0, %v1260
  %1262 = vmatmul.f32.gmra.mxu0 %v1138
  %v1263 = vpop.f32.mrf.mxu0
  %v1264 = vadd.f32 0.0, %v1263
  %1265 = vmatmul.f32.gmra.mxu0 %v1141
  %v1266 = vpop.f32.mrf.mxu0
  %v1267 = vadd.f32 0.0, %v1266
  %1268 = vdwg.mxu0
  %1269 = vmatpush.msra.mxu0 0.0
  %1270 = vmatpush.msra.mxu0 0.0
  %1271 = vmatpush.msra.mxu0 0.0
  %1272 = vmatpush.msra.mxu0 0.0
  %1273 = vmatpush.msra.mxu0 0.0
  %1274 = vmatpush.msra.mxu0 0.0
  %1275 = vmatpush.msra.mxu0 0.0
  %1276 = vmatpush.msra.mxu0 0.0
  %1277 = vmatpush.msra.mxu0 0.0
  %1278 = vmatpush.msra.mxu0 0.0
  %1279 = vmatpush.msra.mxu0 0.0
  %1280 = vmatpush.msra.mxu0 0.0
  %1281 = vmatpush.msra.mxu0 0.0
  %1282 = vmatpush.msra.mxu0 0.0
  %1283 = vmatpush.msra.mxu0 %v1224
  %1284 = vmatpush.msra.mxu0 %v1221
  %1285 = vmatmul.f32.gmra.mxu0 %v1229
  %v1286 = vpop.f32.mrf.mxu0
  %v1287 = vadd.f32 %v1258, %v1286
  %1288 = vmatmul.f32.gmra.mxu0 %v1232
  %v1289 = vpop.f32.mrf.mxu0
  %v1290 = vadd.f32 %v1261, %v1289
  %1291 = vmatmul.f32.gmra.mxu0 %v1235
  %v1292 = vpop.f32.mrf.mxu0
  %v1293 = vadd.f32 %v1264, %v1292
  %1294 = vmatmul.f32.gmra.mxu0 %v1238
  %v1295 = vpop.f32.mrf.mxu0
  %v1296 = vadd.f32 %v1267, %v1295
  %1297 = vdwg.mxu0
  %1298 = vmatpush.msra.mxu0 %v1219
  %1299 = vmatpush.msra.mxu0 %v1216
  %1300 = vmatpush.msra.mxu0 %v1213
  %1301 = vmatpush.msra.mxu0 %v1210
  %1302 = vmatpush.msra.mxu0 %v1207
  %1303 = vmatpush.msra.mxu0 %v1204
  %1304 = vmatpush.msra.mxu0 %v1201
  %1305 = vmatpush.msra.mxu0 %v1198
  %1306 = vmatpush.msra.mxu0 %v1195
  %1307 = vmatpush.msra.mxu0 %v1192
  %1308 = vmatpush.msra.mxu0 %v1189
  %1309 = vmatpush.msra.mxu0 %v1186
  %1310 = vmatpush.msra.mxu0 %v1183
  %1311 = vmatpush.msra.mxu0 %v1180
  %1312 = vmatpush.msra.mxu0 %v1177
  %1313 = vmatpush.msra.mxu0 %v1174
  %1314 = vmatmul.f32.gmra.mxu0 %v1132
  %v1315 = vpop.f32.mrf.mxu0
  %v1316 = vadd.f32 0.0, %v1315
  %1317 = vmatmul.f32.gmra.mxu0 %v1135
  %v1318 = vpop.f32.mrf.mxu0
  %v1319 = vadd.f32 0.0, %v1318
  %1320 = vmatmul.f32.gmra.mxu0 %v1138
  %v1321 = vpop.f32.mrf.mxu0
  %v1322 = vadd.f32 0.0, %v1321
  %1323 = vmatmul.f32.gmra.mxu0 %v1141
  %v1324 = vpop.f32.mrf.mxu0
  %v1325 = vadd.f32 0.0, %v1324
  %1326 = vdwg.mxu0
  %1327 = vmatpush.msra.mxu0 0.0
  %1328 = vmatpush.msra.mxu0 0.0
  %1329 = vmatpush.msra.mxu0 0.0
  %1330 = vmatpush.msra.mxu0 0.0
  %1331 = vmatpush.msra.mxu0 0.0
  %1332 = vmatpush.msra.mxu0 0.0
  %1333 = vmatpush.msra.mxu0 0.0
  %1334 = vmatpush.msra.mxu0 0.0
  %1335 = vmatpush.msra.mxu0 0.0
  %1336 = vmatpush.msra.mxu0 0.0
  %1337 = vmatpush.msra.mxu0 0.0
  %1338 = vmatpush.msra.mxu0 0.0
  %1339 = vmatpush.msra.mxu0 0.0
  %1340 = vmatpush.msra.mxu0 0.0
  %1341 = vmatpush.msra.mxu0 %v1225
  %1342 = vmatpush.msra.mxu0 %v1222
  %1343 = vmatmul.f32.gmra.mxu0 %v1229
  %v1344 = vpop.f32.mrf.mxu0
  %v1345 = vadd.f32 %v1316, %v1344
  %1346 = vmatmul.f32.gmra.mxu0 %v1232
  %v1347 = vpop.f32.mrf.mxu0
  %v1348 = vadd.f32 %v1319, %v1347
  %1349 = vmatmul.f32.gmra.mxu0 %v1235
  %v1350 = vpop.f32.mrf.mxu0
  %v1351 = vadd.f32 %v1322, %v1350
  %1352 = vmatmul.f32.gmra.mxu0 %v1238
  %v1353 = vpop.f32.mrf.mxu0
  %v1354 = vadd.f32 %v1325, %v1353
  %1355 = vdwg.mxu0
  %1356 = vmatpush.msra.mxu0 %v1220
  %1357 = vmatpush.msra.mxu0 %v1217
  %1358 = vmatpush.msra.mxu0 %v1214
  %1359 = vmatpush.msra.mxu0 %v1211
  %1360 = vmatpush.msra.mxu0 %v1208
  %1361 = vmatpush.msra.mxu0 %v1205
  %1362 = vmatpush.msra.mxu0 %v1202
  %1363 = vmatpush.msra.mxu0 %v1199
  %1364 = vmatpush.msra.mxu0 %v1196
  %1365 = vmatpush.msra.mxu0 %v1193
  %1366 = vmatpush.msra.mxu0 %v1190
  %1367 = vmatpush.msra.mxu0 %v1187
  %1368 = vmatpush.msra.mxu0 %v1184
  %1369 = vmatpush.msra.mxu0 %v1181
  %1370 = vmatpush.msra.mxu0 %v1178
  %1371 = vmatpush.msra.mxu0 %v1175
  %1372 = vmatmul.f32.gmra.mxu0 %v1132
  %v1373 = vpop.f32.mrf.mxu0
  %v1374 = vadd.f32 0.0, %v1373
  %1375 = vmatmul.f32.gmra.mxu0 %v1135
  %v1376 = vpop.f32.mrf.mxu0
  %v1377 = vadd.f32 0.0, %v1376
  %1378 = vmatmul.f32.gmra.mxu0 %v1138
  %v1379 = vpop.f32.mrf.mxu0
  %v1380 = vadd.f32 0.0, %v1379
  %1381 = vmatmul.f32.gmra.mxu0 %v1141
  %v1382 = vpop.f32.mrf.mxu0
  %v1383 = vadd.f32 0.0, %v1382
  %1384 = vdwg.mxu0
  %1385 = vmatpush.msra.mxu0 0.0
  %1386 = vmatpush.msra.mxu0 0.0
  %1387 = vmatpush.msra.mxu0 0.0
  %1388 = vmatpush.msra.mxu0 0.0
  %1389 = vmatpush.msra.mxu0 0.0
  %1390 = vmatpush.msra.mxu0 0.0
  %1391 = vmatpush.msra.mxu0 0.0
  %1392 = vmatpush.msra.mxu0 0.0
  %1393 = vmatpush.msra.mxu0 0.0
  %1394 = vmatpush.msra.mxu0 0.0
  %1395 = vmatpush.msra.mxu0 0.0
  %1396 = vmatpush.msra.mxu0 0.0
  %1397 = vmatpush.msra.mxu0 0.0
  %1398 = vmatpush.msra.mxu0 0.0
  %1399 = vmatpush.msra.mxu0 %v1226
  %1400 = vmatpush.msra.mxu0 %v1223
  %1401 = vmatmul.f32.gmra.mxu0 %v1229
  %v1402 = vpop.f32.mrf.mxu0
  %v1403 = vadd.f32 %v1374, %v1402
  %1404 = vmatmul.f32.gmra.mxu0 %v1232
  %v1405 = vpop.f32.mrf.mxu0
  %v1406 = vadd.f32 %v1377, %v1405
  %1407 = vmatmul.f32.gmra.mxu0 %v1235
  %v1408 = vpop.f32.mrf.mxu0
  %v1409 = vadd.f32 %v1380, %v1408
  %1410 = vmatmul.f32.gmra.mxu0 %v1238
  %v1411 = vpop.f32.mrf.mxu0
  %v1412 = vadd.f32 %v1383, %v1411
  %1413 = vdwg.mxu0
  %v1415 = vsel %vm1227, %v1032, 0
  %v1418 = vsel %vm1227, %v1035, 0
  %v1421 = vsel %vm1227, %v1038, 0
  %v1424 = vsel %vm1227, %v1041, 0
  %1426 = vmatpush.msra.mxu0 %v1088
  %1427 = vmatpush.msra.mxu0 %v1085
  %1428 = vmatpush.msra.mxu0 %v1082
  %1429 = vmatpush.msra.mxu0 %v1079
  %1430 = vmatpush.msra.mxu0 %v1076
  %1431 = vmatpush.msra.mxu0 %v1073
  %1432 = vmatpush.msra.mxu0 %v1070
  %1433 = vmatpush.msra.mxu0 %v1067
  %1434 = vmatpush.msra.mxu0 %v1064
  %1435 = vmatpush.msra.mxu0 %v1061
  %1436 = vmatpush.msra.mxu0 %v1058
  %1437 = vmatpush.msra.mxu0 %v1055
  %1438 = vmatpush.msra.mxu0 %v1052
  %1439 = vmatpush.msra.mxu0 %v1049
  %1440 = vmatpush.msra.mxu0 %v1046
  %1441 = vmatpush.msra.mxu0 %v1043
  %1442 = vmatmul.f32.gmra.mxu0 %v1003
  %v1443 = vpop.f32.mrf.mxu0
  %v1444 = vadd.f32 %v1287, %v1443
  %1445 = vmatmul.f32.gmra.mxu0 %v1006
  %v1446 = vpop.f32.mrf.mxu0
  %v1447 = vadd.f32 %v1290, %v1446
  %1448 = vmatmul.f32.gmra.mxu0 %v1009
  %v1449 = vpop.f32.mrf.mxu0
  %v1450 = vadd.f32 %v1293, %v1449
  %1451 = vmatmul.f32.gmra.mxu0 %v1012
  %v1452 = vpop.f32.mrf.mxu0
  %v1453 = vadd.f32 %v1296, %v1452
  %1454 = vdwg.mxu0
  %1455 = vmatpush.msra.mxu0 0.0
  %1456 = vmatpush.msra.mxu0 0.0
  %1457 = vmatpush.msra.mxu0 0.0
  %1458 = vmatpush.msra.mxu0 0.0
  %1459 = vmatpush.msra.mxu0 0.0
  %1460 = vmatpush.msra.mxu0 0.0
  %1461 = vmatpush.msra.mxu0 0.0
  %1462 = vmatpush.msra.mxu0 0.0
  %1463 = vmatpush.msra.mxu0 0.0
  %1464 = vmatpush.msra.mxu0 0.0
  %1465 = vmatpush.msra.mxu0 0.0
  %1466 = vmatpush.msra.mxu0 0.0
  %1467 = vmatpush.msra.mxu0 0.0
  %1468 = vmatpush.msra.mxu0 0.0
  %1469 = vmatpush.msra.mxu0 %v1094
  %1470 = vmatpush.msra.mxu0 %v1091
  %1471 = vmatmul.f32.gmra.mxu0 %v1415
  %v1472 = vpop.f32.mrf.mxu0
  %v1473 = vadd.f32 %v1444, %v1472
  %1474 = vmatmul.f32.gmra.mxu0 %v1418
  %v1475 = vpop.f32.mrf.mxu0
  %v1476 = vadd.f32 %v1447, %v1475
  %1477 = vmatmul.f32.gmra.mxu0 %v1421
  %v1478 = vpop.f32.mrf.mxu0
  %v1479 = vadd.f32 %v1450, %v1478
  %1480 = vmatmul.f32.gmra.mxu0 %v1424
  %v1481 = vpop.f32.mrf.mxu0
  %v1482 = vadd.f32 %v1453, %v1481
  %1483 = vdwg.mxu0
  %1484 = vmatpush.msra.mxu0 %v1089
  %1485 = vmatpush.msra.mxu0 %v1086
  %1486 = vmatpush.msra.mxu0 %v1083
  %1487 = vmatpush.msra.mxu0 %v1080
  %1488 = vmatpush.msra.mxu0 %v1077
  %1489 = vmatpush.msra.mxu0 %v1074
  %1490 = vmatpush.msra.mxu0 %v1071
  %1491 = vmatpush.msra.mxu0 %v1068
  %1492 = vmatpush.msra.mxu0 %v1065
  %1493 = vmatpush.msra.mxu0 %v1062
  %1494 = vmatpush.msra.mxu0 %v1059
  %1495 = vmatpush.msra.mxu0 %v1056
  %1496 = vmatpush.msra.mxu0 %v1053
  %1497 = vmatpush.msra.mxu0 %v1050
  %1498 = vmatpush.msra.mxu0 %v1047
  %1499 = vmatpush.msra.mxu0 %v1044
  %1500 = vmatmul.f32.gmra.mxu0 %v1003
  %v1501 = vpop.f32.mrf.mxu0
  %v1502 = vadd.f32 %v1345, %v1501
  %1503 = vmatmul.f32.gmra.mxu0 %v1006
  %v1504 = vpop.f32.mrf.mxu0
  %v1505 = vadd.f32 %v1348, %v1504
  %1506 = vmatmul.f32.gmra.mxu0 %v1009
  %v1507 = vpop.f32.mrf.mxu0
  %v1508 = vadd.f32 %v1351, %v1507
  %1509 = vmatmul.f32.gmra.mxu0 %v1012
  %v1510 = vpop.f32.mrf.mxu0
  %v1511 = vadd.f32 %v1354, %v1510
  %1512 = vdwg.mxu0
  %1513 = vmatpush.msra.mxu0 0.0
  %1514 = vmatpush.msra.mxu0 0.0
  %1515 = vmatpush.msra.mxu0 0.0
  %1516 = vmatpush.msra.mxu0 0.0
  %1517 = vmatpush.msra.mxu0 0.0
  %1518 = vmatpush.msra.mxu0 0.0
  %1519 = vmatpush.msra.mxu0 0.0
  %1520 = vmatpush.msra.mxu0 0.0
  %1521 = vmatpush.msra.mxu0 0.0
  %1522 = vmatpush.msra.mxu0 0.0
  %1523 = vmatpush.msra.mxu0 0.0
  %1524 = vmatpush.msra.mxu0 0.0
  %1525 = vmatpush.msra.mxu0 0.0
  %1526 = vmatpush.msra.mxu0 0.0
  %1527 = vmatpush.msra.mxu0 %v1095
  %1528 = vmatpush.msra.mxu0 %v1092
  %1529 = vmatmul.f32.gmra.mxu0 %v1415
  %v1530 = vpop.f32.mrf.mxu0
  %v1531 = vadd.f32 %v1502, %v1530
  %1532 = vmatmul.f32.gmra.mxu0 %v1418
  %v1533 = vpop.f32.mrf.mxu0
  %v1534 = vadd.f32 %v1505, %v1533
  %1535 = vmatmul.f32.gmra.mxu0 %v1421
  %v1536 = vpop.f32.mrf.mxu0
  %v1537 = vadd.f32 %v1508, %v1536
  %1538 = vmatmul.f32.gmra.mxu0 %v1424
  %v1539 = vpop.f32.mrf.mxu0
  %v1540 = vadd.f32 %v1511, %v1539
  %1541 = vdwg.mxu0
  %1542 = vmatpush.msra.mxu0 %v1090
  %1543 = vmatpush.msra.mxu0 %v1087
  %1544 = vmatpush.msra.mxu0 %v1084
  %1545 = vmatpush.msra.mxu0 %v1081
  %1546 = vmatpush.msra.mxu0 %v1078
  %1547 = vmatpush.msra.mxu0 %v1075
  %1548 = vmatpush.msra.mxu0 %v1072
  %1549 = vmatpush.msra.mxu0 %v1069
  %1550 = vmatpush.msra.mxu0 %v1066
  %1551 = vmatpush.msra.mxu0 %v1063
  %1552 = vmatpush.msra.mxu0 %v1060
  %1553 = vmatpush.msra.mxu0 %v1057
  %1554 = vmatpush.msra.mxu0 %v1054
  %1555 = vmatpush.msra.mxu0 %v1051
  %1556 = vmatpush.msra.mxu0 %v1048
  %1557 = vmatpush.msra.mxu0 %v1045
  %1558 = vmatmul.f32.gmra.mxu0 %v1003
  %v1559 = vpop.f32.mrf.mxu0
  %v1560 = vadd.f32 %v1403, %v1559
  %1561 = vmatmul.f32.gmra.mxu0 %v1006
  %v1562 = vpop.f32.mrf.mxu0
  %v1563 = vadd.f32 %v1406, %v1562
  %1564 = vmatmul.f32.gmra.mxu0 %v1009
  %v1565 = vpop.f32.mrf.mxu0
  %v1566 = vadd.f32 %v1409, %v1565
  %1567 = vmatmul.f32.gmra.mxu0 %v1012
  %v1568 = vpop.f32.mrf.mxu0
  %v1569 = vadd.f32 %v1412, %v1568
  %1570 = vdwg.mxu0
  %1571 = vmatpush.msra.mxu0 0.0
  %1572 = vmatpush.msra.mxu0 0.0
  %1573 = vmatpush.msra.mxu0 0.0
  %1574 = vmatpush.msra.mxu0 0.0
  %1575 = vmatpush.msra.mxu0 0.0
  %1576 = vmatpush.msra.mxu0 0.0
  %1577 = vmatpush.msra.mxu0 0.0
  %1578 = vmatpush.msra.mxu0 0.0
  %1579 = vmatpush.msra.mxu0 0.0
  %1580 = vmatpush.msra.mxu0 0.0
  %1581 = vmatpush.msra.mxu0 0.0
  %1582 = vmatpush.msra.mxu0 0.0
  %1583 = vmatpush.msra.mxu0 0.0
  %1584 = vmatpush.msra.mxu0 0.0
  %1585 = vmatpush.msra.mxu0 %v1096
  %1586 = vmatpush.msra.mxu0 %v1093
  %1587 = vmatmul.f32.gmra.mxu0 %v1415
  %v1588 = vpop.f32.mrf.mxu0
  %v1589 = vadd.f32 %v1560, %v1588
  %1590 = vmatmul.f32.gmra.mxu0 %v1418
  %v1591 = vpop.f32.mrf.mxu0
  %v1592 = vadd.f32 %v1563, %v1591
  %1593 = vmatmul.f32.gmra.mxu0 %v1421
  %v1594 = vpop.f32.mrf.mxu0
  %v1595 = vadd.f32 %v1566, %v1594
  %1596 = vmatmul.f32.gmra.mxu0 %v1424
  %v1597 = vpop.f32.mrf.mxu0
  %v1598 = vadd.f32 %v1569, %v1597
  %1599 = vdwg.mxu0
  %s1600 = scalar_lea.vmem %s7, 64
  %v1601 = vld [vmem:[%s1600] sm:$0xff]
  %v1602 = vld [vmem:[%s1600 + $0x8] sm:$0xff]
  %v1603 = vld [vmem:[%s1600 + $0x10] sm:$0xff]
  %v1604 = vld [vmem:[%s1600 + $0x18] sm:$0xff]
  %v1606 = vsel %vm972, %v1601, 0
  %v1609 = vsel %vm972, %v1602, 0
  %v1612 = vsel %vm972, %v1603, 0
  %v1615 = vsel %vm972, %v1604, 0
  %1617 = vmatpush.msra.mxu0 0.0
  %1618 = vmatpush.msra.mxu0 0.0
  %1619 = vmatpush.msra.mxu0 0.0
  %1620 = vmatpush.msra.mxu0 0.0
  %1621 = vmatpush.msra.mxu0 0.0
  %1622 = vmatpush.msra.mxu0 0.0
  %1623 = vmatpush.msra.mxu0 0.0
  %1624 = vmatpush.msra.mxu0 0.0
  %1625 = vmatpush.msra.mxu0 0.0
  %1626 = vmatpush.msra.mxu0 0.0
  %1627 = vmatpush.msra.mxu0 0.0
  %1628 = vmatpush.msra.mxu0 0.0
  %1629 = vmatpush.msra.mxu0 %v966
  %1630 = vmatpush.msra.mxu0 %v964
  %1631 = vmatpush.msra.mxu0 %v962
  %1632 = vmatpush.msra.mxu0 %v960
  %1633 = vmatmul.f32.gmra.mxu0 %v1606
  %v1634 = vpop.f32.mrf.mxu0
  %v1635 = vadd.f32 0.0, %v1634
  %1636 = vmatmul.f32.gmra.mxu0 %v1609
  %v1637 = vpop.f32.mrf.mxu0
  %v1638 = vadd.f32 0.0, %v1637
  %1639 = vmatmul.f32.gmra.mxu0 %v1612
  %v1640 = vpop.f32.mrf.mxu0
  %v1641 = vadd.f32 0.0, %v1640
  %1642 = vmatmul.f32.gmra.mxu0 %v1615
  %v1643 = vpop.f32.mrf.mxu0
  %v1644 = vadd.f32 0.0, %v1643
  %1645 = vdwg.mxu0
  %1646 = vmatpush.msra.mxu0 0.0
  %1647 = vmatpush.msra.mxu0 0.0
  %1648 = vmatpush.msra.mxu0 0.0
  %1649 = vmatpush.msra.mxu0 0.0
  %1650 = vmatpush.msra.mxu0 0.0
  %1651 = vmatpush.msra.mxu0 0.0
  %1652 = vmatpush.msra.mxu0 0.0
  %1653 = vmatpush.msra.mxu0 0.0
  %1654 = vmatpush.msra.mxu0 0.0
  %1655 = vmatpush.msra.mxu0 0.0
  %1656 = vmatpush.msra.mxu0 0.0
  %1657 = vmatpush.msra.mxu0 0.0
  %1658 = vmatpush.msra.mxu0 %v967
  %1659 = vmatpush.msra.mxu0 %v965
  %1660 = vmatpush.msra.mxu0 %v963
  %1661 = vmatpush.msra.mxu0 %v961
  %1662 = vmatmul.f32.gmra.mxu0 %v1606
  %v1663 = vpop.f32.mrf.mxu0
  %v1664 = vadd.f32 0.0, %v1663
  %1665 = vmatmul.f32.gmra.mxu0 %v1609
  %v1666 = vpop.f32.mrf.mxu0
  %v1667 = vadd.f32 0.0, %v1666
  %1668 = vmatmul.f32.gmra.mxu0 %v1612
  %v1669 = vpop.f32.mrf.mxu0
  %v1670 = vadd.f32 0.0, %v1669
  %1671 = vmatmul.f32.gmra.mxu0 %v1615
  %v1672 = vpop.f32.mrf.mxu0
  %v1673 = vadd.f32 0.0, %v1672
  %1674 = vdwg.mxu0
  %s1675 = scalar_lea.vmem %s8, 864
  %v1676 = vld [vmem:[%s1675] sm:$0xff]
  %v1677 = vld [vmem:[%s1675 + $0x8] sm:$0xff]
  %v1678 = vld [vmem:[%s1675 + $0x10] sm:$0xff]
  %v1679 = vld [vmem:[%s1675 + $0x18] sm:$0xff]
  %v1680 = vld [vmem:[%s1675 + $0x20] sm:$0xff]
  %v1681 = vld [vmem:[%s1675 + $0x28] sm:$0xff]
  %v1682 = vld [vmem:[%s1675 + $0x30] sm:$0xff]
  %v1683 = vld [vmem:[%s1675 + $0x38] sm:$0xff]
  %v1684 = vld [vmem:[%s1675 + $0x40] sm:$0xff]
  %v1685 = vld [vmem:[%s1675 + $0x48] sm:$0xff]
  %v1686 = vld [vmem:[%s1675 + $0x50] sm:$0xff]
  %v1687 = vld [vmem:[%s1675 + $0x58] sm:$0xff]
  %v1688 = vld [vmem:[%s1675 + $0x60] sm:$0xff]
  %v1689 = vld [vmem:[%s1675 + $0x68] sm:$0xff]
  %v1690 = vld [vmem:[%s1675 + $0x70] sm:$0xff]
  %v1691 = vld [vmem:[%s1675 + $0x78] sm:$0xff]
  %v1692 = vld [vmem:[%s1675 + $0x80] sm:$0xff]
  %v1693 = vld [vmem:[%s1675 + $0x88] sm:$0xff]
  %v1694 = vld [vmem:[%s1675 + $0x90] sm:$0xff]
  %v1695 = vld [vmem:[%s1675 + $0x98] sm:$0xff]
  %v1696 = vld [vmem:[%s1675 + $0xa0] sm:$0xff]
  %v1697 = vld [vmem:[%s1675 + $0xa8] sm:$0xff]
  %v1698 = vld [vmem:[%s1675 + $0xb0] sm:$0xff]
  %v1699 = vld [vmem:[%s1675 + $0xb8] sm:$0xff]
  %v1700 = vld [vmem:[%s1675 + $0xc0] sm:$0xff]
  %v1701 = vld [vmem:[%s1675 + $0xc8] sm:$0xff]
  %v1702 = vld [vmem:[%s1675 + $0xd0] sm:$0xff]
  %v1703 = vld [vmem:[%s1675 + $0xd8] sm:$0xff]
  %v1704 = vld [vmem:[%s1675 + $0xe0] sm:$0xff]
  %v1705 = vld [vmem:[%s1675 + $0xe8] sm:$0xff]
  %v1706 = vld [vmem:[%s1675 + $0xf0] sm:$0xff]
  %v1707 = vld [vmem:[%s1675 + $0xf8] sm:$0xff]
  %v1708 = vld [vmem:[%s1675 + $0x100] sm:$0xff]
  %v1709 = vld [vmem:[%s1675 + $0x108] sm:$0xff]
  %v1710 = vld [vmem:[%s1675 + $0x110] sm:$0xff]
  %v1711 = vld [vmem:[%s1675 + $0x118] sm:$0xff]
  %v1712 = vld [vmem:[%s1675 + $0x120] sm:$0xff]
  %v1713 = vld [vmem:[%s1675 + $0x128] sm:$0xff]
  %v1714 = vld [vmem:[%s1675 + $0x130] sm:$0xff]
  %v1715 = vld [vmem:[%s1675 + $0x138] sm:$0xff]
  %v1716 = vld [vmem:[%s1675 + $0x140] sm:$0xff]
  %v1717 = vld [vmem:[%s1675 + $0x148] sm:$0xff]
  %v1718 = vld [vmem:[%s1675 + $0x150] sm:$0xff]
  %v1719 = vld [vmem:[%s1675 + $0x158] sm:$0xff]
  %v1720 = vld [vmem:[%s1675 + $0x160] sm:$0xff]
  %v1721 = vld [vmem:[%s1675 + $0x168] sm:$0xff]
  %v1722 = vld [vmem:[%s1675 + $0x170] sm:$0xff]
  %v1723 = vld [vmem:[%s1675 + $0x178] sm:$0xff]
  %v1724 = vld [vmem:[%s1675 + $0x180] sm:$0xff]
  %v1725 = vld [vmem:[%s1675 + $0x188] sm:$0xff]
  %v1726 = vld [vmem:[%s1675 + $0x190] sm:$0xff]
  %v1727 = vld [vmem:[%s1675 + $0x198] sm:$0xff]
  %v1728 = vld [vmem:[%s1675 + $0x1a0] sm:$0xff]
  %v1729 = vld [vmem:[%s1675 + $0x1a8] sm:$0xff]
  %v1731 = vsel %vm1227, %v1664, 0
  %v1734 = vsel %vm1227, %v1667, 0
  %v1737 = vsel %vm1227, %v1670, 0
  %v1740 = vsel %vm1227, %v1673, 0
  %1742 = vmatpush.msra.mxu0 %v1721
  %1743 = vmatpush.msra.mxu0 %v1718
  %1744 = vmatpush.msra.mxu0 %v1715
  %1745 = vmatpush.msra.mxu0 %v1712
  %1746 = vmatpush.msra.mxu0 %v1709
  %1747 = vmatpush.msra.mxu0 %v1706
  %1748 = vmatpush.msra.mxu0 %v1703
  %1749 = vmatpush.msra.mxu0 %v1700
  %1750 = vmatpush.msra.mxu0 %v1697
  %1751 = vmatpush.msra.mxu0 %v1694
  %1752 = vmatpush.msra.mxu0 %v1691
  %1753 = vmatpush.msra.mxu0 %v1688
  %1754 = vmatpush.msra.mxu0 %v1685
  %1755 = vmatpush.msra.mxu0 %v1682
  %1756 = vmatpush.msra.mxu0 %v1679
  %1757 = vmatpush.msra.mxu0 %v1676
  %1758 = vmatmul.f32.gmra.mxu0 %v1635
  %v1759 = vpop.f32.mrf.mxu0
  %v1760 = vadd.f32 0.0, %v1759
  %1761 = vmatmul.f32.gmra.mxu0 %v1638
  %v1762 = vpop.f32.mrf.mxu0
  %v1763 = vadd.f32 0.0, %v1762
  %1764 = vmatmul.f32.gmra.mxu0 %v1641
  %v1765 = vpop.f32.mrf.mxu0
  %v1766 = vadd.f32 0.0, %v1765
  %1767 = vmatmul.f32.gmra.mxu0 %v1644
  %v1768 = vpop.f32.mrf.mxu0
  %v1769 = vadd.f32 0.0, %v1768
  %1770 = vdwg.mxu0
  %1771 = vmatpush.msra.mxu0 0.0
  %1772 = vmatpush.msra.mxu0 0.0
  %1773 = vmatpush.msra.mxu0 0.0
  %1774 = vmatpush.msra.mxu0 0.0
  %1775 = vmatpush.msra.mxu0 0.0
  %1776 = vmatpush.msra.mxu0 0.0
  %1777 = vmatpush.msra.mxu0 0.0
  %1778 = vmatpush.msra.mxu0 0.0
  %1779 = vmatpush.msra.mxu0 0.0
  %1780 = vmatpush.msra.mxu0 0.0
  %1781 = vmatpush.msra.mxu0 0.0
  %1782 = vmatpush.msra.mxu0 0.0
  %1783 = vmatpush.msra.mxu0 0.0
  %1784 = vmatpush.msra.mxu0 0.0
  %1785 = vmatpush.msra.mxu0 %v1727
  %1786 = vmatpush.msra.mxu0 %v1724
  %1787 = vmatmul.f32.gmra.mxu0 %v1731
  %v1788 = vpop.f32.mrf.mxu0
  %v1789 = vadd.f32 %v1760, %v1788
  %1790 = vmatmul.f32.gmra.mxu0 %v1734
  %v1791 = vpop.f32.mrf.mxu0
  %v1792 = vadd.f32 %v1763, %v1791
  %1793 = vmatmul.f32.gmra.mxu0 %v1737
  %v1794 = vpop.f32.mrf.mxu0
  %v1795 = vadd.f32 %v1766, %v1794
  %1796 = vmatmul.f32.gmra.mxu0 %v1740
  %v1797 = vpop.f32.mrf.mxu0
  %v1798 = vadd.f32 %v1769, %v1797
  %1799 = vdwg.mxu0
  %1800 = vmatpush.msra.mxu0 %v1722
  %1801 = vmatpush.msra.mxu0 %v1719
  %1802 = vmatpush.msra.mxu0 %v1716
  %1803 = vmatpush.msra.mxu0 %v1713
  %1804 = vmatpush.msra.mxu0 %v1710
  %1805 = vmatpush.msra.mxu0 %v1707
  %1806 = vmatpush.msra.mxu0 %v1704
  %1807 = vmatpush.msra.mxu0 %v1701
  %1808 = vmatpush.msra.mxu0 %v1698
  %1809 = vmatpush.msra.mxu0 %v1695
  %1810 = vmatpush.msra.mxu0 %v1692
  %1811 = vmatpush.msra.mxu0 %v1689
  %1812 = vmatpush.msra.mxu0 %v1686
  %1813 = vmatpush.msra.mxu0 %v1683
  %1814 = vmatpush.msra.mxu0 %v1680
  %1815 = vmatpush.msra.mxu0 %v1677
  %1816 = vmatmul.f32.gmra.mxu0 %v1635
  %v1817 = vpop.f32.mrf.mxu0
  %v1818 = vadd.f32 0.0, %v1817
  %1819 = vmatmul.f32.gmra.mxu0 %v1638
  %v1820 = vpop.f32.mrf.mxu0
  %v1821 = vadd.f32 0.0, %v1820
  %1822 = vmatmul.f32.gmra.mxu0 %v1641
  %v1823 = vpop.f32.mrf.mxu0
  %v1824 = vadd.f32 0.0, %v1823
  %1825 = vmatmul.f32.gmra.mxu0 %v1644
  %v1826 = vpop.f32.mrf.mxu0
  %v1827 = vadd.f32 0.0, %v1826
  %1828 = vdwg.mxu0
  %1829 = vmatpush.msra.mxu0 0.0
  %1830 = vmatpush.msra.mxu0 0.0
  %1831 = vmatpush.msra.mxu0 0.0
  %1832 = vmatpush.msra.mxu0 0.0
  %1833 = vmatpush.msra.mxu0 0.0
  %1834 = vmatpush.msra.mxu0 0.0
  %1835 = vmatpush.msra.mxu0 0.0
  %1836 = vmatpush.msra.mxu0 0.0
  %1837 = vmatpush.msra.mxu0 0.0
  %1838 = vmatpush.msra.mxu0 0.0
  %1839 = vmatpush.msra.mxu0 0.0
  %1840 = vmatpush.msra.mxu0 0.0
  %1841 = vmatpush.msra.mxu0 0.0
  %1842 = vmatpush.msra.mxu0 0.0
  %1843 = vmatpush.msra.mxu0 %v1728
  %1844 = vmatpush.msra.mxu0 %v1725
  %1845 = vmatmul.f32.gmra.mxu0 %v1731
  %v1846 = vpop.f32.mrf.mxu0
  %v1847 = vadd.f32 %v1818, %v1846
  %1848 = vmatmul.f32.gmra.mxu0 %v1734
  %v1849 = vpop.f32.mrf.mxu0
  %v1850 = vadd.f32 %v1821, %v1849
  %1851 = vmatmul.f32.gmra.mxu0 %v1737
  %v1852 = vpop.f32.mrf.mxu0
  %v1853 = vadd.f32 %v1824, %v1852
  %1854 = vmatmul.f32.gmra.mxu0 %v1740
  %v1855 = vpop.f32.mrf.mxu0
  %v1856 = vadd.f32 %v1827, %v1855
  %1857 = vdwg.mxu0
  %1858 = vmatpush.msra.mxu0 %v1723
  %1859 = vmatpush.msra.mxu0 %v1720
  %1860 = vmatpush.msra.mxu0 %v1717
  %1861 = vmatpush.msra.mxu0 %v1714
  %1862 = vmatpush.msra.mxu0 %v1711
  %1863 = vmatpush.msra.mxu0 %v1708
  %1864 = vmatpush.msra.mxu0 %v1705
  %1865 = vmatpush.msra.mxu0 %v1702
  %1866 = vmatpush.msra.mxu0 %v1699
  %1867 = vmatpush.msra.mxu0 %v1696
  %1868 = vmatpush.msra.mxu0 %v1693
  %1869 = vmatpush.msra.mxu0 %v1690
  %1870 = vmatpush.msra.mxu0 %v1687
  %1871 = vmatpush.msra.mxu0 %v1684
  %1872 = vmatpush.msra.mxu0 %v1681
  %1873 = vmatpush.msra.mxu0 %v1678
  %1874 = vmatmul.f32.gmra.mxu0 %v1635
  %v1875 = vpop.f32.mrf.mxu0
  %v1876 = vadd.f32 0.0, %v1875
  %1877 = vmatmul.f32.gmra.mxu0 %v1638
  %v1878 = vpop.f32.mrf.mxu0
  %v1879 = vadd.f32 0.0, %v1878
  %1880 = vmatmul.f32.gmra.mxu0 %v1641
  %v1881 = vpop.f32.mrf.mxu0
  %v1882 = vadd.f32 0.0, %v1881
  %1883 = vmatmul.f32.gmra.mxu0 %v1644
  %v1884 = vpop.f32.mrf.mxu0
  %v1885 = vadd.f32 0.0, %v1884
  %1886 = vdwg.mxu0
  %1887 = vmatpush.msra.mxu0 0.0
  %1888 = vmatpush.msra.mxu0 0.0
  %1889 = vmatpush.msra.mxu0 0.0
  %1890 = vmatpush.msra.mxu0 0.0
  %1891 = vmatpush.msra.mxu0 0.0
  %1892 = vmatpush.msra.mxu0 0.0
  %1893 = vmatpush.msra.mxu0 0.0
  %1894 = vmatpush.msra.mxu0 0.0
  %1895 = vmatpush.msra.mxu0 0.0
  %1896 = vmatpush.msra.mxu0 0.0
  %1897 = vmatpush.msra.mxu0 0.0
  %1898 = vmatpush.msra.mxu0 0.0
  %1899 = vmatpush.msra.mxu0 0.0
  %1900 = vmatpush.msra.mxu0 0.0
  %1901 = vmatpush.msra.mxu0 %v1729
  %1902 = vmatpush.msra.mxu0 %v1726
  %1903 = vmatmul.f32.gmra.mxu0 %v1731
  %v1904 = vpop.f32.mrf.mxu0
  %v1905 = vadd.f32 %v1876, %v1904
  %1906 = vmatmul.f32.gmra.mxu0 %v1734
  %v1907 = vpop.f32.mrf.mxu0
  %v1908 = vadd.f32 %v1879, %v1907
  %1909 = vmatmul.f32.gmra.mxu0 %v1737
  %v1910 = vpop.f32.mrf.mxu0
  %v1911 = vadd.f32 %v1882, %v1910
  %1912 = vmatmul.f32.gmra.mxu0 %v1740
  %v1913 = vpop.f32.mrf.mxu0
  %v1914 = vadd.f32 %v1885, %v1913
  %1915 = vdwg.mxu0
  %v1916 = vadd.f32 %v1473, %v1789
  %v1917 = vadd.f32 %v1531, %v1847
  %v1918 = vadd.f32 %v1589, %v1905
  %v1919 = vadd.f32 %v1476, %v1792
  %v1920 = vadd.f32 %v1534, %v1850
  %v1921 = vadd.f32 %v1592, %v1908
  %v1922 = vadd.f32 %v1479, %v1795
  %v1923 = vadd.f32 %v1537, %v1853
  %v1924 = vadd.f32 %v1595, %v1911
  %v1925 = vadd.f32 %v1482, %v1798
  %v1926 = vadd.f32 %v1540, %v1856
  %v1927 = vadd.f32 %v1598, %v1914
  %v1928 = vld [vmem:[%s9] sm:$0x7]
  %v1930 = vperm.slane %v1928, 0
  %v1931 = vperm.slane %v1928, 1
  %v1932 = vperm.slane %v1928, 2
  %v1936 = vadd.f32 %v1916, %v1930
  %v1937 = vadd.f32 %v1917, %v1931
  %v1938 = vadd.f32 %v1918, %v1932
  %v1939 = vadd.f32 %v1919, %v1930
  %v1940 = vadd.f32 %v1920, %v1931
  %v1941 = vadd.f32 %v1921, %v1932
  %v1942 = vadd.f32 %v1922, %v1930
  %v1943 = vadd.f32 %v1923, %v1931
  %v1944 = vadd.f32 %v1924, %v1932
  %v1945 = vadd.f32 %v1925, %v1930
  %v1946 = vadd.f32 %v1926, %v1931
  %v1947 = vadd.f32 %v1927, %v1932
  %v1948 = vmax.f32 %v1936, 0.0
  %v1949 = vmax.f32 %v1937, 0.0
  %v1950 = vmax.f32 %v1938, 0.0
  %v1951 = vmax.f32 %v1939, 0.0
  %v1952 = vmax.f32 %v1940, 0.0
  %v1953 = vmax.f32 %v1941, 0.0
  %v1954 = vmax.f32 %v1942, 0.0
  %v1955 = vmax.f32 %v1943, 0.0
  %v1956 = vmax.f32 %v1944, 0.0
  %v1957 = vmax.f32 %v1945, 0.0
  %v1958 = vmax.f32 %v1946, 0.0
  %v1959 = vmax.f32 %v1947, 0.0
  %v1960 = vld [vmem:[%s10] sm:$0xff]
  %v1961 = vld [vmem:[%s10 + $0x8] sm:$0xff]
  %v1963 = vsel %vm972, %v1960, 0
  %v1966 = vsel %vm972, %v1961, 0
  %1968 = vmatpush.msra.mxu0 0.0
  %1969 = vmatpush.msra.mxu0 0.0
  %1970 = vmatpush.msra.mxu0 0.0
  %1971 = vmatpush.msra.mxu0 0.0
  %1972 = vmatpush.msra.mxu0 0.0
  %1973 = vmatpush.msra.mxu0 0.0
  %1974 = vmatpush.msra.mxu0 0.0
  %1975 = vmatpush.msra.mxu0 0.0
  %1976 = vmatpush.msra.mxu0 0.0
  %1977 = vmatpush.msra.mxu0 0.0
  %1978 = vmatpush.msra.mxu0 0.0
  %1979 = vmatpush.msra.mxu0 0.0
  %1980 = vmatpush.msra.mxu0 %v1957
  %1981 = vmatpush.msra.mxu0 %v1954
  %1982 = vmatpush.msra.mxu0 %v1951
  %1983 = vmatpush.msra.mxu0 %v1948
  %1984 = vmatmul.f32.gmra.mxu0 %v1963
  %v1985 = vpop.f32.mrf.mxu0
  %v1986 = vadd.f32 0.0, %v1985
  %1987 = vmatmul.f32.gmra.mxu0 %v1966
  %v1988 = vpop.f32.mrf.mxu0
  %v1989 = vadd.f32 0.0, %v1988
  %1990 = vdwg.mxu0
  %1991 = vmatpush.msra.mxu0 0.0
  %1992 = vmatpush.msra.mxu0 0.0
  %1993 = vmatpush.msra.mxu0 0.0
  %1994 = vmatpush.msra.mxu0 0.0
  %1995 = vmatpush.msra.mxu0 0.0
  %1996 = vmatpush.msra.mxu0 0.0
  %1997 = vmatpush.msra.mxu0 0.0
  %1998 = vmatpush.msra.mxu0 0.0
  %1999 = vmatpush.msra.mxu0 0.0
  %2000 = vmatpush.msra.mxu0 0.0
  %2001 = vmatpush.msra.mxu0 0.0
  %2002 = vmatpush.msra.mxu0 0.0
  %2003 = vmatpush.msra.mxu0 %v1958
  %2004 = vmatpush.msra.mxu0 %v1955
  %2005 = vmatpush.msra.mxu0 %v1952
  %2006 = vmatpush.msra.mxu0 %v1949
  %2007 = vmatmul.f32.gmra.mxu0 %v1963
  %v2008 = vpop.f32.mrf.mxu0
  %v2009 = vadd.f32 0.0, %v2008
  %2010 = vmatmul.f32.gmra.mxu0 %v1966
  %v2011 = vpop.f32.mrf.mxu0
  %v2012 = vadd.f32 0.0, %v2011
  %2013 = vdwg.mxu0
  %2014 = vmatpush.msra.mxu0 0.0
  %2015 = vmatpush.msra.mxu0 0.0
  %2016 = vmatpush.msra.mxu0 0.0
  %2017 = vmatpush.msra.mxu0 0.0
  %2018 = vmatpush.msra.mxu0 0.0
  %2019 = vmatpush.msra.mxu0 0.0
  %2020 = vmatpush.msra.mxu0 0.0
  %2021 = vmatpush.msra.mxu0 0.0
  %2022 = vmatpush.msra.mxu0 0.0
  %2023 = vmatpush.msra.mxu0 0.0
  %2024 = vmatpush.msra.mxu0 0.0
  %2025 = vmatpush.msra.mxu0 0.0
  %2026 = vmatpush.msra.mxu0 %v1959
  %2027 = vmatpush.msra.mxu0 %v1956
  %2028 = vmatpush.msra.mxu0 %v1953
  %2029 = vmatpush.msra.mxu0 %v1950
  %2030 = vmatmul.f32.gmra.mxu0 %v1963
  %v2031 = vpop.f32.mrf.mxu0
  %v2032 = vadd.f32 0.0, %v2031
  %2033 = vmatmul.f32.gmra.mxu0 %v1966
  %v2034 = vpop.f32.mrf.mxu0
  %v2035 = vadd.f32 0.0, %v2034
  %2036 = vdwg.mxu0
  %v2037 = vld [vmem:[%s11] sm:$0xff]
  %v2038 = vld [vmem:[%s11 + $0x8] sm:$0xff]
  %v2039 = vld [vmem:[%s11 + $0x10] sm:$0xff]
  %v2040 = vld [vmem:[%s11 + $0x18] sm:$0xff]
  %v2041 = vld [vmem:[%s11 + $0x20] sm:$0xff]
  %v2042 = vld [vmem:[%s11 + $0x28] sm:$0xff]
  %v2043 = vld [vmem:[%s11 + $0x30] sm:$0xff]
  %v2044 = vld [vmem:[%s11 + $0x38] sm:$0xff]
  %v2045 = vld [vmem:[%s11 + $0x40] sm:$0xff]
  %v2046 = vld [vmem:[%s11 + $0x48] sm:$0xff]
  %v2047 = vld [vmem:[%s11 + $0x50] sm:$0xff]
  %v2048 = vld [vmem:[%s11 + $0x58] sm:$0xff]
  %v2049 = vld [vmem:[%s11 + $0x60] sm:$0xff]
  %v2050 = vld [vmem:[%s11 + $0x68] sm:$0xff]
  %v2051 = vld [vmem:[%s11 + $0x70] sm:$0xff]
  %v2052 = vld [vmem:[%s11 + $0x78] sm:$0xff]
  %v2053 = vld [vmem:[%s11 + $0x80] sm:$0xff]
  %v2054 = vld [vmem:[%s11 + $0x88] sm:$0xff]
  %v2055 = vld [vmem:[%s11 + $0x90] sm:$0xff]
  %v2056 = vld [vmem:[%s11 + $0x98] sm:$0xff]
  %v2057 = vld [vmem:[%s11 + $0xa0] sm:$0xff]
  %v2058 = vld [vmem:[%s11 + $0xa8] sm:$0xff]
  %v2059 = vld [vmem:[%s11 + $0xb0] sm:$0xff]
  %v2060 = vld [vmem:[%s11 + $0xb8] sm:$0xff]
  %v2061 = vld [vmem:[%s11 + $0xc0] sm:$0xff]
  %v2062 = vld [vmem:[%s11 + $0xc8] sm:$0xff]
  %v2063 = vld [vmem:[%s11 + $0xd0] sm:$0xff]
  %v2064 = vld [vmem:[%s11 + $0xd8] sm:$0xff]
  %v2065 = vld [vmem:[%s11 + $0xe0] sm:$0xff]
  %v2066 = vld [vmem:[%s11 + $0xe8] sm:$0xff]
  %v2067 = vld [vmem:[%s11 + $0xf0] sm:$0xff]
  %v2068 = vld [vmem:[%s11 + $0xf8] sm:$0xff]
  %v2069 = vld [vmem:[%s11 + $0x100] sm:$0xff]
  %v2070 = vld [vmem:[%s11 + $0x108] sm:$0xff]
  %v2071 = vld [vmem:[%s11 + $0x110] sm:$0xff]
  %v2072 = vld [vmem:[%s11 + $0x118] sm:$0xff]
  %v2073 = vld [vmem:[%s11 + $0x120] sm:$0xff]
  %v2074 = vld [vmem:[%s11 + $0x128] sm:$0xff]
  %v2075 = vld [vmem:[%s11 + $0x130] sm:$0xff]
  %v2076 = vld [vmem:[%s11 + $0x138] sm:$0xff]
  %v2077 = vld [vmem:[%s11 + $0x140] sm:$0xff]
  %v2078 = vld [vmem:[%s11 + $0x148] sm:$0xff]
  %v2079 = vld [vmem:[%s11 + $0x150] sm:$0xff]
  %v2080 = vld [vmem:[%s11 + $0x158] sm:$0xff]
  %v2081 = vld [vmem:[%s11 + $0x160] sm:$0xff]
  %v2082 = vld [vmem:[%s11 + $0x168] sm:$0xff]
  %v2083 = vld [vmem:[%s11 + $0x170] sm:$0xff]
  %v2084 = vld [vmem:[%s11 + $0x178] sm:$0xff]
  %v2085 = vld [vmem:[%s11 + $0x180] sm:$0xff]
  %v2086 = vld [vmem:[%s11 + $0x188] sm:$0xff]
  %v2087 = vld [vmem:[%s11 + $0x190] sm:$0xff]
  %v2088 = vld [vmem:[%s11 + $0x198] sm:$0xff]
  %v2089 = vld [vmem:[%s11 + $0x1a0] sm:$0xff]
  %v2090 = vld [vmem:[%s11 + $0x1a8] sm:$0xff]
  %v2091 = vld [vmem:[%s11 + $0x1b0] sm:$0xff]
  %v2092 = vld [vmem:[%s11 + $0x1b8] sm:$0xff]
  %v2093 = vld [vmem:[%s11 + $0x1c0] sm:$0xff]
  %v2094 = vld [vmem:[%s11 + $0x1c8] sm:$0xff]
  %v2095 = vld [vmem:[%s11 + $0x1d0] sm:$0xff]
  %v2096 = vld [vmem:[%s11 + $0x1d8] sm:$0xff]
  %v2097 = vld [vmem:[%s11 + $0x1e0] sm:$0xff]
  %v2098 = vld [vmem:[%s11 + $0x1e8] sm:$0xff]
  %v2099 = vld [vmem:[%s11 + $0x1f0] sm:$0xff]
  %v2100 = vld [vmem:[%s11 + $0x1f8] sm:$0xff]
  %v2101 = vld [vmem:[%s11 + $0x200] sm:$0xff]
  %v2102 = vld [vmem:[%s11 + $0x208] sm:$0xff]
  %v2103 = vld [vmem:[%s11 + $0x210] sm:$0xff]
  %v2104 = vld [vmem:[%s11 + $0x218] sm:$0xff]
  %v2105 = vld [vmem:[%s11 + $0x220] sm:$0xff]
  %v2106 = vld [vmem:[%s11 + $0x228] sm:$0xff]
  %v2107 = vld [vmem:[%s11 + $0x230] sm:$0xff]
  %v2108 = vld [vmem:[%s11 + $0x238] sm:$0xff]
  %s2109 = scalar_lea.vmem %s10, 16
  %v2110 = vld [vmem:[%s2109] sm:$0xff]
  %v2111 = vld [vmem:[%s2109 + $0x8] sm:$0xff]
  %v2113 = vsel %vm972, %v2110, 0
  %v2116 = vsel %vm972, %v2111, 0
  %2118 = vmatpush.msra.mxu0 0.0
  %2119 = vmatpush.msra.mxu0 0.0
  %2120 = vmatpush.msra.mxu0 0.0
  %2121 = vmatpush.msra.mxu0 0.0
  %2122 = vmatpush.msra.mxu0 0.0
  %2123 = vmatpush.msra.mxu0 0.0
  %2124 = vmatpush.msra.mxu0 0.0
  %2125 = vmatpush.msra.mxu0 0.0
  %2126 = vmatpush.msra.mxu0 0.0
  %2127 = vmatpush.msra.mxu0 0.0
  %2128 = vmatpush.msra.mxu0 0.0
  %2129 = vmatpush.msra.mxu0 0.0
  %2130 = vmatpush.msra.mxu0 %v1957
  %2131 = vmatpush.msra.mxu0 %v1954
  %2132 = vmatpush.msra.mxu0 %v1951
  %2133 = vmatpush.msra.mxu0 %v1948
  %2134 = vmatmul.f32.gmra.mxu0 %v2113
  %v2135 = vpop.f32.mrf.mxu0
  %v2136 = vadd.f32 0.0, %v2135
  %2137 = vmatmul.f32.gmra.mxu0 %v2116
  %v2138 = vpop.f32.mrf.mxu0
  %v2139 = vadd.f32 0.0, %v2138
  %2140 = vdwg.mxu0
  %2141 = vmatpush.msra.mxu0 0.0
  %2142 = vmatpush.msra.mxu0 0.0
  %2143 = vmatpush.msra.mxu0 0.0
  %2144 = vmatpush.msra.mxu0 0.0
  %2145 = vmatpush.msra.mxu0 0.0
  %2146 = vmatpush.msra.mxu0 0.0
  %2147 = vmatpush.msra.mxu0 0.0
  %2148 = vmatpush.msra.mxu0 0.0
  %2149 = vmatpush.msra.mxu0 0.0
  %2150 = vmatpush.msra.mxu0 0.0
  %2151 = vmatpush.msra.mxu0 0.0
  %2152 = vmatpush.msra.mxu0 0.0
  %2153 = vmatpush.msra.mxu0 %v1958
  %2154 = vmatpush.msra.mxu0 %v1955
  %2155 = vmatpush.msra.mxu0 %v1952
  %2156 = vmatpush.msra.mxu0 %v1949
  %2157 = vmatmul.f32.gmra.mxu0 %v2113
  %v2158 = vpop.f32.mrf.mxu0
  %v2159 = vadd.f32 0.0, %v2158
  %2160 = vmatmul.f32.gmra.mxu0 %v2116
  %v2161 = vpop.f32.mrf.mxu0
  %v2162 = vadd.f32 0.0, %v2161
  %2163 = vdwg.mxu0
  %2164 = vmatpush.msra.mxu0 0.0
  %2165 = vmatpush.msra.mxu0 0.0
  %2166 = vmatpush.msra.mxu0 0.0
  %2167 = vmatpush.msra.mxu0 0.0
  %2168 = vmatpush.msra.mxu0 0.0
  %2169 = vmatpush.msra.mxu0 0.0
  %2170 = vmatpush.msra.mxu0 0.0
  %2171 = vmatpush.msra.mxu0 0.0
  %2172 = vmatpush.msra.mxu0 0.0
  %2173 = vmatpush.msra.mxu0 0.0
  %2174 = vmatpush.msra.mxu0 0.0
  %2175 = vmatpush.msra.mxu0 0.0
  %2176 = vmatpush.msra.mxu0 %v1959
  %2177 = vmatpush.msra.mxu0 %v1956
  %2178 = vmatpush.msra.mxu0 %v1953
  %2179 = vmatpush.msra.mxu0 %v1950
  %2180 = vmatmul.f32.gmra.mxu0 %v2113
  %v2181 = vpop.f32.mrf.mxu0
  %v2182 = vadd.f32 0.0, %v2181
  %2183 = vmatmul.f32.gmra.mxu0 %v2116
  %v2184 = vpop.f32.mrf.mxu0
  %v2185 = vadd.f32 0.0, %v2184
  %2186 = vdwg.mxu0
  %s2187 = scalar_lea.vmem %s11, 576
  %v2188 = vld [vmem:[%s2187] sm:$0xff]
  %v2189 = vld [vmem:[%s2187 + $0x8] sm:$0xff]
  %v2190 = vld [vmem:[%s2187 + $0x10] sm:$0xff]
  %v2191 = vld [vmem:[%s2187 + $0x18] sm:$0xff]
  %v2192 = vld [vmem:[%s2187 + $0x20] sm:$0xff]
  %v2193 = vld [vmem:[%s2187 + $0x28] sm:$0xff]
  %v2194 = vld [vmem:[%s2187 + $0x30] sm:$0xff]
  %v2195 = vld [vmem:[%s2187 + $0x38] sm:$0xff]
  %v2196 = vld [vmem:[%s2187 + $0x40] sm:$0xff]
  %v2197 = vld [vmem:[%s2187 + $0x48] sm:$0xff]
  %v2198 = vld [vmem:[%s2187 + $0x50] sm:$0xff]
  %v2199 = vld [vmem:[%s2187 + $0x58] sm:$0xff]
  %v2200 = vld [vmem:[%s2187 + $0x60] sm:$0xff]
  %v2201 = vld [vmem:[%s2187 + $0x68] sm:$0xff]
  %v2202 = vld [vmem:[%s2187 + $0x70] sm:$0xff]
  %v2203 = vld [vmem:[%s2187 + $0x78] sm:$0xff]
  %v2204 = vld [vmem:[%s2187 + $0x80] sm:$0xff]
  %v2205 = vld [vmem:[%s2187 + $0x88] sm:$0xff]
  %v2206 = vld [vmem:[%s2187 + $0x90] sm:$0xff]
  %v2207 = vld [vmem:[%s2187 + $0x98] sm:$0xff]
  %v2208 = vld [vmem:[%s2187 + $0xa0] sm:$0xff]
  %v2209 = vld [vmem:[%s2187 + $0xa8] sm:$0xff]
  %v2210 = vld [vmem:[%s2187 + $0xb0] sm:$0xff]
  %v2211 = vld [vmem:[%s2187 + $0xb8] sm:$0xff]
  %v2212 = vld [vmem:[%s2187 + $0xc0] sm:$0xff]
  %v2213 = vld [vmem:[%s2187 + $0xc8] sm:$0xff]
  %v2214 = vld [vmem:[%s2187 + $0xd0] sm:$0xff]
  %v2215 = vld [vmem:[%s2187 + $0xd8] sm:$0xff]
  %v2216 = vld [vmem:[%s2187 + $0xe0] sm:$0xff]
  %v2217 = vld [vmem:[%s2187 + $0xe8] sm:$0xff]
  %v2218 = vld [vmem:[%s2187 + $0xf0] sm:$0xff]
  %v2219 = vld [vmem:[%s2187 + $0xf8] sm:$0xff]
  %v2220 = vld [vmem:[%s2187 + $0x100] sm:$0xff]
  %v2221 = vld [vmem:[%s2187 + $0x108] sm:$0xff]
  %v2222 = vld [vmem:[%s2187 + $0x110] sm:$0xff]
  %v2223 = vld [vmem:[%s2187 + $0x118] sm:$0xff]
  %v2224 = vld [vmem:[%s2187 + $0x120] sm:$0xff]
  %v2225 = vld [vmem:[%s2187 + $0x128] sm:$0xff]
  %v2226 = vld [vmem:[%s2187 + $0x130] sm:$0xff]
  %v2227 = vld [vmem:[%s2187 + $0x138] sm:$0xff]
  %v2228 = vld [vmem:[%s2187 + $0x140] sm:$0xff]
  %v2229 = vld [vmem:[%s2187 + $0x148] sm:$0xff]
  %v2230 = vld [vmem:[%s2187 + $0x150] sm:$0xff]
  %v2231 = vld [vmem:[%s2187 + $0x158] sm:$0xff]
  %v2232 = vld [vmem:[%s2187 + $0x160] sm:$0xff]
  %v2233 = vld [vmem:[%s2187 + $0x168] sm:$0xff]
  %v2234 = vld [vmem:[%s2187 + $0x170] sm:$0xff]
  %v2235 = vld [vmem:[%s2187 + $0x178] sm:$0xff]
  %v2236 = vld [vmem:[%s2187 + $0x180] sm:$0xff]
  %v2237 = vld [vmem:[%s2187 + $0x188] sm:$0xff]
  %v2238 = vld [vmem:[%s2187 + $0x190] sm:$0xff]
  %v2239 = vld [vmem:[%s2187 + $0x198] sm:$0xff]
  %v2240 = vld [vmem:[%s2187 + $0x1a0] sm:$0xff]
  %v2241 = vld [vmem:[%s2187 + $0x1a8] sm:$0xff]
  %v2242 = vld [vmem:[%s2187 + $0x1b0] sm:$0xff]
  %v2243 = vld [vmem:[%s2187 + $0x1b8] sm:$0xff]
  %v2244 = vld [vmem:[%s2187 + $0x1c0] sm:$0xff]
  %v2245 = vld [vmem:[%s2187 + $0x1c8] sm:$0xff]
  %v2246 = vld [vmem:[%s2187 + $0x1d0] sm:$0xff]
  %v2247 = vld [vmem:[%s2187 + $0x1d8] sm:$0xff]
  %v2248 = vld [vmem:[%s2187 + $0x1e0] sm:$0xff]
  %v2249 = vld [vmem:[%s2187 + $0x1e8] sm:$0xff]
  %v2250 = vld [vmem:[%s2187 + $0x1f0] sm:$0xff]
  %v2251 = vld [vmem:[%s2187 + $0x1f8] sm:$0xff]
  %v2252 = vld [vmem:[%s2187 + $0x200] sm:$0xff]
  %v2253 = vld [vmem:[%s2187 + $0x208] sm:$0xff]
  %v2254 = vld [vmem:[%s2187 + $0x210] sm:$0xff]
  %v2255 = vld [vmem:[%s2187 + $0x218] sm:$0xff]
  %v2256 = vld [vmem:[%s2187 + $0x220] sm:$0xff]
  %v2257 = vld [vmem:[%s2187 + $0x228] sm:$0xff]
  %v2258 = vld [vmem:[%s2187 + $0x230] sm:$0xff]
  %v2259 = vld [vmem:[%s2187 + $0x238] sm:$0xff]
  %v2261 = vsel %vm972, %v2182, 0
  %v2264 = vsel %vm972, %v2185, 0
  %2266 = vmatpush.msra.mxu0 %v2218
  %2267 = vmatpush.msra.mxu0 %v2216
  %2268 = vmatpush.msra.mxu0 %v2214
  %2269 = vmatpush.msra.mxu0 %v2212
  %2270 = vmatpush.msra.mxu0 %v2210
  %2271 = vmatpush.msra.mxu0 %v2208
  %2272 = vmatpush.msra.mxu0 %v2206
  %2273 = vmatpush.msra.mxu0 %v2204
  %2274 = vmatpush.msra.mxu0 %v2202
  %2275 = vmatpush.msra.mxu0 %v2200
  %2276 = vmatpush.msra.mxu0 %v2198
  %2277 = vmatpush.msra.mxu0 %v2196
  %2278 = vmatpush.msra.mxu0 %v2194
  %2279 = vmatpush.msra.mxu0 %v2192
  %2280 = vmatpush.msra.mxu0 %v2190
  %2281 = vmatpush.msra.mxu0 %v2188
  %2282 = vmatmul.f32.gmra.mxu0 %v2136
  %v2283 = vpop.f32.mrf.mxu0
  %v2284 = vadd.f32 0.0, %v2283
  %2285 = vmatmul.f32.gmra.mxu0 %v2139
  %v2286 = vpop.f32.mrf.mxu0
  %v2287 = vadd.f32 0.0, %v2286
  %2288 = vdwg.mxu0
  %2289 = vmatpush.msra.mxu0 %v2250
  %2290 = vmatpush.msra.mxu0 %v2248
  %2291 = vmatpush.msra.mxu0 %v2246
  %2292 = vmatpush.msra.mxu0 %v2244
  %2293 = vmatpush.msra.mxu0 %v2242
  %2294 = vmatpush.msra.mxu0 %v2240
  %2295 = vmatpush.msra.mxu0 %v2238
  %2296 = vmatpush.msra.mxu0 %v2236
  %2297 = vmatpush.msra.mxu0 %v2234
  %2298 = vmatpush.msra.mxu0 %v2232
  %2299 = vmatpush.msra.mxu0 %v2230
  %2300 = vmatpush.msra.mxu0 %v2228
  %2301 = vmatpush.msra.mxu0 %v2226
  %2302 = vmatpush.msra.mxu0 %v2224
  %2303 = vmatpush.msra.mxu0 %v2222
  %2304 = vmatpush.msra.mxu0 %v2220
  %2305 = vmatmul.f32.gmra.mxu0 %v2159
  %v2306 = vpop.f32.mrf.mxu0
  %v2307 = vadd.f32 %v2284, %v2306
  %2308 = vmatmul.f32.gmra.mxu0 %v2162
  %v2309 = vpop.f32.mrf.mxu0
  %v2310 = vadd.f32 %v2287, %v2309
  %2311 = vdwg.mxu0
  %2312 = vmatpush.msra.mxu0 0.0
  %2313 = vmatpush.msra.mxu0 0.0
  %2314 = vmatpush.msra.mxu0 0.0
  %2315 = vmatpush.msra.mxu0 0.0
  %2316 = vmatpush.msra.mxu0 0.0
  %2317 = vmatpush.msra.mxu0 0.0
  %2318 = vmatpush.msra.mxu0 0.0
  %2319 = vmatpush.msra.mxu0 0.0
  %2320 = vmatpush.msra.mxu0 0.0
  %2321 = vmatpush.msra.mxu0 0.0
  %2322 = vmatpush.msra.mxu0 0.0
  %2323 = vmatpush.msra.mxu0 0.0
  %2324 = vmatpush.msra.mxu0 %v2258
  %2325 = vmatpush.msra.mxu0 %v2256
  %2326 = vmatpush.msra.mxu0 %v2254
  %2327 = vmatpush.msra.mxu0 %v2252
  %2328 = vmatmul.f32.gmra.mxu0 %v2261
  %v2329 = vpop.f32.mrf.mxu0
  %v2330 = vadd.f32 %v2307, %v2329
  %2331 = vmatmul.f32.gmra.mxu0 %v2264
  %v2332 = vpop.f32.mrf.mxu0
  %v2333 = vadd.f32 %v2310, %v2332
  %2334 = vdwg.mxu0
  %2335 = vmatpush.msra.mxu0 %v2219
  %2336 = vmatpush.msra.mxu0 %v2217
  %2337 = vmatpush.msra.mxu0 %v2215
  %2338 = vmatpush.msra.mxu0 %v2213
  %2339 = vmatpush.msra.mxu0 %v2211
  %2340 = vmatpush.msra.mxu0 %v2209
  %2341 = vmatpush.msra.mxu0 %v2207
  %2342 = vmatpush.msra.mxu0 %v2205
  %2343 = vmatpush.msra.mxu0 %v2203
  %2344 = vmatpush.msra.mxu0 %v2201
  %2345 = vmatpush.msra.mxu0 %v2199
  %2346 = vmatpush.msra.mxu0 %v2197
  %2347 = vmatpush.msra.mxu0 %v2195
  %2348 = vmatpush.msra.mxu0 %v2193
  %2349 = vmatpush.msra.mxu0 %v2191
  %2350 = vmatpush.msra.mxu0 %v2189
  %2351 = vmatmul.f32.gmra.mxu0 %v2136
  %v2352 = vpop.f32.mrf.mxu0
  %v2353 = vadd.f32 0.0, %v2352
  %2354 = vmatmul.f32.gmra.mxu0 %v2139
  %v2355 = vpop.f32.mrf.mxu0
  %v2356 = vadd.f32 0.0, %v2355
  %2357 = vdwg.mxu0
  %2358 = vmatpush.msra.mxu0 %v2251
  %2359 = vmatpush.msra.mxu0 %v2249
  %2360 = vmatpush.msra.mxu0 %v2247
  %2361 = vmatpush.msra.mxu0 %v2245
  %2362 = vmatpush.msra.mxu0 %v2243
  %2363 = vmatpush.msra.mxu0 %v2241
  %2364 = vmatpush.msra.mxu0 %v2239
  %2365 = vmatpush.msra.mxu0 %v2237
  %2366 = vmatpush.msra.mxu0 %v2235
  %2367 = vmatpush.msra.mxu0 %v2233
  %2368 = vmatpush.msra.mxu0 %v2231
  %2369 = vmatpush.msra.mxu0 %v2229
  %2370 = vmatpush.msra.mxu0 %v2227
  %2371 = vmatpush.msra.mxu0 %v2225
  %2372 = vmatpush.msra.mxu0 %v2223
  %2373 = vmatpush.msra.mxu0 %v2221
  %2374 = vmatmul.f32.gmra.mxu0 %v2159
  %v2375 = vpop.f32.mrf.mxu0
  %v2376 = vadd.f32 %v2353, %v2375
  %2377 = vmatmul.f32.gmra.mxu0 %v2162
  %v2378 = vpop.f32.mrf.mxu0
  %v2379 = vadd.f32 %v2356, %v2378
  %2380 = vdwg.mxu0
  %2381 = vmatpush.msra.mxu0 0.0
  %2382 = vmatpush.msra.mxu0 0.0
  %2383 = vmatpush.msra.mxu0 0.0
  %2384 = vmatpush.msra.mxu0 0.0
  %2385 = vmatpush.msra.mxu0 0.0
  %2386 = vmatpush.msra.mxu0 0.0
  %2387 = vmatpush.msra.mxu0 0.0
  %2388 = vmatpush.msra.mxu0 0.0
  %2389 = vmatpush.msra.mxu0 0.0
  %2390 = vmatpush.msra.mxu0 0.0
  %2391 = vmatpush.msra.mxu0 0.0
  %2392 = vmatpush.msra.mxu0 0.0
  %2393 = vmatpush.msra.mxu0 %v2259
  %2394 = vmatpush.msra.mxu0 %v2257
  %2395 = vmatpush.msra.mxu0 %v2255
  %2396 = vmatpush.msra.mxu0 %v2253
  %2397 = vmatmul.f32.gmra.mxu0 %v2261
  %v2398 = vpop.f32.mrf.mxu0
  %v2399 = vadd.f32 %v2376, %v2398
  %2400 = vmatmul.f32.gmra.mxu0 %v2264
  %v2401 = vpop.f32.mrf.mxu0
  %v2402 = vadd.f32 %v2379, %v2401
  %2403 = vdwg.mxu0
  %v2405 = vsel %vm972, %v2032, 0
  %v2408 = vsel %vm972, %v2035, 0
  %2410 = vmatpush.msra.mxu0 %v2067
  %2411 = vmatpush.msra.mxu0 %v2065
  %2412 = vmatpush.msra.mxu0 %v2063
  %2413 = vmatpush.msra.mxu0 %v2061
  %2414 = vmatpush.msra.mxu0 %v2059
  %2415 = vmatpush.msra.mxu0 %v2057
  %2416 = vmatpush.msra.mxu0 %v2055
  %2417 = vmatpush.msra.mxu0 %v2053
  %2418 = vmatpush.msra.mxu0 %v2051
  %2419 = vmatpush.msra.mxu0 %v2049
  %2420 = vmatpush.msra.mxu0 %v2047
  %2421 = vmatpush.msra.mxu0 %v2045
  %2422 = vmatpush.msra.mxu0 %v2043
  %2423 = vmatpush.msra.mxu0 %v2041
  %2424 = vmatpush.msra.mxu0 %v2039
  %2425 = vmatpush.msra.mxu0 %v2037
  %2426 = vmatmul.f32.gmra.mxu0 %v1986
  %v2427 = vpop.f32.mrf.mxu0
  %v2428 = vadd.f32 %v2330, %v2427
  %2429 = vmatmul.f32.gmra.mxu0 %v1989
  %v2430 = vpop.f32.mrf.mxu0
  %v2431 = vadd.f32 %v2333, %v2430
  %2432 = vdwg.mxu0
  %2433 = vmatpush.msra.mxu0 %v2099
  %2434 = vmatpush.msra.mxu0 %v2097
  %2435 = vmatpush.msra.mxu0 %v2095
  %2436 = vmatpush.msra.mxu0 %v2093
  %2437 = vmatpush.msra.mxu0 %v2091
  %2438 = vmatpush.msra.mxu0 %v2089
  %2439 = vmatpush.msra.mxu0 %v2087
  %2440 = vmatpush.msra.mxu0 %v2085
  %2441 = vmatpush.msra.mxu0 %v2083
  %2442 = vmatpush.msra.mxu0 %v2081
  %2443 = vmatpush.msra.mxu0 %v2079
  %2444 = vmatpush.msra.mxu0 %v2077
  %2445 = vmatpush.msra.mxu0 %v2075
  %2446 = vmatpush.msra.mxu0 %v2073
  %2447 = vmatpush.msra.mxu0 %v2071
  %2448 = vmatpush.msra.mxu0 %v2069
  %2449 = vmatmul.f32.gmra.mxu0 %v2009
  %v2450 = vpop.f32.mrf.mxu0
  %v2451 = vadd.f32 %v2428, %v2450
  %2452 = vmatmul.f32.gmra.mxu0 %v2012
  %v2453 = vpop.f32.mrf.mxu0
  %v2454 = vadd.f32 %v2431, %v2453
  %2455 = vdwg.mxu0
  %2456 = vmatpush.msra.mxu0 0.0
  %2457 = vmatpush.msra.mxu0 0.0
  %2458 = vmatpush.msra.mxu0 0.0
  %2459 = vmatpush.msra.mxu0 0.0
  %2460 = vmatpush.msra.mxu0 0.0
  %2461 = vmatpush.msra.mxu0 0.0
  %2462 = vmatpush.msra.mxu0 0.0
  %2463 = vmatpush.msra.mxu0 0.0
  %2464 = vmatpush.msra.mxu0 0.0
  %2465 = vmatpush.msra.mxu0 0.0
  %2466 = vmatpush.msra.mxu0 0.0
  %2467 = vmatpush.msra.mxu0 0.0
  %2468 = vmatpush.msra.mxu0 %v2107
  %2469 = vmatpush.msra.mxu0 %v2105
  %2470 = vmatpush.msra.mxu0 %v2103
  %2471 = vmatpush.msra.mxu0 %v2101
  %2472 = vmatmul.f32.gmra.mxu0 %v2405
  %v2473 = vpop.f32.mrf.mxu0
  %v2474 = vadd.f32 %v2451, %v2473
  %2475 = vmatmul.f32.gmra.mxu0 %v2408
  %v2476 = vpop.f32.mrf.mxu0
  %v2477 = vadd.f32 %v2454, %v2476
  %2478 = vdwg.mxu0
  %2479 = vmatpush.msra.mxu0 %v2068
  %2480 = vmatpush.msra.mxu0 %v2066
  %2481 = vmatpush.msra.mxu0 %v2064
  %2482 = vmatpush.msra.mxu0 %v2062
  %2483 = vmatpush.msra.mxu0 %v2060
  %2484 = vmatpush.msra.mxu0 %v2058
  %2485 = vmatpush.msra.mxu0 %v2056
  %2486 = vmatpush.msra.mxu0 %v2054
  %2487 = vmatpush.msra.mxu0 %v2052
  %2488 = vmatpush.msra.mxu0 %v2050
  %2489 = vmatpush.msra.mxu0 %v2048
  %2490 = vmatpush.msra.mxu0 %v2046
  %2491 = vmatpush.msra.mxu0 %v2044
  %2492 = vmatpush.msra.mxu0 %v2042
  %2493 = vmatpush.msra.mxu0 %v2040
  %2494 = vmatpush.msra.mxu0 %v2038
  %2495 = vmatmul.f32.gmra.mxu0 %v1986
  %v2496 = vpop.f32.mrf.mxu0
  %v2497 = vadd.f32 %v2399, %v2496
  %2498 = vmatmul.f32.gmra.mxu0 %v1989
  %v2499 = vpop.f32.mrf.mxu0
  %v2500 = vadd.f32 %v2402, %v2499
  %2501 = vdwg.mxu0
  %2502 = vmatpush.msra.mxu0 %v2100
  %2503 = vmatpush.msra.mxu0 %v2098
  %2504 = vmatpush.msra.mxu0 %v2096
  %2505 = vmatpush.msra.mxu0 %v2094
  %2506 = vmatpush.msra.mxu0 %v2092
  %2507 = vmatpush.msra.mxu0 %v2090
  %2508 = vmatpush.msra.mxu0 %v2088
  %2509 = vmatpush.msra.mxu0 %v2086
  %2510 = vmatpush.msra.mxu0 %v2084
  %2511 = vmatpush.msra.mxu0 %v2082
  %2512 = vmatpush.msra.mxu0 %v2080
  %2513 = vmatpush.msra.mxu0 %v2078
  %2514 = vmatpush.msra.mxu0 %v2076
  %2515 = vmatpush.msra.mxu0 %v2074
  %2516 = vmatpush.msra.mxu0 %v2072
  %2517 = vmatpush.msra.mxu0 %v2070
  %2518 = vmatmul.f32.gmra.mxu0 %v2009
  %v2519 = vpop.f32.mrf.mxu0
  %v2520 = vadd.f32 %v2497, %v2519
  %2521 = vmatmul.f32.gmra.mxu0 %v2012
  %v2522 = vpop.f32.mrf.mxu0
  %v2523 = vadd.f32 %v2500, %v2522
  %2524 = vdwg.mxu0
  %2525 = vmatpush.msra.mxu0 0.0
  %2526 = vmatpush.msra.mxu0 0.0
  %2527 = vmatpush.msra.mxu0 0.0
  %2528 = vmatpush.msra.mxu0 0.0
  %2529 = vmatpush.msra.mxu0 0.0
  %2530 = vmatpush.msra.mxu0 0.0
  %2531 = vmatpush.msra.mxu0 0.0
  %2532 = vmatpush.msra.mxu0 0.0
  %2533 = vmatpush.msra.mxu0 0.0
  %2534 = vmatpush.msra.mxu0 0.0
  %2535 = vmatpush.msra.mxu0 0.0
  %2536 = vmatpush.msra.mxu0 0.0
  %2537 = vmatpush.msra.mxu0 %v2108
  %2538 = vmatpush.msra.mxu0 %v2106
  %2539 = vmatpush.msra.mxu0 %v2104
  %2540 = vmatpush.msra.mxu0 %v2102
  %2541 = vmatmul.f32.gmra.mxu0 %v2405
  %v2542 = vpop.f32.mrf.mxu0
  %v2543 = vadd.f32 %v2520, %v2542
  %2544 = vmatmul.f32.gmra.mxu0 %v2408
  %v2545 = vpop.f32.mrf.mxu0
  %v2546 = vadd.f32 %v2523, %v2545
  %2547 = vdwg.mxu0
  %s2548 = scalar_lea.vmem %s10, 32
  %v2549 = vld [vmem:[%s2548] sm:$0xff]
  %v2550 = vld [vmem:[%s2548 + $0x8] sm:$0xff]
  %v2552 = vsel %vm972, %v2549, 0
  %v2555 = vsel %vm972, %v2550, 0
  %2557 = vmatpush.msra.mxu0 0.0
  %2558 = vmatpush.msra.mxu0 0.0
  %2559 = vmatpush.msra.mxu0 0.0
  %2560 = vmatpush.msra.mxu0 0.0
  %2561 = vmatpush.msra.mxu0 0.0
  %2562 = vmatpush.msra.mxu0 0.0
  %2563 = vmatpush.msra.mxu0 0.0
  %2564 = vmatpush.msra.mxu0 0.0
  %2565 = vmatpush.msra.mxu0 0.0
  %2566 = vmatpush.msra.mxu0 0.0
  %2567 = vmatpush.msra.mxu0 0.0
  %2568 = vmatpush.msra.mxu0 0.0
  %2569 = vmatpush.msra.mxu0 %v1957
  %2570 = vmatpush.msra.mxu0 %v1954
  %2571 = vmatpush.msra.mxu0 %v1951
  %2572 = vmatpush.msra.mxu0 %v1948
  %2573 = vmatmul.f32.gmra.mxu0 %v2552
  %v2574 = vpop.f32.mrf.mxu0
  %v2575 = vadd.f32 0.0, %v2574
  %2576 = vmatmul.f32.gmra.mxu0 %v2555
  %v2577 = vpop.f32.mrf.mxu0
  %v2578 = vadd.f32 0.0, %v2577
  %2579 = vdwg.mxu0
  %2580 = vmatpush.msra.mxu0 0.0
  %2581 = vmatpush.msra.mxu0 0.0
  %2582 = vmatpush.msra.mxu0 0.0
  %2583 = vmatpush.msra.mxu0 0.0
  %2584 = vmatpush.msra.mxu0 0.0
  %2585 = vmatpush.msra.mxu0 0.0
  %2586 = vmatpush.msra.mxu0 0.0
  %2587 = vmatpush.msra.mxu0 0.0
  %2588 = vmatpush.msra.mxu0 0.0
  %2589 = vmatpush.msra.mxu0 0.0
  %2590 = vmatpush.msra.mxu0 0.0
  %2591 = vmatpush.msra.mxu0 0.0
  %2592 = vmatpush.msra.mxu0 %v1958
  %2593 = vmatpush.msra.mxu0 %v1955
  %2594 = vmatpush.msra.mxu0 %v1952
  %2595 = vmatpush.msra.mxu0 %v1949
  %2596 = vmatmul.f32.gmra.mxu0 %v2552
  %v2597 = vpop.f32.mrf.mxu0
  %v2598 = vadd.f32 0.0, %v2597
  %2599 = vmatmul.f32.gmra.mxu0 %v2555
  %v2600 = vpop.f32.mrf.mxu0
  %v2601 = vadd.f32 0.0, %v2600
  %2602 = vdwg.mxu0
  %2603 = vmatpush.msra.mxu0 0.0
  %2604 = vmatpush.msra.mxu0 0.0
  %2605 = vmatpush.msra.mxu0 0.0
  %2606 = vmatpush.msra.mxu0 0.0
  %2607 = vmatpush.msra.mxu0 0.0
  %2608 = vmatpush.msra.mxu0 0.0
  %2609 = vmatpush.msra.mxu0 0.0
  %2610 = vmatpush.msra.mxu0 0.0
  %2611 = vmatpush.msra.mxu0 0.0
  %2612 = vmatpush.msra.mxu0 0.0
  %2613 = vmatpush.msra.mxu0 0.0
  %2614 = vmatpush.msra.mxu0 0.0
  %2615 = vmatpush.msra.mxu0 %v1959
  %2616 = vmatpush.msra.mxu0 %v1956
  %2617 = vmatpush.msra.mxu0 %v1953
  %2618 = vmatpush.msra.mxu0 %v1950
  %2619 = vmatmul.f32.gmra.mxu0 %v2552
  %v2620 = vpop.f32.mrf.mxu0
  %v2621 = vadd.f32 0.0, %v2620
  %2622 = vmatmul.f32.gmra.mxu0 %v2555
  %v2623 = vpop.f32.mrf.mxu0
  %v2624 = vadd.f32 0.0, %v2623
  %2625 = vdwg.mxu0
  %s2626 = scalar_lea.vmem %s11, 1152
  %v2627 = vld [vmem:[%s2626] sm:$0xff]
  %v2628 = vld [vmem:[%s2626 + $0x8] sm:$0xff]
  %v2629 = vld [vmem:[%s2626 + $0x10] sm:$0xff]
  %v2630 = vld [vmem:[%s2626 + $0x18] sm:$0xff]
  %v2631 = vld [vmem:[%s2626 + $0x20] sm:$0xff]
  %v2632 = vld [vmem:[%s2626 + $0x28] sm:$0xff]
  %v2633 = vld [vmem:[%s2626 + $0x30] sm:$0xff]
  %v2634 = vld [vmem:[%s2626 + $0x38] sm:$0xff]
  %v2635 = vld [vmem:[%s2626 + $0x40] sm:$0xff]
  %v2636 = vld [vmem:[%s2626 + $0x48] sm:$0xff]
  %v2637 = vld [vmem:[%s2626 + $0x50] sm:$0xff]
  %v2638 = vld [vmem:[%s2626 + $0x58] sm:$0xff]
  %v2639 = vld [vmem:[%s2626 + $0x60] sm:$0xff]
  %v2640 = vld [vmem:[%s2626 + $0x68] sm:$0xff]
  %v2641 = vld [vmem:[%s2626 + $0x70] sm:$0xff]
  %v2642 = vld [vmem:[%s2626 + $0x78] sm:$0xff]
  %v2643 = vld [vmem:[%s2626 + $0x80] sm:$0xff]
  %v2644 = vld [vmem:[%s2626 + $0x88] sm:$0xff]
  %v2645 = vld [vmem:[%s2626 + $0x90] sm:$0xff]
  %v2646 = vld [vmem:[%s2626 + $0x98] sm:$0xff]
  %v2647 = vld [vmem:[%s2626 + $0xa0] sm:$0xff]
  %v2648 = vld [vmem:[%s2626 + $0xa8] sm:$0xff]
  %v2649 = vld [vmem:[%s2626 + $0xb0] sm:$0xff]
  %v2650 = vld [vmem:[%s2626 + $0xb8] sm:$0xff]
  %v2651 = vld [vmem:[%s2626 + $0xc0] sm:$0xff]
  %v2652 = vld [vmem:[%s2626 + $0xc8] sm:$0xff]
  %v2653 = vld [vmem:[%s2626 + $0xd0] sm:$0xff]
  %v2654 = vld [vmem:[%s2626 + $0xd8] sm:$0xff]
  %v2655 = vld [vmem:[%s2626 + $0xe0] sm:$0xff]
  %v2656 = vld [vmem:[%s2626 + $0xe8] sm:$0xff]
  %v2657 = vld [vmem:[%s2626 + $0xf0] sm:$0xff]
  %v2658 = vld [vmem:[%s2626 + $0xf8] sm:$0xff]
  %v2659 = vld [vmem:[%s2626 + $0x100] sm:$0xff]
  %v2660 = vld [vmem:[%s2626 + $0x108] sm:$0xff]
  %v2661 = vld [vmem:[%s2626 + $0x110] sm:$0xff]
  %v2662 = vld [vmem:[%s2626 + $0x118] sm:$0xff]
  %v2663 = vld [vmem:[%s2626 + $0x120] sm:$0xff]
  %v2664 = vld [vmem:[%s2626 + $0x128] sm:$0xff]
  %v2665 = vld [vmem:[%s2626 + $0x130] sm:$0xff]
  %v2666 = vld [vmem:[%s2626 + $0x138] sm:$0xff]
  %v2667 = vld [vmem:[%s2626 + $0x140] sm:$0xff]
  %v2668 = vld [vmem:[%s2626 + $0x148] sm:$0xff]
  %v2669 = vld [vmem:[%s2626 + $0x150] sm:$0xff]
  %v2670 = vld [vmem:[%s2626 + $0x158] sm:$0xff]
  %v2671 = vld [vmem:[%s2626 + $0x160] sm:$0xff]
  %v2672 = vld [vmem:[%s2626 + $0x168] sm:$0xff]
  %v2673 = vld [vmem:[%s2626 + $0x170] sm:$0xff]
  %v2674 = vld [vmem:[%s2626 + $0x178] sm:$0xff]
  %v2675 = vld [vmem:[%s2626 + $0x180] sm:$0xff]
  %v2676 = vld [vmem:[%s2626 + $0x188] sm:$0xff]
  %v2677 = vld [vmem:[%s2626 + $0x190] sm:$0xff]
  %v2678 = vld [vmem:[%s2626 + $0x198] sm:$0xff]
  %v2679 = vld [vmem:[%s2626 + $0x1a0] sm:$0xff]
  %v2680 = vld [vmem:[%s2626 + $0x1a8] sm:$0xff]
  %v2681 = vld [vmem:[%s2626 + $0x1b0] sm:$0xff]
  %v2682 = vld [vmem:[%s2626 + $0x1b8] sm:$0xff]
  %v2683 = vld [vmem:[%s2626 + $0x1c0] sm:$0xff]
  %v2684 = vld [vmem:[%s2626 + $0x1c8] sm:$0xff]
  %v2685 = vld [vmem:[%s2626 + $0x1d0] sm:$0xff]
  %v2686 = vld [vmem:[%s2626 + $0x1d8] sm:$0xff]
  %v2687 = vld [vmem:[%s2626 + $0x1e0] sm:$0xff]
  %v2688 = vld [vmem:[%s2626 + $0x1e8] sm:$0xff]
  %v2689 = vld [vmem:[%s2626 + $0x1f0] sm:$0xff]
  %v2690 = vld [vmem:[%s2626 + $0x1f8] sm:$0xff]
  %v2691 = vld [vmem:[%s2626 + $0x200] sm:$0xff]
  %v2692 = vld [vmem:[%s2626 + $0x208] sm:$0xff]
  %v2693 = vld [vmem:[%s2626 + $0x210] sm:$0xff]
  %v2694 = vld [vmem:[%s2626 + $0x218] sm:$0xff]
  %v2695 = vld [vmem:[%s2626 + $0x220] sm:$0xff]
  %v2696 = vld [vmem:[%s2626 + $0x228] sm:$0xff]
  %v2697 = vld [vmem:[%s2626 + $0x230] sm:$0xff]
  %v2698 = vld [vmem:[%s2626 + $0x238] sm:$0xff]
  %v2700 = vsel %vm972, %v2621, 0
  %v2703 = vsel %vm972, %v2624, 0
  %2705 = vmatpush.msra.mxu0 %v2657
  %2706 = vmatpush.msra.mxu0 %v2655
  %2707 = vmatpush.msra.mxu0 %v2653
  %2708 = vmatpush.msra.mxu0 %v2651
  %2709 = vmatpush.msra.mxu0 %v2649
  %2710 = vmatpush.msra.mxu0 %v2647
  %2711 = vmatpush.msra.mxu0 %v2645
  %2712 = vmatpush.msra.mxu0 %v2643
  %2713 = vmatpush.msra.mxu0 %v2641
  %2714 = vmatpush.msra.mxu0 %v2639
  %2715 = vmatpush.msra.mxu0 %v2637
  %2716 = vmatpush.msra.mxu0 %v2635
  %2717 = vmatpush.msra.mxu0 %v2633
  %2718 = vmatpush.msra.mxu0 %v2631
  %2719 = vmatpush.msra.mxu0 %v2629
  %2720 = vmatpush.msra.mxu0 %v2627
  %2721 = vmatmul.f32.gmra.mxu0 %v2575
  %v2722 = vpop.f32.mrf.mxu0
  %v2723 = vadd.f32 0.0, %v2722
  %2724 = vmatmul.f32.gmra.mxu0 %v2578
  %v2725 = vpop.f32.mrf.mxu0
  %v2726 = vadd.f32 0.0, %v2725
  %2727 = vdwg.mxu0
  %2728 = vmatpush.msra.mxu0 %v2689
  %2729 = vmatpush.msra.mxu0 %v2687
  %2730 = vmatpush.msra.mxu0 %v2685
  %2731 = vmatpush.msra.mxu0 %v2683
  %2732 = vmatpush.msra.mxu0 %v2681
  %2733 = vmatpush.msra.mxu0 %v2679
  %2734 = vmatpush.msra.mxu0 %v2677
  %2735 = vmatpush.msra.mxu0 %v2675
  %2736 = vmatpush.msra.mxu0 %v2673
  %2737 = vmatpush.msra.mxu0 %v2671
  %2738 = vmatpush.msra.mxu0 %v2669
  %2739 = vmatpush.msra.mxu0 %v2667
  %2740 = vmatpush.msra.mxu0 %v2665
  %2741 = vmatpush.msra.mxu0 %v2663
  %2742 = vmatpush.msra.mxu0 %v2661
  %2743 = vmatpush.msra.mxu0 %v2659
  %2744 = vmatmul.f32.gmra.mxu0 %v2598
  %v2745 = vpop.f32.mrf.mxu0
  %v2746 = vadd.f32 %v2723, %v2745
  %2747 = vmatmul.f32.gmra.mxu0 %v2601
  %v2748 = vpop.f32.mrf.mxu0
  %v2749 = vadd.f32 %v2726, %v2748
  %2750 = vdwg.mxu0
  %2751 = vmatpush.msra.mxu0 0.0
  %2752 = vmatpush.msra.mxu0 0.0
  %2753 = vmatpush.msra.mxu0 0.0
  %2754 = vmatpush.msra.mxu0 0.0
  %2755 = vmatpush.msra.mxu0 0.0
  %2756 = vmatpush.msra.mxu0 0.0
  %2757 = vmatpush.msra.mxu0 0.0
  %2758 = vmatpush.msra.mxu0 0.0
  %2759 = vmatpush.msra.mxu0 0.0
  %2760 = vmatpush.msra.mxu0 0.0
  %2761 = vmatpush.msra.mxu0 0.0
  %2762 = vmatpush.msra.mxu0 0.0
  %2763 = vmatpush.msra.mxu0 %v2697
  %2764 = vmatpush.msra.mxu0 %v2695
  %2765 = vmatpush.msra.mxu0 %v2693
  %2766 = vmatpush.msra.mxu0 %v2691
  %2767 = vmatmul.f32.gmra.mxu0 %v2700
  %v2768 = vpop.f32.mrf.mxu0
  %v2769 = vadd.f32 %v2746, %v2768
  %2770 = vmatmul.f32.gmra.mxu0 %v2703
  %v2771 = vpop.f32.mrf.mxu0
  %v2772 = vadd.f32 %v2749, %v2771
  %2773 = vdwg.mxu0
  %2774 = vmatpush.msra.mxu0 %v2658
  %2775 = vmatpush.msra.mxu0 %v2656
  %2776 = vmatpush.msra.mxu0 %v2654
  %2777 = vmatpush.msra.mxu0 %v2652
  %2778 = vmatpush.msra.mxu0 %v2650
  %2779 = vmatpush.msra.mxu0 %v2648
  %2780 = vmatpush.msra.mxu0 %v2646
  %2781 = vmatpush.msra.mxu0 %v2644
  %2782 = vmatpush.msra.mxu0 %v2642
  %2783 = vmatpush.msra.mxu0 %v2640
  %2784 = vmatpush.msra.mxu0 %v2638
  %2785 = vmatpush.msra.mxu0 %v2636
  %2786 = vmatpush.msra.mxu0 %v2634
  %2787 = vmatpush.msra.mxu0 %v2632
  %2788 = vmatpush.msra.mxu0 %v2630
  %2789 = vmatpush.msra.mxu0 %v2628
  %2790 = vmatmul.f32.gmra.mxu0 %v2575
  %v2791 = vpop.f32.mrf.mxu0
  %v2792 = vadd.f32 0.0, %v2791
  %2793 = vmatmul.f32.gmra.mxu0 %v2578
  %v2794 = vpop.f32.mrf.mxu0
  %v2795 = vadd.f32 0.0, %v2794
  %2796 = vdwg.mxu0
  %2797 = vmatpush.msra.mxu0 %v2690
  %2798 = vmatpush.msra.mxu0 %v2688
  %2799 = vmatpush.msra.mxu0 %v2686
  %2800 = vmatpush.msra.mxu0 %v2684
  %2801 = vmatpush.msra.mxu0 %v2682
  %2802 = vmatpush.msra.mxu0 %v2680
  %2803 = vmatpush.msra.mxu0 %v2678
  %2804 = vmatpush.msra.mxu0 %v2676
  %2805 = vmatpush.msra.mxu0 %v2674
  %2806 = vmatpush.msra.mxu0 %v2672
  %2807 = vmatpush.msra.mxu0 %v2670
  %2808 = vmatpush.msra.mxu0 %v2668
  %2809 = vmatpush.msra.mxu0 %v2666
  %2810 = vmatpush.msra.mxu0 %v2664
  %2811 = vmatpush.msra.mxu0 %v2662
  %2812 = vmatpush.msra.mxu0 %v2660
  %2813 = vmatmul.f32.gmra.mxu0 %v2598
  %v2814 = vpop.f32.mrf.mxu0
  %v2815 = vadd.f32 %v2792, %v2814
  %2816 = vmatmul.f32.gmra.mxu0 %v2601
  %v2817 = vpop.f32.mrf.mxu0
  %v2818 = vadd.f32 %v2795, %v2817
  %2819 = vdwg.mxu0
  %2820 = vmatpush.msra.mxu0 0.0
  %2821 = vmatpush.msra.mxu0 0.0
  %2822 = vmatpush.msra.mxu0 0.0
  %2823 = vmatpush.msra.mxu0 0.0
  %2824 = vmatpush.msra.mxu0 0.0
  %2825 = vmatpush.msra.mxu0 0.0
  %2826 = vmatpush.msra.mxu0 0.0
  %2827 = vmatpush.msra.mxu0 0.0
  %2828 = vmatpush.msra.mxu0 0.0
  %2829 = vmatpush.msra.mxu0 0.0
  %2830 = vmatpush.msra.mxu0 0.0
  %2831 = vmatpush.msra.mxu0 0.0
  %2832 = vmatpush.msra.mxu0 %v2698
  %2833 = vmatpush.msra.mxu0 %v2696
  %2834 = vmatpush.msra.mxu0 %v2694
  %2835 = vmatpush.msra.mxu0 %v2692
  %2836 = vmatmul.f32.gmra.mxu0 %v2700
  %v2837 = vpop.f32.mrf.mxu0
  %v2838 = vadd.f32 %v2815, %v2837
  %2839 = vmatmul.f32.gmra.mxu0 %v2703
  %v2840 = vpop.f32.mrf.mxu0
  %v2841 = vadd.f32 %v2818, %v2840
  %2842 = vdwg.mxu0
  %v2843 = vadd.f32 %v2474, %v2769
  %v2844 = vadd.f32 %v2543, %v2838
  %v2845 = vadd.f32 %v2477, %v2772
  %v2846 = vadd.f32 %v2546, %v2841
  %v2847 = vld [vmem:[%s12] sm:$0x3]
  %v2849 = vperm.slane %v2847, 0
  %v2850 = vperm.slane %v2847, 1
  %v2853 = vadd.f32 %v2843, %v2849
  %v2854 = vadd.f32 %v2844, %v2850
  %v2855 = vadd.f32 %v2845, %v2849
  %v2856 = vadd.f32 %v2846, %v2850
  %v2857 = vmax.f32 %v2853, 0.0
  %v2858 = vmax.f32 %v2854, 0.0
  %v2859 = vmax.f32 %v2855, 0.0
  %v2860 = vmax.f32 %v2856, 0.0
  %v2861 = vld [vmem:[%s13] sm:$0xf]
  %v2863 = vsel %vm1227, %v2861, 0
  %2865 = vmatpush.msra.mxu0 0.0
  %2866 = vmatpush.msra.mxu0 0.0
  %2867 = vmatpush.msra.mxu0 0.0
  %2868 = vmatpush.msra.mxu0 0.0
  %2869 = vmatpush.msra.mxu0 0.0
  %2870 = vmatpush.msra.mxu0 0.0
  %2871 = vmatpush.msra.mxu0 0.0
  %2872 = vmatpush.msra.mxu0 0.0
  %2873 = vmatpush.msra.mxu0 0.0
  %2874 = vmatpush.msra.mxu0 0.0
  %2875 = vmatpush.msra.mxu0 0.0
  %2876 = vmatpush.msra.mxu0 0.0
  %2877 = vmatpush.msra.mxu0 0.0
  %2878 = vmatpush.msra.mxu0 0.0
  %2879 = vmatpush.msra.mxu0 %v2859
  %2880 = vmatpush.msra.mxu0 %v2857
  %2881 = vmatmul.f32.gmra.mxu0 %v2863
  %v2882 = vpop.f32.mrf.mxu0
  %v2883 = vadd.f32 0.0, %v2882
  %2884 = vdwg.mxu0
  %2885 = vmatpush.msra.mxu0 0.0
  %2886 = vmatpush.msra.mxu0 0.0
  %2887 = vmatpush.msra.mxu0 0.0
  %2888 = vmatpush.msra.mxu0 0.0
  %2889 = vmatpush.msra.mxu0 0.0
  %2890 = vmatpush.msra.mxu0 0.0
  %2891 = vmatpush.msra.mxu0 0.0
  %2892 = vmatpush.msra.mxu0 0.0
  %2893 = vmatpush.msra.mxu0 0.0
  %2894 = vmatpush.msra.mxu0 0.0
  %2895 = vmatpush.msra.mxu0 0.0
  %2896 = vmatpush.msra.mxu0 0.0
  %2897 = vmatpush.msra.mxu0 0.0
  %2898 = vmatpush.msra.mxu0 0.0
  %2899 = vmatpush.msra.mxu0 %v2860
  %2900 = vmatpush.msra.mxu0 %v2858
  %2901 = vmatmul.f32.gmra.mxu0 %v2863
  %v2902 = vpop.f32.mrf.mxu0
  %v2903 = vadd.f32 0.0, %v2902
  %2904 = vdwg.mxu0
  %v2905 = vld [vmem:[%s14] sm:$0xff]
  %v2906 = vld [vmem:[%s14 + $0x8] sm:$0xff]
  %v2907 = vld [vmem:[%s14 + $0x10] sm:$0xff]
  %v2908 = vld [vmem:[%s14 + $0x18] sm:$0xff]
  %v2909 = vld [vmem:[%s14 + $0x20] sm:$0xff]
  %v2910 = vld [vmem:[%s14 + $0x28] sm:$0xff]
  %v2911 = vld [vmem:[%s14 + $0x30] sm:$0xff]
  %v2912 = vld [vmem:[%s14 + $0x38] sm:$0xff]
  %v2913 = vld [vmem:[%s14 + $0x40] sm:$0xff]
  %v2914 = vld [vmem:[%s14 + $0x48] sm:$0xff]
  %v2915 = vld [vmem:[%s14 + $0x50] sm:$0xff]
  %v2916 = vld [vmem:[%s14 + $0x58] sm:$0xff]
  %v2917 = vld [vmem:[%s14 + $0x60] sm:$0xff]
  %v2918 = vld [vmem:[%s14 + $0x68] sm:$0xff]
  %v2919 = vld [vmem:[%s14 + $0x70] sm:$0xff]
  %v2920 = vld [vmem:[%s14 + $0x78] sm:$0xff]
  %v2921 = vld [vmem:[%s14 + $0x80] sm:$0xff]
  %v2922 = vld [vmem:[%s14 + $0x88] sm:$0xff]
  %v2923 = vld [vmem:[%s14 + $0x90] sm:$0xff]
  %v2924 = vld [vmem:[%s14 + $0x98] sm:$0xff]
  %v2925 = vld [vmem:[%s14 + $0xa0] sm:$0xff]
  %v2926 = vld [vmem:[%s14 + $0xa8] sm:$0xff]
  %v2927 = vld [vmem:[%s14 + $0xb0] sm:$0xff]
  %v2928 = vld [vmem:[%s14 + $0xb8] sm:$0xff]
  %s2929 = scalar_lea.vmem %s13, 4
  %v2930 = vld [vmem:[%s2929] sm:$0xf]
  %v2932 = vsel %vm1227, %v2930, 0
  %2934 = vmatpush.msra.mxu0 0.0
  %2935 = vmatpush.msra.mxu0 0.0
  %2936 = vmatpush.msra.mxu0 0.0
  %2937 = vmatpush.msra.mxu0 0.0
  %2938 = vmatpush.msra.mxu0 0.0
  %2939 = vmatpush.msra.mxu0 0.0
  %2940 = vmatpush.msra.mxu0 0.0
  %2941 = vmatpush.msra.mxu0 0.0
  %2942 = vmatpush.msra.mxu0 0.0
  %2943 = vmatpush.msra.mxu0 0.0
  %2944 = vmatpush.msra.mxu0 0.0
  %2945 = vmatpush.msra.mxu0 0.0
  %2946 = vmatpush.msra.mxu0 0.0
  %2947 = vmatpush.msra.mxu0 0.0
  %2948 = vmatpush.msra.mxu0 %v2859
  %2949 = vmatpush.msra.mxu0 %v2857
  %2950 = vmatmul.f32.gmra.mxu0 %v2932
  %v2951 = vpop.f32.mrf.mxu0
  %v2952 = vadd.f32 0.0, %v2951
  %2953 = vdwg.mxu0
  %2954 = vmatpush.msra.mxu0 0.0
  %2955 = vmatpush.msra.mxu0 0.0
  %2956 = vmatpush.msra.mxu0 0.0
  %2957 = vmatpush.msra.mxu0 0.0
  %2958 = vmatpush.msra.mxu0 0.0
  %2959 = vmatpush.msra.mxu0 0.0
  %2960 = vmatpush.msra.mxu0 0.0
  %2961 = vmatpush.msra.mxu0 0.0
  %2962 = vmatpush.msra.mxu0 0.0
  %2963 = vmatpush.msra.mxu0 0.0
  %2964 = vmatpush.msra.mxu0 0.0
  %2965 = vmatpush.msra.mxu0 0.0
  %2966 = vmatpush.msra.mxu0 0.0
  %2967 = vmatpush.msra.mxu0 0.0
  %2968 = vmatpush.msra.mxu0 %v2860
  %2969 = vmatpush.msra.mxu0 %v2858
  %2970 = vmatmul.f32.gmra.mxu0 %v2932
  %v2971 = vpop.f32.mrf.mxu0
  %v2972 = vadd.f32 0.0, %v2971
  %2973 = vdwg.mxu0
  %s2974 = scalar_lea.vmem %s14, 192
  %v2975 = vld [vmem:[%s2974] sm:$0xff]
  %v2976 = vld [vmem:[%s2974 + $0x8] sm:$0xff]
  %v2977 = vld [vmem:[%s2974 + $0x10] sm:$0xff]
  %v2978 = vld [vmem:[%s2974 + $0x18] sm:$0xff]
  %v2979 = vld [vmem:[%s2974 + $0x20] sm:$0xff]
  %v2980 = vld [vmem:[%s2974 + $0x28] sm:$0xff]
  %v2981 = vld [vmem:[%s2974 + $0x30] sm:$0xff]
  %v2982 = vld [vmem:[%s2974 + $0x38] sm:$0xff]
  %v2983 = vld [vmem:[%s2974 + $0x40] sm:$0xff]
  %v2984 = vld [vmem:[%s2974 + $0x48] sm:$0xff]
  %v2985 = vld [vmem:[%s2974 + $0x50] sm:$0xff]
  %v2986 = vld [vmem:[%s2974 + $0x58] sm:$0xff]
  %v2987 = vld [vmem:[%s2974 + $0x60] sm:$0xff]
  %v2988 = vld [vmem:[%s2974 + $0x68] sm:$0xff]
  %v2989 = vld [vmem:[%s2974 + $0x70] sm:$0xff]
  %v2990 = vld [vmem:[%s2974 + $0x78] sm:$0xff]
  %v2991 = vld [vmem:[%s2974 + $0x80] sm:$0xff]
  %v2992 = vld [vmem:[%s2974 + $0x88] sm:$0xff]
  %v2993 = vld [vmem:[%s2974 + $0x90] sm:$0xff]
  %v2994 = vld [vmem:[%s2974 + $0x98] sm:$0xff]
  %v2995 = vld [vmem:[%s2974 + $0xa0] sm:$0xff]
  %v2996 = vld [vmem:[%s2974 + $0xa8] sm:$0xff]
  %v2997 = vld [vmem:[%s2974 + $0xb0] sm:$0xff]
  %v2998 = vld [vmem:[%s2974 + $0xb8] sm:$0xff]
  %v3000 = vsel %vm69, %v2972, 0
  %3002 = vmatpush.msra.mxu0 %v2990
  %3003 = vmatpush.msra.mxu0 %v2989
  %3004 = vmatpush.msra.mxu0 %v2988
  %3005 = vmatpush.msra.mxu0 %v2987
  %3006 = vmatpush.msra.mxu0 %v2986
  %3007 = vmatpush.msra.mxu0 %v2985
  %3008 = vmatpush.msra.mxu0 %v2984
  %3009 = vmatpush.msra.mxu0 %v2983
  %3010 = vmatpush.msra.mxu0 %v2982
  %3011 = vmatpush.msra.mxu0 %v2981
  %3012 = vmatpush.msra.mxu0 %v2980
  %3013 = vmatpush.msra.mxu0 %v2979
  %3014 = vmatpush.msra.mxu0 %v2978
  %3015 = vmatpush.msra.mxu0 %v2977
  %3016 = vmatpush.msra.mxu0 %v2976
  %3017 = vmatpush.msra.mxu0 %v2975
  %3018 = vmatmul.f32.gmra.mxu0 %v2952
  %v3019 = vpop.f32.mrf.mxu0
  %v3020 = vadd.f32 0.0, %v3019
  %3021 = vdwg.mxu0
  %3022 = vmatpush.msra.mxu0 0.0
  %3023 = vmatpush.msra.mxu0 0.0
  %3024 = vmatpush.msra.mxu0 0.0
  %3025 = vmatpush.msra.mxu0 0.0
  %3026 = vmatpush.msra.mxu0 0.0
  %3027 = vmatpush.msra.mxu0 0.0
  %3028 = vmatpush.msra.mxu0 0.0
  %3029 = vmatpush.msra.mxu0 0.0
  %3030 = vmatpush.msra.mxu0 %v2998
  %3031 = vmatpush.msra.mxu0 %v2997
  %3032 = vmatpush.msra.mxu0 %v2996
  %3033 = vmatpush.msra.mxu0 %v2995
  %3034 = vmatpush.msra.mxu0 %v2994
  %3035 = vmatpush.msra.mxu0 %v2993
  %3036 = vmatpush.msra.mxu0 %v2992
  %3037 = vmatpush.msra.mxu0 %v2991
  %3038 = vmatmul.f32.gmra.mxu0 %v3000
  %v3039 = vpop.f32.mrf.mxu0
  %v3040 = vadd.f32 %v3020, %v3039
  %3041 = vdwg.mxu0
  %v3043 = vsel %vm69, %v2903, 0
  %3045 = vmatpush.msra.mxu0 %v2920
  %3046 = vmatpush.msra.mxu0 %v2919
  %3047 = vmatpush.msra.mxu0 %v2918
  %3048 = vmatpush.msra.mxu0 %v2917
  %3049 = vmatpush.msra.mxu0 %v2916
  %3050 = vmatpush.msra.mxu0 %v2915
  %3051 = vmatpush.msra.mxu0 %v2914
  %3052 = vmatpush.msra.mxu0 %v2913
  %3053 = vmatpush.msra.mxu0 %v2912
  %3054 = vmatpush.msra.mxu0 %v2911
  %3055 = vmatpush.msra.mxu0 %v2910
  %3056 = vmatpush.msra.mxu0 %v2909
  %3057 = vmatpush.msra.mxu0 %v2908
  %3058 = vmatpush.msra.mxu0 %v2907
  %3059 = vmatpush.msra.mxu0 %v2906
  %3060 = vmatpush.msra.mxu0 %v2905
  %3061 = vmatmul.f32.gmra.mxu0 %v2883
  %v3062 = vpop.f32.mrf.mxu0
  %v3063 = vadd.f32 %v3040, %v3062
  %3064 = vdwg.mxu0
  %3065 = vmatpush.msra.mxu0 0.0
  %3066 = vmatpush.msra.mxu0 0.0
  %3067 = vmatpush.msra.mxu0 0.0
  %3068 = vmatpush.msra.mxu0 0.0
  %3069 = vmatpush.msra.mxu0 0.0
  %3070 = vmatpush.msra.mxu0 0.0
  %3071 = vmatpush.msra.mxu0 0.0
  %3072 = vmatpush.msra.mxu0 0.0
  %3073 = vmatpush.msra.mxu0 %v2928
  %3074 = vmatpush.msra.mxu0 %v2927
  %3075 = vmatpush.msra.mxu0 %v2926
  %3076 = vmatpush.msra.mxu0 %v2925
  %3077 = vmatpush.msra.mxu0 %v2924
  %3078 = vmatpush.msra.mxu0 %v2923
  %3079 = vmatpush.msra.mxu0 %v2922
  %3080 = vmatpush.msra.mxu0 %v2921
  %3081 = vmatmul.f32.gmra.mxu0 %v3043
  %v3082 = vpop.f32.mrf.mxu0
  %v3083 = vadd.f32 %v3063, %v3082
  %3084 = vdwg.mxu0
  %s3085 = scalar_lea.vmem %s13, 8
  %v3086 = vld [vmem:[%s3085] sm:$0xf]
  %v3088 = vsel %vm1227, %v3086, 0
  %3090 = vmatpush.msra.mxu0 0.0
  %3091 = vmatpush.msra.mxu0 0.0
  %3092 = vmatpush.msra.mxu0 0.0
  %3093 = vmatpush.msra.mxu0 0.0
  %3094 = vmatpush.msra.mxu0 0.0
  %3095 = vmatpush.msra.mxu0 0.0
  %3096 = vmatpush.msra.mxu0 0.0
  %3097 = vmatpush.msra.mxu0 0.0
  %3098 = vmatpush.msra.mxu0 0.0
  %3099 = vmatpush.msra.mxu0 0.0
  %3100 = vmatpush.msra.mxu0 0.0
  %3101 = vmatpush.msra.mxu0 0.0
  %3102 = vmatpush.msra.mxu0 0.0
  %3103 = vmatpush.msra.mxu0 0.0
  %3104 = vmatpush.msra.mxu0 %v2859
  %3105 = vmatpush.msra.mxu0 %v2857
  %3106 = vmatmul.f32.gmra.mxu0 %v3088
  %v3107 = vpop.f32.mrf.mxu0
  %v3108 = vadd.f32 0.0, %v3107
  %3109 = vdwg.mxu0
  %3110 = vmatpush.msra.mxu0 0.0
  %3111 = vmatpush.msra.mxu0 0.0
  %3112 = vmatpush.msra.mxu0 0.0
  %3113 = vmatpush.msra.mxu0 0.0
  %3114 = vmatpush.msra.mxu0 0.0
  %3115 = vmatpush.msra.mxu0 0.0
  %3116 = vmatpush.msra.mxu0 0.0
  %3117 = vmatpush.msra.mxu0 0.0
  %3118 = vmatpush.msra.mxu0 0.0
  %3119 = vmatpush.msra.mxu0 0.0
  %3120 = vmatpush.msra.mxu0 0.0
  %3121 = vmatpush.msra.mxu0 0.0
  %3122 = vmatpush.msra.mxu0 0.0
  %3123 = vmatpush.msra.mxu0 0.0
  %3124 = vmatpush.msra.mxu0 %v2860
  %3125 = vmatpush.msra.mxu0 %v2858
  %3126 = vmatmul.f32.gmra.mxu0 %v3088
  %v3127 = vpop.f32.mrf.mxu0
  %v3128 = vadd.f32 0.0, %v3127
  %3129 = vdwg.mxu0
  %s3130 = scalar_lea.vmem %s14, 384
  %v3131 = vld [vmem:[%s3130] sm:$0xff]
  %v3132 = vld [vmem:[%s3130 + $0x8] sm:$0xff]
  %v3133 = vld [vmem:[%s3130 + $0x10] sm:$0xff]
  %v3134 = vld [vmem:[%s3130 + $0x18] sm:$0xff]
  %v3135 = vld [vmem:[%s3130 + $0x20] sm:$0xff]
  %v3136 = vld [vmem:[%s3130 + $0x28] sm:$0xff]
  %v3137 = vld [vmem:[%s3130 + $0x30] sm:$0xff]
  %v3138 = vld [vmem:[%s3130 + $0x38] sm:$0xff]
  %v3139 = vld [vmem:[%s3130 + $0x40] sm:$0xff]
  %v3140 = vld [vmem:[%s3130 + $0x48] sm:$0xff]
  %v3141 = vld [vmem:[%s3130 + $0x50] sm:$0xff]
  %v3142 = vld [vmem:[%s3130 + $0x58] sm:$0xff]
  %v3143 = vld [vmem:[%s3130 + $0x60] sm:$0xff]
  %v3144 = vld [vmem:[%s3130 + $0x68] sm:$0xff]
  %v3145 = vld [vmem:[%s3130 + $0x70] sm:$0xff]
  %v3146 = vld [vmem:[%s3130 + $0x78] sm:$0xff]
  %v3147 = vld [vmem:[%s3130 + $0x80] sm:$0xff]
  %v3148 = vld [vmem:[%s3130 + $0x88] sm:$0xff]
  %v3149 = vld [vmem:[%s3130 + $0x90] sm:$0xff]
  %v3150 = vld [vmem:[%s3130 + $0x98] sm:$0xff]
  %v3151 = vld [vmem:[%s3130 + $0xa0] sm:$0xff]
  %v3152 = vld [vmem:[%s3130 + $0xa8] sm:$0xff]
  %v3153 = vld [vmem:[%s3130 + $0xb0] sm:$0xff]
  %v3154 = vld [vmem:[%s3130 + $0xb8] sm:$0xff]
  %v3156 = vsel %vm69, %v3128, 0
  %3158 = vmatpush.msra.mxu0 %v3146
  %3159 = vmatpush.msra.mxu0 %v3145
  %3160 = vmatpush.msra.mxu0 %v3144
  %3161 = vmatpush.msra.mxu0 %v3143
  %3162 = vmatpush.msra.mxu0 %v3142
  %3163 = vmatpush.msra.mxu0 %v3141
  %3164 = vmatpush.msra.mxu0 %v3140
  %3165 = vmatpush.msra.mxu0 %v3139
  %3166 = vmatpush.msra.mxu0 %v3138
  %3167 = vmatpush.msra.mxu0 %v3137
  %3168 = vmatpush.msra.mxu0 %v3136
  %3169 = vmatpush.msra.mxu0 %v3135
  %3170 = vmatpush.msra.mxu0 %v3134
  %3171 = vmatpush.msra.mxu0 %v3133
  %3172 = vmatpush.msra.mxu0 %v3132
  %3173 = vmatpush.msra.mxu0 %v3131
  %3174 = vmatmul.f32.gmra.mxu0 %v3108
  %v3175 = vpop.f32.mrf.mxu0
  %v3176 = vadd.f32 0.0, %v3175
  %3177 = vdwg.mxu0
  %3178 = vmatpush.msra.mxu0 0.0
  %3179 = vmatpush.msra.mxu0 0.0
  %3180 = vmatpush.msra.mxu0 0.0
  %3181 = vmatpush.msra.mxu0 0.0
  %3182 = vmatpush.msra.mxu0 0.0
  %3183 = vmatpush.msra.mxu0 0.0
  %3184 = vmatpush.msra.mxu0 0.0
  %3185 = vmatpush.msra.mxu0 0.0
  %3186 = vmatpush.msra.mxu0 %v3154
  %3187 = vmatpush.msra.mxu0 %v3153
  %3188 = vmatpush.msra.mxu0 %v3152
  %3189 = vmatpush.msra.mxu0 %v3151
  %3190 = vmatpush.msra.mxu0 %v3150
  %3191 = vmatpush.msra.mxu0 %v3149
  %3192 = vmatpush.msra.mxu0 %v3148
  %3193 = vmatpush.msra.mxu0 %v3147
  %3194 = vmatmul.f32.gmra.mxu0 %v3156
  %v3195 = vpop.f32.mrf.mxu0
  %v3196 = vadd.f32 %v3176, %v3195
  %3197 = vdwg.mxu0
  %v3198 = vadd.f32 %v3083, %v3196
  %v3199 = vld [vmem:[%s15] sm:$0x1]
  %v3201 = vperm.slane %v3199, 0
  %v3203 = vadd.f32 %v3198, %v3201
  %vm3204 = vcmask 519168
  %3205 = vst.msk [vmem:[%s16] sm:$0xf] %vm3204, %v3203
  // Predicated region
  $region66: #{stem_forward.1} parent=0 // pred_check
    _
  $region67: #{stem_forward.1} parent=0 // pred_check_branch
    %3207 = sbr.rel (0) target = $region69
  $region68: #{stem_forward.1} parent=0 // pred_region
    _
  $region69: #{stem_forward.1} parent=0 // pred_fallthru
    _
  // Predicated region
  $region70: #{stem_forward.1} parent=0 // pred_check
    _
  $region71: #{stem_forward.1} parent=0 // pred_check_branch
    %3209 = sbr.rel (0) target = $region73
  $region72: #{stem_forward.1} parent=0 // pred_region
    _
  $region73: #{stem_forward.1} parent=0 // pred_fallthru
    _

</llo_original>
